<compile_context>
chip_gen: v6e
topology: v6e:2x2x1
jax: 0.10.0
libtpu: 0.0.40
codegen_flags: <defaults>
</compile_context>

<pallas_src>
import functools

import jax
import jax.numpy as jnp
from jax import lax
from jax.experimental import pallas as pl
from jax.experimental.pallas import tpu as pltpu


def _round_up(x, m):
    return ((x + m - 1) // m) * m


# ----------------------------- Pallas kernels ----------------------------- #

def make_bilstm_kernel(n_parts, Tt, H, T_pad):
    """Fused bidirectional LSTM layer kernel.

    grid = (2, K): axis 0 = direction (0 fwd / 1 bwd, "parallel" -> one core per direction on
    v7x), axis 1 = time block ("arbitrary"; recurrent state carried in VMEM scratch).
    """
    four_h = 4 * H

    def kernel(lens_ref, *refs):
        x_refs = refs[:n_parts]
        wih_ref, whh_ref, b_ref, out_ref, h_scr, c_scr, xx_scr = refs[n_parts:]

        d = pl.program_id(0)            # 0 = forward, 1 = backward
        k = pl.program_id(1)            # time-block index along this direction's sweep
        rev = d == 1
        B = h_scr.shape[0]

        @pl.when(k == 0)
        def _():                        # start of a direction's sweep -> reset recurrent state
            h_scr[...] = jnp.zeros_like(h_scr)
            c_scr[...] = jnp.zeros_like(c_scr)

        # ---- block-level input transform: xx[t] = x[t] @ W_ih + b for all Tt steps at once ----
        w_dtype = wih_ref.dtype
        xx = b_ref[...].astype(jnp.float32)                          # (1, 4H)
        for p in range(n_parts):
            xp = x_refs[p][...].reshape(Tt * B, -1).astype(w_dtype)
            xx = xx + jnp.dot(xp, wih_ref[p],
                              preferred_element_type=jnp.float32)    # (Tt*B, 4H)
        xx_scr[...] = xx.reshape(Tt, B, four_h)

        whh = whh_ref[...]              # (H, 4H), loaded once per block
        lens = lens_ref[...]            # (B, 1) int32

        def step(tt, carry):
            h, c = carry
            # local row inside this time block / global timestep for this direction
            loc = jnp.where(rev, Tt - 1 - tt, tt)
            t_glob = jnp.where(rev, (T_pad - 1) - (k * Tt + tt), k * Tt + tt)
            m = (t_glob < lens).astype(jnp.float32)                  # (B, 1) in-kernel mask

            gates = xx_scr[loc] + jnp.dot(h.astype(w_dtype), whh,
                                          preferred_element_type=jnp.float32)
            i_g = jax.nn.sigmoid(gates[:, 0:H])
            f_g = jax.nn.sigmoid(gates[:, H:2 * H])
            g_g = jnp.tanh(gates[:, 2 * H:3 * H])
            o_g = jax.nn.sigmoid(gates[:, 3 * H:4 * H])

            c_new = f_g * c + i_g * g_g
            h_new = o_g * jnp.tanh(c_new)

            out_ref[loc] = (m * h_new).astype(out_ref.dtype)         # zeros on padded steps
            # packed-sequence semantics: freeze the state on padded steps
            return (m * h_new + (1.0 - m) * h, m * c_new + (1.0 - m) * c)

        h_fin, c_fin = lax.fori_loop(0, Tt, step, (h_scr[...], c_scr[...]), unroll=True)
        h_scr[...] = h_fin
        c_scr[...] = c_fin

    return kernel


def proj_kernel(x_ref, w_ref, b_ref, o_ref):
    """Row-tiled dense projection: (Rt, H) @ (H, P) + (1, P)."""
    o_ref[...] = (jnp.dot(x_ref[...].astype(w_ref.dtype), w_ref[...],
                          preferred_element_type=jnp.float32)
                  + b_ref[...]).astype(o_ref.dtype)


# ------------------------------ wrappers ---------------------------------- #

def bilstm_layer(lens_col, x, wih_all, whh_all, b_all, *, time_block):
    """One fused bidirectional LSTM layer.

    lens_col : (B, 1) int32 valid lengths (batch already padded)
    x        : layer 0: (T_pad, B, Din) f32 ; deeper layers: (2, T_pad, B, H) f32
               (the previous layer's stacked [fwd, bwd] output, consumed directly)
    wih_all  : (2, n_parts, Din_part, 4H)   whh_all : (2, H, 4H)   b_all : (2, 1, 4H)
    returns  : (2, T_pad, B, H) f32 -- [0] = forward hidden states, [1] = backward.
    """
    n_parts = wih_all.shape[1]
    H = whh_all.shape[1]
    Tt = time_block
    if n_parts == 1:
        T_pad, B, Din = x.shape
    else:
        _, T_pad, B, _ = x.shape
        Din = H
    K = T_pad // Tt

    def tb(d, k):                       # time-block index for direction d at grid step k
        return jnp.where(d == 0, k, K - 1 - k)

    if n_parts == 1:
        x_specs = [pl.BlockSpec((Tt, B, Din), lambda d, k: (tb(d, k), 0, 0))]
        x_args = (x,)
    else:
        x_specs = [pl.BlockSpec((None, Tt, B, H),
                                lambda d, k, p=p: (p, tb(d, k), 0, 0))
                   for p in range(2)]
        x_args = (x, x)

    return pl.pallas_call(
        make_bilstm_kernel(n_parts, Tt, H, T_pad),
        out_shape=jax.ShapeDtypeStruct((2, T_pad, B, H), jnp.float32),
        grid=(2, K),
        in_specs=[
            pl.BlockSpec((B, 1), lambda d, k: (0, 0)),                    # seq_len, resident
            *x_specs,
            pl.BlockSpec((None,) + tuple(wih_all.shape[1:]), lambda d, k: (d, 0, 0, 0)),
            pl.BlockSpec((None, H, 4 * H), lambda d, k: (d, 0, 0)),
            pl.BlockSpec((None, 1, 4 * H), lambda d, k: (d, 0, 0)),
        ],
        out_specs=pl.BlockSpec((None, Tt, B, H), lambda d, k: (d, tb(d, k), 0, 0)),
        scratch_shapes=[
            pltpu.VMEM((B, H), jnp.float32),             # h state
            pltpu.VMEM((B, H), jnp.float32),             # c state
            pltpu.VMEM((Tt, B, 4 * H), jnp.float32),     # per-block gate inputs
        ],
        compiler_params=pltpu.CompilerParams(
            dimension_semantics=("parallel", "arbitrary")),
    )(lens_col, *x_args, wih_all, whh_all, b_all)


def lstmbilm_forward(inputs_btp, seq_len, layer_params, proj_w, proj_b,
                     *, time_block=8, weight_dtype=jnp.float32):
    """Full LstmbiLm forward.

    inputs_btp: (B, T, P) f32, seq_len: (B,) int32
    layer_params: list over layers of ((wih_f, whh_f, b_f), (wih_b, whh_b, b_b))
                  with wih = W_ih^T (Din, 4H), whh = W_hh^T (H, 4H), b = b_ih+b_hh (1, 4H)
    proj_w: (P, H) torch Linear weight, proj_b: (P,)
    returns (B, T, 2P) f32
    """
    B, T, P = inputs_btp.shape
    H = layer_params[0][0][1].shape[0]

    B_pad = _round_up(B, 8)                       # fill f32 sublanes / MXU M dimension
    T_pad = _round_up(T, time_block)

    x = jnp.transpose(inputs_btp, (1, 0, 2)).astype(jnp.float32)       # (T, B, P)
    x = jnp.pad(x, ((0, T_pad - T), (0, B_pad - B), (0, 0)))
    lens_col = jnp.pad(seq_len.astype(jnp.int32), (0, B_pad - B)).reshape(B_pad, 1)

    y = x
    for li, (fwd_p, bwd_p) in enumerate(layer_params):
        n_parts = 1 if li == 0 else 2
        wih_f, whh_f, b_f = fwd_p
        wih_b, whh_b, b_b = bwd_p
        din_part = wih_f.shape[0] // n_parts
        wih_all = (jnp.stack([wih_f, wih_b])
                   .reshape(2, n_parts, din_part, 4 * H).astype(weight_dtype))
        whh_all = jnp.stack([whh_f, whh_b]).astype(weight_dtype)
        b_all = jnp.stack([b_f, b_b]).astype(jnp.float32)
        y = bilstm_layer(lens_col, y, wih_all, whh_all, b_all, time_block=time_block)
        # TODO(synk): nn.LSTM inter-layer dropout is training-only; omitted (inference semantics).

    # Shared projection applied to each direction half: (2*T_pad*B_pad, H) @ (H, P) + b,
    # row-tiled so activations stream through VMEM (no block-diagonal weight).
    rows = 2 * T_pad * B_pad
    Rt = min(512, rows)
    rows_pad = _round_up(rows, Rt)
    x_rows = jnp.pad(y.reshape(rows, H), ((0, rows_pad - rows), (0, 0)))
    w = proj_w.T.astype(weight_dtype)                     # (H, P)
    b2 = proj_b.reshape(1, P).astype(jnp.float32)

    proj = pl.pallas_call(
        proj_kernel,
        out_shape=jax.ShapeDtypeStruct((rows_pad, P), jnp.float32),
        grid=(rows_pad // Rt,),
        in_specs=[pl.BlockSpec((Rt, H), lambda i: (i, 0)),
                  pl.BlockSpec((H, P), lambda i: (0, 0)),
                  pl.BlockSpec((1, P), lambda i: (0, 0))],
        out_specs=pl.BlockSpec((Rt, P), lambda i: (i, 0)),
        compiler_params=pltpu.CompilerParams(dimension_semantics=("parallel",)),
    )(x_rows, w, b2)

    proj = proj[:rows].reshape(2, T_pad, B_pad, P)
    out = jnp.transpose(proj, (2, 1, 0, 3)).reshape(B_pad, T_pad, 2 * P)
    return out[:B, :T]


# ------------------------- pure-JAX reference ------------------------------ #

def _ref_lstm_dir(x, m, wih, whh, b, reverse):
    T, B, _ = x.shape
    H = whh.shape[0]
    idx = jnp.arange(T)[::-1] if reverse else jnp.arange(T)

    def step(carry, t):
        h, c = carry
        xt, mt = x[t], m[t]
        g = xt @ wih + h @ whh + b[0]
        i = jax.nn.sigmoid(g[:, 0:H]); f = jax.nn.sigmoid(g[:, H:2 * H])
        gg = jnp.tanh(g[:, 2 * H:3 * H]); o = jax.nn.sigmoid(g[:, 3 * H:4 * H])
        cn = f * c + i * gg
        hn = o * jnp.tanh(cn)
        return (mt * hn + (1 - mt) * h, mt * cn + (1 - mt) * c), mt * hn

    (_, _), ys = lax.scan(step, (jnp.zeros((B, H)), jnp.zeros((B, H))), idx)
    return ys[::-1] if reverse else ys


def lstmbilm_reference(inputs_btp, seq_len, layer_params, proj_w, proj_b):
    B, T, P = inputs_btp.shape
    x = jnp.transpose(inputs_btp, (1, 0, 2)).astype(jnp.float32)
    mask = (jnp.arange(T)[:, None] < seq_len[None, :]).astype(jnp.float32)[..., None]
    for (fwd_p, bwd_p) in layer_params:
        out_f = _ref_lstm_dir(x, mask, *fwd_p, reverse=False)
        out_b = _ref_lstm_dir(x, mask, *bwd_p, reverse=True)
        x = jnp.concatenate([out_f, out_b], axis=-1)
    H = layer_params[0][0][1].shape[0]
    fwd, bwd = x[..., :H], x[..., H:]
    out = jnp.concatenate([fwd @ proj_w.T + proj_b, bwd @ proj_w.T + proj_b], axis=-1)
    return jnp.transpose(out, (1, 0, 2))


# --------------------------------- main ------------------------------------ #

if __name__ == "__main__":
    config = {"lstm": {"projection_dim": 16, "dim": 32, "n_layers": 2}, "dropout": 0.1}
    P = config["lstm"]["projection_dim"]
    H = config["lstm"]["dim"]
    L = config["lstm"]["n_layers"]
    B, T = 4, 8

    key = jax.random.PRNGKey(0)

    layer_params = []
    for layer in range(L):
        d_in = P if layer == 0 else 2 * H
        dirs = []
        for _ in range(2):
            key, k1, k2, k3, k4 = jax.random.split(key, 5)
            wih = 0.1 * jax.random.normal(k1, (d_in, 4 * H), jnp.float32)   # W_ih^T
            whh = 0.1 * jax.random.normal(k2, (H, 4 * H), jnp.float32)      # W_hh^T
            b = 0.1 * (jax.random.normal(k3, (1, 4 * H), jnp.float32)
                       + jax.random.normal(k4, (1, 4 * H), jnp.float32))    # b_ih + b_hh
            dirs.append((wih, whh, b))
        layer_params.append(tuple(dirs))

    key, kw, kb, kx = jax.random.split(key, 4)
    proj_w = 0.1 * jax.random.normal(kw, (P, H), jnp.float32)               # torch Linear weight
    proj_b = 0.1 * jax.random.normal(kb, (P,), jnp.float32)

    inputs = jax.random.normal(kx, (B, T, P), jnp.float32)
    seq_len = jnp.array([8, 5, 3, 6], jnp.int32)   # max == T, as pad_packed implies

    ref = lstmbilm_reference(inputs, seq_len, layer_params, proj_w, proj_b)

    # f32 path (strict check) -- time_block=5 exercises T padding and multi-block state carry.
    fwd_f32 = jax.jit(functools.partial(lstmbilm_forward, time_block=5))
    out = jax.block_until_ready(fwd_f32(inputs, seq_len, layer_params, proj_w, proj_b))
    assert out.shape == (B, T, 2 * P), out.shape
    err = float(jnp.max(jnp.abs(out - ref)))
    assert err < 1e-4, f"f32 max err {err}"

    # bf16-weight fast path (f32 accumulation / f32 state), loose tolerance vs f32 reference.
    fwd_bf16 = jax.jit(functools.partial(lstmbilm_forward, time_block=8,
                                         weight_dtype=jnp.bfloat16))
    out_bf16 = jax.block_until_ready(fwd_bf16(inputs, seq_len, layer_params, proj_w, proj_b))
    err16 = float(jnp.max(jnp.abs(out_bf16 - ref)))
    assert err16 < 5e-2, f"bf16 max err {err16}"

    print("KERNEL_OK")
</pallas_src>

<mosaic_0001>
module attributes {stable_mosaic.version = 11 : i64} {
  func.func @proj_kernel(%arg0: i32, %arg1: memref<160x32xf32, #tpu.memory_space<vmem>>, %arg2: memref<32x16xf32, #tpu.memory_space<vmem>>, %arg3: memref<1x16xf32, #tpu.memory_space<vmem>>, %arg4: memref<160x16xf32, #tpu.memory_space<vmem>>) attributes {dimension_semantics = [#tpu.dimension_semantics<parallel>], iteration_bounds = array<i64: 1>, scalar_prefetch = 0 : i64, scratch_operands = 0 : i64, tpu.core_type = #tpu.core_type<tc>, window_params = [{transform_indices = @transform_0, window_bounds = array<i64: 160, 32>}, {pipeline_mode = #tpu.pipeline_mode<synchronous>, transform_indices = @transform_1, window_bounds = array<i64: 32, 16>}, {pipeline_mode = #tpu.pipeline_mode<synchronous>, transform_indices = @transform_2, window_bounds = array<i64: 1, 16>}, {transform_indices = @transform_3, window_bounds = array<i64: 160, 16>}]} {
    %c0 = arith.constant 0 : index
    %c0_0 = arith.constant 0 : index
    %0 = vector.load %arg1[%c0, %c0_0] : memref<160x32xf32, #tpu.memory_space<vmem>>, vector<160x32xf32>
    %c0_1 = arith.constant 0 : index
    %c0_2 = arith.constant 0 : index
    %1 = vector.load %arg2[%c0_1, %c0_2] : memref<32x16xf32, #tpu.memory_space<vmem>>, vector<32x16xf32>
    %cst = arith.constant dense<0.000000e+00> : vector<160x16xf32>
    %2 = tpu.matmul %0, %1, %cst {dimension_numbers = #tpu.dot_dimension_numbers<[1], [0], [0], [1], [0, 0, 1, 1], [], []>} : vector<160x32xf32>, vector<32x16xf32>, vector<160x16xf32> -> vector<160x16xf32>
    %c0_3 = arith.constant 0 : index
    %c0_4 = arith.constant 0 : index
    %3 = vector.load %arg3[%c0_3, %c0_4] : memref<1x16xf32, #tpu.memory_space<vmem>>, vector<1x16xf32>
    %4 = vector.broadcast %3 : vector<1x16xf32> to vector<160x16xf32>
    %5 = arith.addf %2, %4 : vector<160x16xf32>
    %c0_5 = arith.constant 0 : index
    %c0_6 = arith.constant 0 : index
    %6 = vector.load %arg4[%c0_5, %c0_6] : memref<160x16xf32, #tpu.memory_space<vmem>>, vector<160x16xf32>
    tpu.vector_store %arg4[%c0_5, %c0_6], %5 {strides = array<i32>} : memref<160x16xf32, #tpu.memory_space<vmem>>, vector<160x16xf32>,
    return
  }
  func.func @transform_0(%arg0: i32) -> (i32, i32) {
    %c0_i32 = arith.constant 0 : i32
    %c0_i32_0 = arith.constant 0 : i32
    return %arg0, %c0_i32 : i32, i32
  }
  func.func @transform_1(%arg0: i32) -> (i32, i32) {
    %c0_i32 = arith.constant 0 : i32
    %c0_i32_0 = arith.constant 0 : i32
    %c0_i32_1 = arith.constant 0 : i32
    return %c0_i32, %c0_i32_0 : i32, i32
  }
  func.func @transform_2(%arg0: i32) -> (i32, i32) {
    %c0_i32 = arith.constant 0 : i32
    %c0_i32_0 = arith.constant 0 : i32
    %c0_i32_1 = arith.constant 0 : i32
    return %c0_i32, %c0_i32_0 : i32, i32
  }
  func.func @transform_3(%arg0: i32) -> (i32, i32) {
    %c0_i32 = arith.constant 0 : i32
    %c0_i32_0 = arith.constant 0 : i32
    return %arg0, %c0_i32 : i32, i32
  }
}

module attributes {stable_mosaic.version = 11 : i64} {
  func.func @kernel(%arg0: i32, %arg1: i32, %arg2: memref<8x1xi32, #tpu.memory_space<vmem>>, %arg3: memref<1x5x8x32xf32, #tpu.memory_space<vmem>>, %arg4: memref<1x5x8x32xf32, #tpu.memory_space<vmem>>, %arg5: memref<1x2x32x128xf32, #tpu.memory_space<vmem>>, %arg6: memref<1x32x128xf32, #tpu.memory_space<vmem>>, %arg7: memref<1x1x128xf32, #tpu.memory_space<vmem>>, %arg8: memref<1x5x8x32xf32, #tpu.memory_space<vmem>>, %arg9: memref<8x32xf32, #tpu.memory_space<vmem>>, %arg10: memref<8x32xf32, #tpu.memory_space<vmem>>, %arg11: memref<5x8x128xf32, #tpu.memory_space<vmem>>) attributes {dimension_semantics = [#tpu.dimension_semantics<parallel>, #tpu.dimension_semantics<arbitrary>], iteration_bounds = array<i64: 2, 2>, scalar_prefetch = 0 : i64, scratch_operands = 3 : i64, tpu.core_type = #tpu.core_type<tc>, window_params = [{pipeline_mode = #tpu.pipeline_mode<synchronous>, transform_indices = @transform_0, window_bounds = array<i64: 8, 1>}, {transform_indices = @transform_1, window_bounds = array<i64: 1, 5, 8, 32>}, {transform_indices = @transform_2, window_bounds = array<i64: 1, 5, 8, 32>}, {transform_indices = @transform_3, window_bounds = array<i64: 1, 2, 32, 128>}, {transform_indices = @transform_4, window_bounds = array<i64: 1, 32, 128>}, {transform_indices = @transform_5, window_bounds = array<i64: 1, 1, 128>}, {transform_indices = @transform_6, window_bounds = array<i64: 1, 5, 8, 32>}]} {
    %c1_i32 = arith.constant 1 : i32
    %0 = arith.cmpi eq, %arg0, %c1_i32 : i32
    %c0_i32 = arith.constant 0 : i32
    %1 = arith.cmpi eq, %arg1, %c0_i32 : i32
    %2 = arith.extui %1 : i1 to i32
    %c0_i32_0 = arith.constant 0 : i32
    %3 = arith.cmpi ne, %2, %c0_i32_0 : i32
    scf.if %3 {
      %cst_111 = arith.constant 0.000000e+00 : f32
      %340 = vector.broadcast %cst_111 : f32 to vector<8x32xf32>
      %c0_112 = arith.constant 0 : index
      %c0_113 = arith.constant 0 : index
      %341 = vector.load %arg9[%c0_112, %c0_113] : memref<8x32xf32, #tpu.memory_space<vmem>>, vector<8x32xf32>
      tpu.vector_store %arg9[%c0_112, %c0_113], %340 {strides = array<i32>} : memref<8x32xf32, #tpu.memory_space<vmem>>, vector<8x32xf32>,
      %cst_114 = arith.constant 0.000000e+00 : f32
      %342 = vector.broadcast %cst_114 : f32 to vector<8x32xf32>
      %c0_115 = arith.constant 0 : index
      %c0_116 = arith.constant 0 : index
      %343 = vector.load %arg10[%c0_115, %c0_116] : memref<8x32xf32, #tpu.memory_space<vmem>>, vector<8x32xf32>
      tpu.vector_store %arg10[%c0_115, %c0_116], %342 {strides = array<i32>} : memref<8x32xf32, #tpu.memory_space<vmem>>, vector<8x32xf32>,
    } else {
    }
    %c0 = arith.constant 0 : index
    %c0_1 = arith.constant 0 : index
    %c0_2 = arith.constant 0 : index
    %4 = vector.load %arg7[%c0, %c0_1, %c0_2] : memref<1x1x128xf32, #tpu.memory_space<vmem>>, vector<1x1x128xf32>
    %5 = vector.shape_cast %4 : vector<1x1x128xf32> to vector<1x128xf32>
    %c0_3 = arith.constant 0 : index
    %c0_4 = arith.constant 0 : index
    %c0_5 = arith.constant 0 : index
    %c0_6 = arith.constant 0 : index
    %6 = vector.load %arg3[%c0_3, %c0_4, %c0_5, %c0_6] : memref<1x5x8x32xf32, #tpu.memory_space<vmem>>, vector<1x5x8x32xf32>
    %7 = vector.shape_cast %6 : vector<1x5x8x32xf32> to vector<5x8x32xf32>
    %8 = vector.shape_cast %7 : vector<5x8x32xf32> to vector<40x32xf32>
    %c0_7 = arith.constant 0 : index
    %c0_8 = arith.constant 0 : index
    %c0_9 = arith.constant 0 : index
    %c0_10 = arith.constant 0 : index
    %9 = vector.load %arg5[%c0_7, %c0_8, %c0_9, %c0_10] : memref<1x2x32x128xf32, #tpu.memory_space<vmem>>, vector<1x1x32x128xf32>
    %10 = vector.shape_cast %9 : vector<1x1x32x128xf32> to vector<32x128xf32>
    %cst = arith.constant dense<0.000000e+00> : vector<40x128xf32>
    %11 = tpu.matmul %8, %10, %cst {dimension_numbers = #tpu.dot_dimension_numbers<[1], [0], [0], [1], [0, 0, 1, 1], [], []>} : vector<40x32xf32>, vector<32x128xf32>, vector<40x128xf32> -> vector<40x128xf32>
    %12 = vector.broadcast %5 : vector<1x128xf32> to vector<40x128xf32>
    %13 = arith.addf %12, %11 : vector<40x128xf32>
    %c0_11 = arith.constant 0 : index
    %c0_12 = arith.constant 0 : index
    %c0_13 = arith.constant 0 : index
    %c0_14 = arith.constant 0 : index
    %14 = vector.load %arg4[%c0_11, %c0_12, %c0_13, %c0_14] : memref<1x5x8x32xf32, #tpu.memory_space<vmem>>, vector<1x5x8x32xf32>
    %15 = vector.shape_cast %14 : vector<1x5x8x32xf32> to vector<5x8x32xf32>
    %16 = vector.shape_cast %15 : vector<5x8x32xf32> to vector<40x32xf32>
    %c0_15 = arith.constant 0 : index
    %c1 = arith.constant 1 : index
    %c0_16 = arith.constant 0 : index
    %c0_17 = arith.constant 0 : index
    %17 = vector.load %arg5[%c0_15, %c1, %c0_16, %c0_17] : memref<1x2x32x128xf32, #tpu.memory_space<vmem>>, vector<1x1x32x128xf32>
    %18 = vector.shape_cast %17 : vector<1x1x32x128xf32> to vector<32x128xf32>
    %cst_18 = arith.constant dense<0.000000e+00> : vector<40x128xf32>
    %19 = tpu.matmul %16, %18, %cst_18 {dimension_numbers = #tpu.dot_dimension_numbers<[1], [0], [0], [1], [0, 0, 1, 1], [], []>} : vector<40x32xf32>, vector<32x128xf32>, vector<40x128xf32> -> vector<40x128xf32>
    %20 = arith.addf %13, %19 : vector<40x128xf32>
    %21 = vector.shape_cast %20 : vector<40x128xf32> to vector<5x8x128xf32>
    %c0_19 = arith.constant 0 : index
    %c0_20 = arith.constant 0 : index
    %c0_21 = arith.constant 0 : index
    %22 = vector.load %arg11[%c0_19, %c0_20, %c0_21] : memref<5x8x128xf32, #tpu.memory_space<vmem>>, vector<5x8x128xf32>
    tpu.vector_store %arg11[%c0_19, %c0_20, %c0_21], %21 {strides = array<i32>} : memref<5x8x128xf32, #tpu.memory_space<vmem>>, vector<5x8x128xf32>,
    %c0_22 = arith.constant 0 : index
    %c0_23 = arith.constant 0 : index
    %c0_24 = arith.constant 0 : index
    %23 = vector.load %arg6[%c0_22, %c0_23, %c0_24] : memref<1x32x128xf32, #tpu.memory_space<vmem>>, vector<1x32x128xf32>
    %24 = vector.shape_cast %23 : vector<1x32x128xf32> to vector<32x128xf32>
    %c0_25 = arith.constant 0 : index
    %c0_26 = arith.constant 0 : index
    %25 = vector.load %arg2[%c0_25, %c0_26] : memref<8x1xi32, #tpu.memory_space<vmem>>, vector<8x1xi32>
    %c0_27 = arith.constant 0 : index
    %c0_28 = arith.constant 0 : index
    %26 = vector.load %arg9[%c0_27, %c0_28] : memref<8x32xf32, #tpu.memory_space<vmem>>, vector<8x32xf32>
    %c0_29 = arith.constant 0 : index
    %c0_30 = arith.constant 0 : index
    %27 = vector.load %arg10[%c0_29, %c0_30] : memref<8x32xf32, #tpu.memory_space<vmem>>, vector<8x32xf32>
    %c0_i32_31 = arith.constant 0 : i32
    %c4_i32 = arith.constant 4 : i32
    %28 = arith.subi %c4_i32, %c0_i32_31 : i32
    %29 = arith.select %0, %28, %c0_i32_31 : i32
    %c5_i32 = arith.constant 5 : i32
    %30 = arith.muli %arg1, %c5_i32 : i32
    %31 = arith.addi %30, %c0_i32_31 : i32
    %c9_i32 = arith.constant 9 : i32
    %32 = arith.subi %c9_i32, %31 : i32
    %c5_i32_32 = arith.constant 5 : i32
    %33 = arith.muli %arg1, %c5_i32_32 : i32
    %34 = arith.addi %33, %c0_i32_31 : i32
    %35 = arith.select %0, %32, %34 : i32
    %36 = vector.broadcast %35 : i32 to vector<8x1xi32>
    %37 = arith.cmpi slt, %36, %25 : vector<8x1xi32>
    %38 = arith.extui %37 : vector<8x1xi1> to vector<8x1xi32>
    %39 = arith.sitofp %38 : vector<8x1xi32> to vector<8x1xf32>
    %40 = arith.index_cast %29 : i32 to index
    %c0_33 = arith.constant 0 : index
    %c0_34 = arith.constant 0 : index
    %41 = vector.load %arg11[%40, %c0_33, %c0_34] : memref<5x8x128xf32, #tpu.memory_space<vmem>>, vector<1x8x128xf32>
    %42 = vector.shape_cast %41 : vector<1x8x128xf32> to vector<8x128xf32>
    %cst_35 = arith.constant dense<0.000000e+00> : vector<8x128xf32>
    %43 = tpu.matmul %26, %24, %cst_35 {dimension_numbers = #tpu.dot_dimension_numbers<[1], [0], [0], [1], [0, 0, 1, 1], [], []>} : vector<8x32xf32>, vector<32x128xf32>, vector<8x128xf32> -> vector<8x128xf32>
    %44 = arith.addf %42, %43 : vector<8x128xf32>
    %45 = vector.extract_strided_slice %44 {offsets = [0, 0], sizes = [8, 32], strides = [1, 1]} : vector<8x128xf32> to vector<8x32xf32>
    %46 = arith.negf %45 : vector<8x32xf32>
    %47 = math.exp %46 : vector<8x32xf32>
    %cst_36 = arith.constant 1.000000e+00 : f32
    %48 = vector.broadcast %cst_36 : f32 to vector<8x32xf32>
    %49 = arith.addf %48, %47 : vector<8x32xf32>
    %50 = arith.divf %48, %49 : vector<8x32xf32>
    %51 = vector.extract_strided_slice %44 {offsets = [0, 32], sizes = [8, 32], strides = [1, 1]} : vector<8x128xf32> to vector<8x32xf32>
    %52 = arith.negf %51 : vector<8x32xf32>
    %53 = math.exp %52 : vector<8x32xf32>
    %cst_37 = arith.constant 1.000000e+00 : f32
    %54 = vector.broadcast %cst_37 : f32 to vector<8x32xf32>
    %55 = arith.addf %54, %53 : vector<8x32xf32>
    %56 = arith.divf %54, %55 : vector<8x32xf32>
    %57 = vector.extract_strided_slice %44 {offsets = [0, 64], sizes = [8, 32], strides = [1, 1]} : vector<8x128xf32> to vector<8x32xf32>
    %58 = math.tanh %57 : vector<8x32xf32>
    %59 = vector.extract_strided_slice %44 {offsets = [0, 96], sizes = [8, 32], strides = [1, 1]} : vector<8x128xf32> to vector<8x32xf32>
    %60 = arith.negf %59 : vector<8x32xf32>
    %61 = math.exp %60 : vector<8x32xf32>
    %cst_38 = arith.constant 1.000000e+00 : f32
    %62 = vector.broadcast %cst_38 : f32 to vector<8x32xf32>
    %63 = arith.addf %62, %61 : vector<8x32xf32>
    %64 = arith.divf %62, %63 : vector<8x32xf32>
    %65 = arith.mulf %56, %27 : vector<8x32xf32>
    %66 = arith.mulf %50, %58 : vector<8x32xf32>
    %67 = arith.addf %65, %66 : vector<8x32xf32>
    %68 = math.tanh %67 : vector<8x32xf32>
    %69 = arith.mulf %64, %68 : vector<8x32xf32>
    %70 = vector.broadcast %39 : vector<8x1xf32> to vector<8x32xf32>
    %71 = arith.mulf %70, %69 : vector<8x32xf32>
    %c0_39 = arith.constant 0 : index
    %72 = arith.index_cast %29 : i32 to index
    %c0_40 = arith.constant 0 : index
    %c0_41 = arith.constant 0 : index
    %73 = vector.load %arg8[%c0_39, %72, %c0_40, %c0_41] : memref<1x5x8x32xf32, #tpu.memory_space<vmem>>, vector<1x1x8x32xf32>
    %74 = vector.shape_cast %73 : vector<1x1x8x32xf32> to vector<8x32xf32>
    %75 = vector.shape_cast %71 : vector<8x32xf32> to vector<1x1x8x32xf32>
    tpu.vector_store %arg8[%c0_39, %72, %c0_40, %c0_41], %75 {strides = array<i32>} : memref<1x5x8x32xf32, #tpu.memory_space<vmem>>, vector<1x1x8x32xf32>,
    %76 = vector.broadcast %39 : vector<8x1xf32> to vector<8x32xf32>
    %77 = arith.mulf %76, %69 : vector<8x32xf32>
    %cst_42 = arith.constant 1.000000e+00 : f32
    %78 = vector.broadcast %cst_42 : f32 to vector<8x1xf32>
    %79 = arith.subf %78, %39 : vector<8x1xf32>
    %80 = vector.broadcast %79 : vector<8x1xf32> to vector<8x32xf32>
    %81 = arith.mulf %80, %26 : vector<8x32xf32>
    %82 = arith.addf %77, %81 : vector<8x32xf32>
    %83 = vector.broadcast %39 : vector<8x1xf32> to vector<8x32xf32>
    %84 = arith.mulf %83, %67 : vector<8x32xf32>
    %cst_43 = arith.constant 1.000000e+00 : f32
    %85 = vector.broadcast %cst_43 : f32 to vector<8x1xf32>
    %86 = arith.subf %85, %39 : vector<8x1xf32>
    %87 = vector.broadcast %86 : vector<8x1xf32> to vector<8x32xf32>
    %88 = arith.mulf %87, %27 : vector<8x32xf32>
    %89 = arith.addf %84, %88 : vector<8x32xf32>
    %c1_i32_44 = arith.constant 1 : i32
    %c4_i32_45 = arith.constant 4 : i32
    %90 = arith.subi %c4_i32_45, %c1_i32_44 : i32
    %91 = arith.select %0, %90, %c1_i32_44 : i32
    %c5_i32_46 = arith.constant 5 : i32
    %92 = arith.muli %arg1, %c5_i32_46 : i32
    %93 = arith.addi %92, %c1_i32_44 : i32
    %c9_i32_47 = arith.constant 9 : i32
    %94 = arith.subi %c9_i32_47, %93 : i32
    %c5_i32_48 = arith.constant 5 : i32
    %95 = arith.muli %arg1, %c5_i32_48 : i32
    %96 = arith.addi %95, %c1_i32_44 : i32
    %97 = arith.select %0, %94, %96 : i32
    %98 = vector.broadcast %97 : i32 to vector<8x1xi32>
    %99 = arith.cmpi slt, %98, %25 : vector<8x1xi32>
    %100 = arith.extui %99 : vector<8x1xi1> to vector<8x1xi32>
    %101 = arith.sitofp %100 : vector<8x1xi32> to vector<8x1xf32>
    %102 = arith.index_cast %91 : i32 to index
    %c0_49 = arith.constant 0 : index
    %c0_50 = arith.constant 0 : index
    %103 = vector.load %arg11[%102, %c0_49, %c0_50] : memref<5x8x128xf32, #tpu.memory_space<vmem>>, vector<1x8x128xf32>
    %104 = vector.shape_cast %103 : vector<1x8x128xf32> to vector<8x128xf32>
    %cst_51 = arith.constant dense<0.000000e+00> : vector<8x128xf32>
    %105 = tpu.matmul %82, %24, %cst_51 {dimension_numbers = #tpu.dot_dimension_numbers<[1], [0], [0], [1], [0, 0, 1, 1], [], []>} : vector<8x32xf32>, vector<32x128xf32>, vector<8x128xf32> -> vector<8x128xf32>
    %106 = arith.addf %104, %105 : vector<8x128xf32>
    %107 = vector.extract_strided_slice %106 {offsets = [0, 0], sizes = [8, 32], strides = [1, 1]} : vector<8x128xf32> to vector<8x32xf32>
    %108 = arith.negf %107 : vector<8x32xf32>
    %109 = math.exp %108 : vector<8x32xf32>
    %cst_52 = arith.constant 1.000000e+00 : f32
    %110 = vector.broadcast %cst_52 : f32 to vector<8x32xf32>
    %111 = arith.addf %110, %109 : vector<8x32xf32>
    %112 = arith.divf %110, %111 : vector<8x32xf32>
    %113 = vector.extract_strided_slice %106 {offsets = [0, 32], sizes = [8, 32], strides = [1, 1]} : vector<8x128xf32> to vector<8x32xf32>
    %114 = arith.negf %113 : vector<8x32xf32>
    %115 = math.exp %114 : vector<8x32xf32>
    %cst_53 = arith.constant 1.000000e+00 : f32
    %116 = vector.broadcast %cst_53 : f32 to vector<8x32xf32>
    %117 = arith.addf %116, %115 : vector<8x32xf32>
    %118 = arith.divf %116, %117 : vector<8x32xf32>
    %119 = vector.extract_strided_slice %106 {offsets = [0, 64], sizes = [8, 32], strides = [1, 1]} : vector<8x128xf32> to vector<8x32xf32>
    %120 = math.tanh %119 : vector<8x32xf32>
    %121 = vector.extract_strided_slice %106 {offsets = [0, 96], sizes = [8, 32], strides = [1, 1]} : vector<8x128xf32> to vector<8x32xf32>
    %122 = arith.negf %121 : vector<8x32xf32>
    %123 = math.exp %122 : vector<8x32xf32>
    %cst_54 = arith.constant 1.000000e+00 : f32
    %124 = vector.broadcast %cst_54 : f32 to vector<8x32xf32>
    %125 = arith.addf %124, %123 : vector<8x32xf32>
    %126 = arith.divf %124, %125 : vector<8x32xf32>
    %127 = arith.mulf %118, %89 : vector<8x32xf32>
    %128 = arith.mulf %112, %120 : vector<8x32xf32>
    %129 = arith.addf %127, %128 : vector<8x32xf32>
    %130 = math.tanh %129 : vector<8x32xf32>
    %131 = arith.mulf %126, %130 : vector<8x32xf32>
    %132 = vector.broadcast %101 : vector<8x1xf32> to vector<8x32xf32>
    %133 = arith.mulf %132, %131 : vector<8x32xf32>
    %c0_55 = arith.constant 0 : index
    %134 = arith.index_cast %91 : i32 to index
    %c0_56 = arith.constant 0 : index
    %c0_57 = arith.constant 0 : index
    %135 = vector.load %arg8[%c0_55, %134, %c0_56, %c0_57] : memref<1x5x8x32xf32, #tpu.memory_space<vmem>>, vector<1x1x8x32xf32>
    %136 = vector.shape_cast %135 : vector<1x1x8x32xf32> to vector<8x32xf32>
    %137 = vector.shape_cast %133 : vector<8x32xf32> to vector<1x1x8x32xf32>
    tpu.vector_store %arg8[%c0_55, %134, %c0_56, %c0_57], %137 {strides = array<i32>} : memref<1x5x8x32xf32, #tpu.memory_space<vmem>>, vector<1x1x8x32xf32>,
    %138 = vector.broadcast %101 : vector<8x1xf32> to vector<8x32xf32>
    %139 = arith.mulf %138, %131 : vector<8x32xf32>
    %cst_58 = arith.constant 1.000000e+00 : f32
    %140 = vector.broadcast %cst_58 : f32 to vector<8x1xf32>
    %141 = arith.subf %140, %101 : vector<8x1xf32>
    %142 = vector.broadcast %141 : vector<8x1xf32> to vector<8x32xf32>
    %143 = arith.mulf %142, %82 : vector<8x32xf32>
    %144 = arith.addf %139, %143 : vector<8x32xf32>
    %145 = vector.broadcast %101 : vector<8x1xf32> to vector<8x32xf32>
    %146 = arith.mulf %145, %129 : vector<8x32xf32>
    %cst_59 = arith.constant 1.000000e+00 : f32
    %147 = vector.broadcast %cst_59 : f32 to vector<8x1xf32>
    %148 = arith.subf %147, %101 : vector<8x1xf32>
    %149 = vector.broadcast %148 : vector<8x1xf32> to vector<8x32xf32>
    %150 = arith.mulf %149, %89 : vector<8x32xf32>
    %151 = arith.addf %146, %150 : vector<8x32xf32>
    %c2_i32 = arith.constant 2 : i32
    %c4_i32_60 = arith.constant 4 : i32
    %152 = arith.subi %c4_i32_60, %c2_i32 : i32
    %153 = arith.select %0, %152, %c2_i32 : i32
    %c5_i32_61 = arith.constant 5 : i32
    %154 = arith.muli %arg1, %c5_i32_61 : i32
    %155 = arith.addi %154, %c2_i32 : i32
    %c9_i32_62 = arith.constant 9 : i32
    %156 = arith.subi %c9_i32_62, %155 : i32
    %c5_i32_63 = arith.constant 5 : i32
    %157 = arith.muli %arg1, %c5_i32_63 : i32
    %158 = arith.addi %157, %c2_i32 : i32
    %159 = arith.select %0, %156, %158 : i32
    %160 = vector.broadcast %159 : i32 to vector<8x1xi32>
    %161 = arith.cmpi slt, %160, %25 : vector<8x1xi32>
    %162 = arith.extui %161 : vector<8x1xi1> to vector<8x1xi32>
    %163 = arith.sitofp %162 : vector<8x1xi32> to vector<8x1xf32>
    %164 = arith.index_cast %153 : i32 to index
    %c0_64 = arith.constant 0 : index
    %c0_65 = arith.constant 0 : index
    %165 = vector.load %arg11[%164, %c0_64, %c0_65] : memref<5x8x128xf32, #tpu.memory_space<vmem>>, vector<1x8x128xf32>
    %166 = vector.shape_cast %165 : vector<1x8x128xf32> to vector<8x128xf32>
    %cst_66 = arith.constant dense<0.000000e+00> : vector<8x128xf32>
    %167 = tpu.matmul %144, %24, %cst_66 {dimension_numbers = #tpu.dot_dimension_numbers<[1], [0], [0], [1], [0, 0, 1, 1], [], []>} : vector<8x32xf32>, vector<32x128xf32>, vector<8x128xf32> -> vector<8x128xf32>
    %168 = arith.addf %166, %167 : vector<8x128xf32>
    %169 = vector.extract_strided_slice %168 {offsets = [0, 0], sizes = [8, 32], strides = [1, 1]} : vector<8x128xf32> to vector<8x32xf32>
    %170 = arith.negf %169 : vector<8x32xf32>
    %171 = math.exp %170 : vector<8x32xf32>
    %cst_67 = arith.constant 1.000000e+00 : f32
    %172 = vector.broadcast %cst_67 : f32 to vector<8x32xf32>
    %173 = arith.addf %172, %171 : vector<8x32xf32>
    %174 = arith.divf %172, %173 : vector<8x32xf32>
    %175 = vector.extract_strided_slice %168 {offsets = [0, 32], sizes = [8, 32], strides = [1, 1]} : vector<8x128xf32> to vector<8x32xf32>
    %176 = arith.negf %175 : vector<8x32xf32>
    %177 = math.exp %176 : vector<8x32xf32>
    %cst_68 = arith.constant 1.000000e+00 : f32
    %178 = vector.broadcast %cst_68 : f32 to vector<8x32xf32>
    %179 = arith.addf %178, %177 : vector<8x32xf32>
    %180 = arith.divf %178, %179 : vector<8x32xf32>
    %181 = vector.extract_strided_slice %168 {offsets = [0, 64], sizes = [8, 32], strides = [1, 1]} : vector<8x128xf32> to vector<8x32xf32>
    %182 = math.tanh %181 : vector<8x32xf32>
    %183 = vector.extract_strided_slice %168 {offsets = [0, 96], sizes = [8, 32], strides = [1, 1]} : vector<8x128xf32> to vector<8x32xf32>
    %184 = arith.negf %183 : vector<8x32xf32>
    %185 = math.exp %184 : vector<8x32xf32>
    %cst_69 = arith.constant 1.000000e+00 : f32
    %186 = vector.broadcast %cst_69 : f32 to vector<8x32xf32>
    %187 = arith.addf %186, %185 : vector<8x32xf32>
    %188 = arith.divf %186, %187 : vector<8x32xf32>
    %189 = arith.mulf %180, %151 : vector<8x32xf32>
    %190 = arith.mulf %174, %182 : vector<8x32xf32>
    %191 = arith.addf %189, %190 : vector<8x32xf32>
    %192 = math.tanh %191 : vector<8x32xf32>
    %193 = arith.mulf %188, %192 : vector<8x32xf32>
    %194 = vector.broadcast %163 : vector<8x1xf32> to vector<8x32xf32>
    %195 = arith.mulf %194, %193 : vector<8x32xf32>
    %c0_70 = arith.constant 0 : index
    %196 = arith.index_cast %153 : i32 to index
    %c0_71 = arith.constant 0 : index
    %c0_72 = arith.constant 0 : index
    %197 = vector.load %arg8[%c0_70, %196, %c0_71, %c0_72] : memref<1x5x8x32xf32, #tpu.memory_space<vmem>>, vector<1x1x8x32xf32>
    %198 = vector.shape_cast %197 : vector<1x1x8x32xf32> to vector<8x32xf32>
    %199 = vector.shape_cast %195 : vector<8x32xf32> to vector<1x1x8x32xf32>
    tpu.vector_store %arg8[%c0_70, %196, %c0_71, %c0_72], %199 {strides = array<i32>} : memref<1x5x8x32xf32, #tpu.memory_space<vmem>>, vector<1x1x8x32xf32>,
    %200 = vector.broadcast %163 : vector<8x1xf32> to vector<8x32xf32>
    %201 = arith.mulf %200, %193 : vector<8x32xf32>
    %cst_73 = arith.constant 1.000000e+00 : f32
    %202 = vector.broadcast %cst_73 : f32 to vector<8x1xf32>
    %203 = arith.subf %202, %163 : vector<8x1xf32>
    %204 = vector.broadcast %203 : vector<8x1xf32> to vector<8x32xf32>
    %205 = arith.mulf %204, %144 : vector<8x32xf32>
    %206 = arith.addf %201, %205 : vector<8x32xf32>
    %207 = vector.broadcast %163 : vector<8x1xf32> to vector<8x32xf32>
    %208 = arith.mulf %207, %191 : vector<8x32xf32>
    %cst_74 = arith.constant 1.000000e+00 : f32
    %209 = vector.broadcast %cst_74 : f32 to vector<8x1xf32>
    %210 = arith.subf %209, %163 : vector<8x1xf32>
    %211 = vector.broadcast %210 : vector<8x1xf32> to vector<8x32xf32>
    %212 = arith.mulf %211, %151 : vector<8x32xf32>
    %213 = arith.addf %208, %212 : vector<8x32xf32>
    %c3_i32 = arith.constant 3 : i32
    %c4_i32_75 = arith.constant 4 : i32
    %214 = arith.subi %c4_i32_75, %c3_i32 : i32
    %215 = arith.select %0, %214, %c3_i32 : i32
    %c5_i32_76 = arith.constant 5 : i32
    %216 = arith.muli %arg1, %c5_i32_76 : i32
    %217 = arith.addi %216, %c3_i32 : i32
    %c9_i32_77 = arith.constant 9 : i32
    %218 = arith.subi %c9_i32_77, %217 : i32
    %c5_i32_78 = arith.constant 5 : i32
    %219 = arith.muli %arg1, %c5_i32_78 : i32
    %220 = arith.addi %219, %c3_i32 : i32
    %221 = arith.select %0, %218, %220 : i32
    %222 = vector.broadcast %221 : i32 to vector<8x1xi32>
    %223 = arith.cmpi slt, %222, %25 : vector<8x1xi32>
    %224 = arith.extui %223 : vector<8x1xi1> to vector<8x1xi32>
    %225 = arith.sitofp %224 : vector<8x1xi32> to vector<8x1xf32>
    %226 = arith.index_cast %215 : i32 to index
    %c0_79 = arith.constant 0 : index
    %c0_80 = arith.constant 0 : index
    %227 = vector.load %arg11[%226, %c0_79, %c0_80] : memref<5x8x128xf32, #tpu.memory_space<vmem>>, vector<1x8x128xf32>
    %228 = vector.shape_cast %227 : vector<1x8x128xf32> to vector<8x128xf32>
    %cst_81 = arith.constant dense<0.000000e+00> : vector<8x128xf32>
    %229 = tpu.matmul %206, %24, %cst_81 {dimension_numbers = #tpu.dot_dimension_numbers<[1], [0], [0], [1], [0, 0, 1, 1], [], []>} : vector<8x32xf32>, vector<32x128xf32>, vector<8x128xf32> -> vector<8x128xf32>
    %230 = arith.addf %228, %229 : vector<8x128xf32>
    %231 = vector.extract_strided_slice %230 {offsets = [0, 0], sizes = [8, 32], strides = [1, 1]} : vector<8x128xf32> to vector<8x32xf32>
    %232 = arith.negf %231 : vector<8x32xf32>
    %233 = math.exp %232 : vector<8x32xf32>
    %cst_82 = arith.constant 1.000000e+00 : f32
    %234 = vector.broadcast %cst_82 : f32 to vector<8x32xf32>
    %235 = arith.addf %234, %233 : vector<8x32xf32>
    %236 = arith.divf %234, %235 : vector<8x32xf32>
    %237 = vector.extract_strided_slice %230 {offsets = [0, 32], sizes = [8, 32], strides = [1, 1]} : vector<8x128xf32> to vector<8x32xf32>
    %238 = arith.negf %237 : vector<8x32xf32>
    %239 = math.exp %238 : vector<8x32xf32>
    %cst_83 = arith.constant 1.000000e+00 : f32
    %240 = vector.broadcast %cst_83 : f32 to vector<8x32xf32>
    %241 = arith.addf %240, %239 : vector<8x32xf32>
    %242 = arith.divf %240, %241 : vector<8x32xf32>
    %243 = vector.extract_strided_slice %230 {offsets = [0, 64], sizes = [8, 32], strides = [1, 1]} : vector<8x128xf32> to vector<8x32xf32>
    %244 = math.tanh %243 : vector<8x32xf32>
    %245 = vector.extract_strided_slice %230 {offsets = [0, 96], sizes = [8, 32], strides = [1, 1]} : vector<8x128xf32> to vector<8x32xf32>
    %246 = arith.negf %245 : vector<8x32xf32>
    %247 = math.exp %246 : vector<8x32xf32>
    %cst_84 = arith.constant 1.000000e+00 : f32
    %248 = vector.broadcast %cst_84 : f32 to vector<8x32xf32>
    %249 = arith.addf %248, %247 : vector<8x32xf32>
    %250 = arith.divf %248, %249 : vector<8x32xf32>
    %251 = arith.mulf %242, %213 : vector<8x32xf32>
    %252 = arith.mulf %236, %244 : vector<8x32xf32>
    %253 = arith.addf %251, %252 : vector<8x32xf32>
    %254 = math.tanh %253 : vector<8x32xf32>
    %255 = arith.mulf %250, %254 : vector<8x32xf32>
    %256 = vector.broadcast %225 : vector<8x1xf32> to vector<8x32xf32>
    %257 = arith.mulf %256, %255 : vector<8x32xf32>
    %c0_85 = arith.constant 0 : index
    %258 = arith.index_cast %215 : i32 to index
    %c0_86 = arith.constant 0 : index
    %c0_87 = arith.constant 0 : index
    %259 = vector.load %arg8[%c0_85, %258, %c0_86, %c0_87] : memref<1x5x8x32xf32, #tpu.memory_space<vmem>>, vector<1x1x8x32xf32>
    %260 = vector.shape_cast %259 : vector<1x1x8x32xf32> to vector<8x32xf32>
    %261 = vector.shape_cast %257 : vector<8x32xf32> to vector<1x1x8x32xf32>
    tpu.vector_store %arg8[%c0_85, %258, %c0_86, %c0_87], %261 {strides = array<i32>} : memref<1x5x8x32xf32, #tpu.memory_space<vmem>>, vector<1x1x8x32xf32>,
    %262 = vector.broadcast %225 : vector<8x1xf32> to vector<8x32xf32>
    %263 = arith.mulf %262, %255 : vector<8x32xf32>
    %cst_88 = arith.constant 1.000000e+00 : f32
    %264 = vector.broadcast %cst_88 : f32 to vector<8x1xf32>
    %265 = arith.subf %264, %225 : vector<8x1xf32>
    %266 = vector.broadcast %265 : vector<8x1xf32> to vector<8x32xf32>
    %267 = arith.mulf %266, %206 : vector<8x32xf32>
    %268 = arith.addf %263, %267 : vector<8x32xf32>
    %269 = vector.broadcast %225 : vector<8x1xf32> to vector<8x32xf32>
    %270 = arith.mulf %269, %253 : vector<8x32xf32>
    %cst_89 = arith.constant 1.000000e+00 : f32
    %271 = vector.broadcast %cst_89 : f32 to vector<8x1xf32>
    %272 = arith.subf %271, %225 : vector<8x1xf32>
    %273 = vector.broadcast %272 : vector<8x1xf32> to vector<8x32xf32>
    %274 = arith.mulf %273, %213 : vector<8x32xf32>
    %275 = arith.addf %270, %274 : vector<8x32xf32>
    %c4_i32_90 = arith.constant 4 : i32
    %c4_i32_91 = arith.constant 4 : i32
    %276 = arith.subi %c4_i32_91, %c4_i32_90 : i32
    %277 = arith.select %0, %276, %c4_i32_90 : i32
    %c5_i32_92 = arith.constant 5 : i32
    %278 = arith.muli %arg1, %c5_i32_92 : i32
    %279 = arith.addi %278, %c4_i32_90 : i32
    %c9_i32_93 = arith.constant 9 : i32
    %280 = arith.subi %c9_i32_93, %279 : i32
    %c5_i32_94 = arith.constant 5 : i32
    %281 = arith.muli %arg1, %c5_i32_94 : i32
    %282 = arith.addi %281, %c4_i32_90 : i32
    %283 = arith.select %0, %280, %282 : i32
    %284 = vector.broadcast %283 : i32 to vector<8x1xi32>
    %285 = arith.cmpi slt, %284, %25 : vector<8x1xi32>
    %286 = arith.extui %285 : vector<8x1xi1> to vector<8x1xi32>
    %287 = arith.sitofp %286 : vector<8x1xi32> to vector<8x1xf32>
    %288 = arith.index_cast %277 : i32 to index
    %c0_95 = arith.constant 0 : index
    %c0_96 = arith.constant 0 : index
    %289 = vector.load %arg11[%288, %c0_95, %c0_96] : memref<5x8x128xf32, #tpu.memory_space<vmem>>, vector<1x8x128xf32>
    %290 = vector.shape_cast %289 : vector<1x8x128xf32> to vector<8x128xf32>
    %cst_97 = arith.constant dense<0.000000e+00> : vector<8x128xf32>
    %291 = tpu.matmul %268, %24, %cst_97 {dimension_numbers = #tpu.dot_dimension_numbers<[1], [0], [0], [1], [0, 0, 1, 1], [], []>} : vector<8x32xf32>, vector<32x128xf32>, vector<8x128xf32> -> vector<8x128xf32>
    %292 = arith.addf %290, %291 : vector<8x128xf32>
    %293 = vector.extract_strided_slice %292 {offsets = [0, 0], sizes = [8, 32], strides = [1, 1]} : vector<8x128xf32> to vector<8x32xf32>
    %294 = arith.negf %293 : vector<8x32xf32>
    %295 = math.exp %294 : vector<8x32xf32>
    %cst_98 = arith.constant 1.000000e+00 : f32
    %296 = vector.broadcast %cst_98 : f32 to vector<8x32xf32>
    %297 = arith.addf %296, %295 : vector<8x32xf32>
    %298 = arith.divf %296, %297 : vector<8x32xf32>
    %299 = vector.extract_strided_slice %292 {offsets = [0, 32], sizes = [8, 32], strides = [1, 1]} : vector<8x128xf32> to vector<8x32xf32>
    %300 = arith.negf %299 : vector<8x32xf32>
    %301 = math.exp %300 : vector<8x32xf32>
    %cst_99 = arith.constant 1.000000e+00 : f32
    %302 = vector.broadcast %cst_99 : f32 to vector<8x32xf32>
    %303 = arith.addf %302, %301 : vector<8x32xf32>
    %304 = arith.divf %302, %303 : vector<8x32xf32>
    %305 = vector.extract_strided_slice %292 {offsets = [0, 64], sizes = [8, 32], strides = [1, 1]} : vector<8x128xf32> to vector<8x32xf32>
    %306 = math.tanh %305 : vector<8x32xf32>
    %307 = vector.extract_strided_slice %292 {offsets = [0, 96], sizes = [8, 32], strides = [1, 1]} : vector<8x128xf32> to vector<8x32xf32>
    %308 = arith.negf %307 : vector<8x32xf32>
    %309 = math.exp %308 : vector<8x32xf32>
    %cst_100 = arith.constant 1.000000e+00 : f32
    %310 = vector.broadcast %cst_100 : f32 to vector<8x32xf32>
    %311 = arith.addf %310, %309 : vector<8x32xf32>
    %312 = arith.divf %310, %311 : vector<8x32xf32>
    %313 = arith.mulf %304, %275 : vector<8x32xf32>
    %314 = arith.mulf %298, %306 : vector<8x32xf32>
    %315 = arith.addf %313, %314 : vector<8x32xf32>
    %316 = math.tanh %315 : vector<8x32xf32>
    %317 = arith.mulf %312, %316 : vector<8x32xf32>
    %318 = vector.broadcast %287 : vector<8x1xf32> to vector<8x32xf32>
    %319 = arith.mulf %318, %317 : vector<8x32xf32>
    %c0_101 = arith.constant 0 : index
    %320 = arith.index_cast %277 : i32 to index
    %c0_102 = arith.constant 0 : index
    %c0_103 = arith.constant 0 : index
    %321 = vector.load %arg8[%c0_101, %320, %c0_102, %c0_103] : memref<1x5x8x32xf32, #tpu.memory_space<vmem>>, vector<1x1x8x32xf32>
    %322 = vector.shape_cast %321 : vector<1x1x8x32xf32> to vector<8x32xf32>
    %323 = vector.shape_cast %319 : vector<8x32xf32> to vector<1x1x8x32xf32>
    tpu.vector_store %arg8[%c0_101, %320, %c0_102, %c0_103], %323 {strides = array<i32>} : memref<1x5x8x32xf32, #tpu.memory_space<vmem>>, vector<1x1x8x32xf32>,
    %324 = vector.broadcast %287 : vector<8x1xf32> to vector<8x32xf32>
    %325 = arith.mulf %324, %317 : vector<8x32xf32>
    %cst_104 = arith.constant 1.000000e+00 : f32
    %326 = vector.broadcast %cst_104 : f32 to vector<8x1xf32>
    %327 = arith.subf %326, %287 : vector<8x1xf32>
    %328 = vector.broadcast %327 : vector<8x1xf32> to vector<8x32xf32>
    %329 = arith.mulf %328, %268 : vector<8x32xf32>
    %330 = arith.addf %325, %329 : vector<8x32xf32>
    %331 = vector.broadcast %287 : vector<8x1xf32> to vector<8x32xf32>
    %332 = arith.mulf %331, %315 : vector<8x32xf32>
    %cst_105 = arith.constant 1.000000e+00 : f32
    %333 = vector.broadcast %cst_105 : f32 to vector<8x1xf32>
    %334 = arith.subf %333, %287 : vector<8x1xf32>
    %335 = vector.broadcast %334 : vector<8x1xf32> to vector<8x32xf32>
    %336 = arith.mulf %335, %275 : vector<8x32xf32>
    %337 = arith.addf %332, %336 : vector<8x32xf32>
    %c5_i32_106 = arith.constant 5 : i32
    %c0_107 = arith.constant 0 : index
    %c0_108 = arith.constant 0 : index
    %338 = vector.load %arg9[%c0_107, %c0_108] : memref<8x32xf32, #tpu.memory_space<vmem>>, vector<8x32xf32>
    tpu.vector_store %arg9[%c0_107, %c0_108], %330 {strides = array<i32>} : memref<8x32xf32, #tpu.memory_space<vmem>>, vector<8x32xf32>,
    %c0_109 = arith.constant 0 : index
    %c0_110 = arith.constant 0 : index
    %339 = vector.load %arg10[%c0_109, %c0_110] : memref<8x32xf32, #tpu.memory_space<vmem>>, vector<8x32xf32>
    tpu.vector_store %arg10[%c0_109, %c0_110], %337 {strides = array<i32>} : memref<8x32xf32, #tpu.memory_space<vmem>>, vector<8x32xf32>,
    return
  }
  func.func @transform_0(%arg0: i32, %arg1: i32) -> (i32, i32) {
    %c0_i32 = arith.constant 0 : i32
    %c0_i32_0 = arith.constant 0 : i32
    %c0_i32_1 = arith.constant 0 : i32
    return %c0_i32, %c0_i32_0 : i32, i32
  }
  func.func @transform_1(%arg0: i32, %arg1: i32) -> (i32, i32, i32, i32) {
    %c0_i32 = arith.constant 0 : i32
    %0 = arith.cmpi eq, %arg0, %c0_i32 : i32
    %c1_i32 = arith.constant 1 : i32
    %1 = arith.subi %c1_i32, %arg1 : i32
    %2 = arith.select %0, %arg1, %1 : i32
    %c0_i32_0 = arith.constant 0 : i32
    %c0_i32_1 = arith.constant 0 : i32
    %c0_i32_2 = arith.constant 0 : i32
    %c0_i32_3 = arith.constant 0 : i32
    return %c0_i32_0, %2, %c0_i32_1, %c0_i32_2 : i32, i32, i32, i32
  }
  func.func @transform_2(%arg0: i32, %arg1: i32) -> (i32, i32, i32, i32) {
    %c0_i32 = arith.constant 0 : i32
    %0 = arith.cmpi eq, %arg0, %c0_i32 : i32
    %c1_i32 = arith.constant 1 : i32
    %1 = arith.subi %c1_i32, %arg1 : i32
    %2 = arith.select %0, %arg1, %1 : i32
    %c1_i32_0 = arith.constant 1 : i32
    %c0_i32_1 = arith.constant 0 : i32
    %c0_i32_2 = arith.constant 0 : i32
    %c0_i32_3 = arith.constant 0 : i32
    return %c1_i32_0, %2, %c0_i32_1, %c0_i32_2 : i32, i32, i32, i32
  }
  func.func @transform_3(%arg0: i32, %arg1: i32) -> (i32, i32, i32, i32) {
    %c0_i32 = arith.constant 0 : i32
    %c0_i32_0 = arith.constant 0 : i32
    %c0_i32_1 = arith.constant 0 : i32
    %c0_i32_2 = arith.constant 0 : i32
    return %arg0, %c0_i32, %c0_i32_0, %c0_i32_1 : i32, i32, i32, i32
  }
  func.func @transform_4(%arg0: i32, %arg1: i32) -> (i32, i32, i32) {
    %c0_i32 = arith.constant 0 : i32
    %c0_i32_0 = arith.constant 0 : i32
    %c0_i32_1 = arith.constant 0 : i32
    return %arg0, %c0_i32, %c0_i32_0 : i32, i32, i32
  }
  func.func @transform_5(%arg0: i32, %arg1: i32) -> (i32, i32, i32) {
    %c0_i32 = arith.constant 0 : i32
    %c0_i32_0 = arith.constant 0 : i32
    %c0_i32_1 = arith.constant 0 : i32
    return %arg0, %c0_i32, %c0_i32_0 : i32, i32, i32
  }
  func.func @transform_6(%arg0: i32, %arg1: i32) -> (i32, i32, i32, i32) {
    %c0_i32 = arith.constant 0 : i32
    %0 = arith.cmpi eq, %arg0, %c0_i32 : i32
    %c1_i32 = arith.constant 1 : i32
    %1 = arith.subi %c1_i32, %arg1 : i32
    %2 = arith.select %0, %arg1, %1 : i32
    %c0_i32_0 = arith.constant 0 : i32
    %c0_i32_1 = arith.constant 0 : i32
    %c0_i32_2 = arith.constant 0 : i32
    return %arg0, %2, %c0_i32_0, %c0_i32_1 : i32, i32, i32, i32
  }
}

module attributes {stable_mosaic.version = 11 : i64} {
  func.func @kernel(%arg0: i32, %arg1: i32, %arg2: memref<8x1xi32, #tpu.memory_space<vmem>>, %arg3: memref<5x8x16xf32, #tpu.memory_space<vmem>>, %arg4: memref<1x1x16x128xf32, #tpu.memory_space<vmem>>, %arg5: memref<1x32x128xf32, #tpu.memory_space<vmem>>, %arg6: memref<1x1x128xf32, #tpu.memory_space<vmem>>, %arg7: memref<1x5x8x32xf32, #tpu.memory_space<vmem>>, %arg8: memref<8x32xf32, #tpu.memory_space<vmem>>, %arg9: memref<8x32xf32, #tpu.memory_space<vmem>>, %arg10: memref<5x8x128xf32, #tpu.memory_space<vmem>>) attributes {dimension_semantics = [#tpu.dimension_semantics<parallel>, #tpu.dimension_semantics<arbitrary>], iteration_bounds = array<i64: 2, 2>, scalar_prefetch = 0 : i64, scratch_operands = 3 : i64, tpu.core_type = #tpu.core_type<tc>, window_params = [{pipeline_mode = #tpu.pipeline_mode<synchronous>, transform_indices = @transform_0, window_bounds = array<i64: 8, 1>}, {transform_indices = @transform_1, window_bounds = array<i64: 5, 8, 16>}, {transform_indices = @transform_2, window_bounds = array<i64: 1, 1, 16, 128>}, {transform_indices = @transform_3, window_bounds = array<i64: 1, 32, 128>}, {transform_indices = @transform_4, window_bounds = array<i64: 1, 1, 128>}, {transform_indices = @transform_5, window_bounds = array<i64: 1, 5, 8, 32>}]} {
    %c1_i32 = arith.constant 1 : i32
    %0 = arith.cmpi eq, %arg0, %c1_i32 : i32
    %c0_i32 = arith.constant 0 : i32
    %1 = arith.cmpi eq, %arg1, %c0_i32 : i32
    %2 = arith.extui %1 : i1 to i32
    %c0_i32_0 = arith.constant 0 : i32
    %3 = arith.cmpi ne, %2, %c0_i32_0 : i32
    scf.if %3 {
      %cst_102 = arith.constant 0.000000e+00 : f32
      %332 = vector.broadcast %cst_102 : f32 to vector<8x32xf32>
      %c0_103 = arith.constant 0 : index
      %c0_104 = arith.constant 0 : index
      %333 = vector.load %arg8[%c0_103, %c0_104] : memref<8x32xf32, #tpu.memory_space<vmem>>, vector<8x32xf32>
      tpu.vector_store %arg8[%c0_103, %c0_104], %332 {strides = array<i32>} : memref<8x32xf32, #tpu.memory_space<vmem>>, vector<8x32xf32>,
      %cst_105 = arith.constant 0.000000e+00 : f32
      %334 = vector.broadcast %cst_105 : f32 to vector<8x32xf32>
      %c0_106 = arith.constant 0 : index
      %c0_107 = arith.constant 0 : index
      %335 = vector.load %arg9[%c0_106, %c0_107] : memref<8x32xf32, #tpu.memory_space<vmem>>, vector<8x32xf32>
      tpu.vector_store %arg9[%c0_106, %c0_107], %334 {strides = array<i32>} : memref<8x32xf32, #tpu.memory_space<vmem>>, vector<8x32xf32>,
    } else {
    }
    %c0 = arith.constant 0 : index
    %c0_1 = arith.constant 0 : index
    %c0_2 = arith.constant 0 : index
    %4 = vector.load %arg6[%c0, %c0_1, %c0_2] : memref<1x1x128xf32, #tpu.memory_space<vmem>>, vector<1x1x128xf32>
    %5 = vector.shape_cast %4 : vector<1x1x128xf32> to vector<1x128xf32>
    %c0_3 = arith.constant 0 : index
    %c0_4 = arith.constant 0 : index
    %c0_5 = arith.constant 0 : index
    %6 = vector.load %arg3[%c0_3, %c0_4, %c0_5] : memref<5x8x16xf32, #tpu.memory_space<vmem>>, vector<5x8x16xf32>
    %7 = vector.shape_cast %6 : vector<5x8x16xf32> to vector<40x16xf32>
    %c0_6 = arith.constant 0 : index
    %c0_7 = arith.constant 0 : index
    %c0_8 = arith.constant 0 : index
    %c0_9 = arith.constant 0 : index
    %8 = vector.load %arg4[%c0_6, %c0_7, %c0_8, %c0_9] : memref<1x1x16x128xf32, #tpu.memory_space<vmem>>, vector<1x1x16x128xf32>
    %9 = vector.shape_cast %8 : vector<1x1x16x128xf32> to vector<16x128xf32>
    %cst = arith.constant dense<0.000000e+00> : vector<40x128xf32>
    %10 = tpu.matmul %7, %9, %cst {dimension_numbers = #tpu.dot_dimension_numbers<[1], [0], [0], [1], [0, 0, 1, 1], [], []>} : vector<40x16xf32>, vector<16x128xf32>, vector<40x128xf32> -> vector<40x128xf32>
    %11 = vector.broadcast %5 : vector<1x128xf32> to vector<40x128xf32>
    %12 = arith.addf %11, %10 : vector<40x128xf32>
    %13 = vector.shape_cast %12 : vector<40x128xf32> to vector<5x8x128xf32>
    %c0_10 = arith.constant 0 : index
    %c0_11 = arith.constant 0 : index
    %c0_12 = arith.constant 0 : index
    %14 = vector.load %arg10[%c0_10, %c0_11, %c0_12] : memref<5x8x128xf32, #tpu.memory_space<vmem>>, vector<5x8x128xf32>
    tpu.vector_store %arg10[%c0_10, %c0_11, %c0_12], %13 {strides = array<i32>} : memref<5x8x128xf32, #tpu.memory_space<vmem>>, vector<5x8x128xf32>,
    %c0_13 = arith.constant 0 : index
    %c0_14 = arith.constant 0 : index
    %c0_15 = arith.constant 0 : index
    %15 = vector.load %arg5[%c0_13, %c0_14, %c0_15] : memref<1x32x128xf32, #tpu.memory_space<vmem>>, vector<1x32x128xf32>
    %16 = vector.shape_cast %15 : vector<1x32x128xf32> to vector<32x128xf32>
    %c0_16 = arith.constant 0 : index
    %c0_17 = arith.constant 0 : index
    %17 = vector.load %arg2[%c0_16, %c0_17] : memref<8x1xi32, #tpu.memory_space<vmem>>, vector<8x1xi32>
    %c0_18 = arith.constant 0 : index
    %c0_19 = arith.constant 0 : index
    %18 = vector.load %arg8[%c0_18, %c0_19] : memref<8x32xf32, #tpu.memory_space<vmem>>, vector<8x32xf32>
    %c0_20 = arith.constant 0 : index
    %c0_21 = arith.constant 0 : index
    %19 = vector.load %arg9[%c0_20, %c0_21] : memref<8x32xf32, #tpu.memory_space<vmem>>, vector<8x32xf32>
    %c0_i32_22 = arith.constant 0 : i32
    %c4_i32 = arith.constant 4 : i32
    %20 = arith.subi %c4_i32, %c0_i32_22 : i32
    %21 = arith.select %0, %20, %c0_i32_22 : i32
    %c5_i32 = arith.constant 5 : i32
    %22 = arith.muli %arg1, %c5_i32 : i32
    %23 = arith.addi %22, %c0_i32_22 : i32
    %c9_i32 = arith.constant 9 : i32
    %24 = arith.subi %c9_i32, %23 : i32
    %c5_i32_23 = arith.constant 5 : i32
    %25 = arith.muli %arg1, %c5_i32_23 : i32
    %26 = arith.addi %25, %c0_i32_22 : i32
    %27 = arith.select %0, %24, %26 : i32
    %28 = vector.broadcast %27 : i32 to vector<8x1xi32>
    %29 = arith.cmpi slt, %28, %17 : vector<8x1xi32>
    %30 = arith.extui %29 : vector<8x1xi1> to vector<8x1xi32>
    %31 = arith.sitofp %30 : vector<8x1xi32> to vector<8x1xf32>
    %32 = arith.index_cast %21 : i32 to index
    %c0_24 = arith.constant 0 : index
    %c0_25 = arith.constant 0 : index
    %33 = vector.load %arg10[%32, %c0_24, %c0_25] : memref<5x8x128xf32, #tpu.memory_space<vmem>>, vector<1x8x128xf32>
    %34 = vector.shape_cast %33 : vector<1x8x128xf32> to vector<8x128xf32>
    %cst_26 = arith.constant dense<0.000000e+00> : vector<8x128xf32>
    %35 = tpu.matmul %18, %16, %cst_26 {dimension_numbers = #tpu.dot_dimension_numbers<[1], [0], [0], [1], [0, 0, 1, 1], [], []>} : vector<8x32xf32>, vector<32x128xf32>, vector<8x128xf32> -> vector<8x128xf32>
    %36 = arith.addf %34, %35 : vector<8x128xf32>
    %37 = vector.extract_strided_slice %36 {offsets = [0, 0], sizes = [8, 32], strides = [1, 1]} : vector<8x128xf32> to vector<8x32xf32>
    %38 = arith.negf %37 : vector<8x32xf32>
    %39 = math.exp %38 : vector<8x32xf32>
    %cst_27 = arith.constant 1.000000e+00 : f32
    %40 = vector.broadcast %cst_27 : f32 to vector<8x32xf32>
    %41 = arith.addf %40, %39 : vector<8x32xf32>
    %42 = arith.divf %40, %41 : vector<8x32xf32>
    %43 = vector.extract_strided_slice %36 {offsets = [0, 32], sizes = [8, 32], strides = [1, 1]} : vector<8x128xf32> to vector<8x32xf32>
    %44 = arith.negf %43 : vector<8x32xf32>
    %45 = math.exp %44 : vector<8x32xf32>
    %cst_28 = arith.constant 1.000000e+00 : f32
    %46 = vector.broadcast %cst_28 : f32 to vector<8x32xf32>
    %47 = arith.addf %46, %45 : vector<8x32xf32>
    %48 = arith.divf %46, %47 : vector<8x32xf32>
    %49 = vector.extract_strided_slice %36 {offsets = [0, 64], sizes = [8, 32], strides = [1, 1]} : vector<8x128xf32> to vector<8x32xf32>
    %50 = math.tanh %49 : vector<8x32xf32>
    %51 = vector.extract_strided_slice %36 {offsets = [0, 96], sizes = [8, 32], strides = [1, 1]} : vector<8x128xf32> to vector<8x32xf32>
    %52 = arith.negf %51 : vector<8x32xf32>
    %53 = math.exp %52 : vector<8x32xf32>
    %cst_29 = arith.constant 1.000000e+00 : f32
    %54 = vector.broadcast %cst_29 : f32 to vector<8x32xf32>
    %55 = arith.addf %54, %53 : vector<8x32xf32>
    %56 = arith.divf %54, %55 : vector<8x32xf32>
    %57 = arith.mulf %48, %19 : vector<8x32xf32>
    %58 = arith.mulf %42, %50 : vector<8x32xf32>
    %59 = arith.addf %57, %58 : vector<8x32xf32>
    %60 = math.tanh %59 : vector<8x32xf32>
    %61 = arith.mulf %56, %60 : vector<8x32xf32>
    %62 = vector.broadcast %31 : vector<8x1xf32> to vector<8x32xf32>
    %63 = arith.mulf %62, %61 : vector<8x32xf32>
    %c0_30 = arith.constant 0 : index
    %64 = arith.index_cast %21 : i32 to index
    %c0_31 = arith.constant 0 : index
    %c0_32 = arith.constant 0 : index
    %65 = vector.load %arg7[%c0_30, %64, %c0_31, %c0_32] : memref<1x5x8x32xf32, #tpu.memory_space<vmem>>, vector<1x1x8x32xf32>
    %66 = vector.shape_cast %65 : vector<1x1x8x32xf32> to vector<8x32xf32>
    %67 = vector.shape_cast %63 : vector<8x32xf32> to vector<1x1x8x32xf32>
    tpu.vector_store %arg7[%c0_30, %64, %c0_31, %c0_32], %67 {strides = array<i32>} : memref<1x5x8x32xf32, #tpu.memory_space<vmem>>, vector<1x1x8x32xf32>,
    %68 = vector.broadcast %31 : vector<8x1xf32> to vector<8x32xf32>
    %69 = arith.mulf %68, %61 : vector<8x32xf32>
    %cst_33 = arith.constant 1.000000e+00 : f32
    %70 = vector.broadcast %cst_33 : f32 to vector<8x1xf32>
    %71 = arith.subf %70, %31 : vector<8x1xf32>
    %72 = vector.broadcast %71 : vector<8x1xf32> to vector<8x32xf32>
    %73 = arith.mulf %72, %18 : vector<8x32xf32>
    %74 = arith.addf %69, %73 : vector<8x32xf32>
    %75 = vector.broadcast %31 : vector<8x1xf32> to vector<8x32xf32>
    %76 = arith.mulf %75, %59 : vector<8x32xf32>
    %cst_34 = arith.constant 1.000000e+00 : f32
    %77 = vector.broadcast %cst_34 : f32 to vector<8x1xf32>
    %78 = arith.subf %77, %31 : vector<8x1xf32>
    %79 = vector.broadcast %78 : vector<8x1xf32> to vector<8x32xf32>
    %80 = arith.mulf %79, %19 : vector<8x32xf32>
    %81 = arith.addf %76, %80 : vector<8x32xf32>
    %c1_i32_35 = arith.constant 1 : i32
    %c4_i32_36 = arith.constant 4 : i32
    %82 = arith.subi %c4_i32_36, %c1_i32_35 : i32
    %83 = arith.select %0, %82, %c1_i32_35 : i32
    %c5_i32_37 = arith.constant 5 : i32
    %84 = arith.muli %arg1, %c5_i32_37 : i32
    %85 = arith.addi %84, %c1_i32_35 : i32
    %c9_i32_38 = arith.constant 9 : i32
    %86 = arith.subi %c9_i32_38, %85 : i32
    %c5_i32_39 = arith.constant 5 : i32
    %87 = arith.muli %arg1, %c5_i32_39 : i32
    %88 = arith.addi %87, %c1_i32_35 : i32
    %89 = arith.select %0, %86, %88 : i32
    %90 = vector.broadcast %89 : i32 to vector<8x1xi32>
    %91 = arith.cmpi slt, %90, %17 : vector<8x1xi32>
    %92 = arith.extui %91 : vector<8x1xi1> to vector<8x1xi32>
    %93 = arith.sitofp %92 : vector<8x1xi32> to vector<8x1xf32>
    %94 = arith.index_cast %83 : i32 to index
    %c0_40 = arith.constant 0 : index
    %c0_41 = arith.constant 0 : index
    %95 = vector.load %arg10[%94, %c0_40, %c0_41] : memref<5x8x128xf32, #tpu.memory_space<vmem>>, vector<1x8x128xf32>
    %96 = vector.shape_cast %95 : vector<1x8x128xf32> to vector<8x128xf32>
    %cst_42 = arith.constant dense<0.000000e+00> : vector<8x128xf32>
    %97 = tpu.matmul %74, %16, %cst_42 {dimension_numbers = #tpu.dot_dimension_numbers<[1], [0], [0], [1], [0, 0, 1, 1], [], []>} : vector<8x32xf32>, vector<32x128xf32>, vector<8x128xf32> -> vector<8x128xf32>
    %98 = arith.addf %96, %97 : vector<8x128xf32>
    %99 = vector.extract_strided_slice %98 {offsets = [0, 0], sizes = [8, 32], strides = [1, 1]} : vector<8x128xf32> to vector<8x32xf32>
    %100 = arith.negf %99 : vector<8x32xf32>
    %101 = math.exp %100 : vector<8x32xf32>
    %cst_43 = arith.constant 1.000000e+00 : f32
    %102 = vector.broadcast %cst_43 : f32 to vector<8x32xf32>
    %103 = arith.addf %102, %101 : vector<8x32xf32>
    %104 = arith.divf %102, %103 : vector<8x32xf32>
    %105 = vector.extract_strided_slice %98 {offsets = [0, 32], sizes = [8, 32], strides = [1, 1]} : vector<8x128xf32> to vector<8x32xf32>
    %106 = arith.negf %105 : vector<8x32xf32>
    %107 = math.exp %106 : vector<8x32xf32>
    %cst_44 = arith.constant 1.000000e+00 : f32
    %108 = vector.broadcast %cst_44 : f32 to vector<8x32xf32>
    %109 = arith.addf %108, %107 : vector<8x32xf32>
    %110 = arith.divf %108, %109 : vector<8x32xf32>
    %111 = vector.extract_strided_slice %98 {offsets = [0, 64], sizes = [8, 32], strides = [1, 1]} : vector<8x128xf32> to vector<8x32xf32>
    %112 = math.tanh %111 : vector<8x32xf32>
    %113 = vector.extract_strided_slice %98 {offsets = [0, 96], sizes = [8, 32], strides = [1, 1]} : vector<8x128xf32> to vector<8x32xf32>
    %114 = arith.negf %113 : vector<8x32xf32>
    %115 = math.exp %114 : vector<8x32xf32>
    %cst_45 = arith.constant 1.000000e+00 : f32
    %116 = vector.broadcast %cst_45 : f32 to vector<8x32xf32>
    %117 = arith.addf %116, %115 : vector<8x32xf32>
    %118 = arith.divf %116, %117 : vector<8x32xf32>
    %119 = arith.mulf %110, %81 : vector<8x32xf32>
    %120 = arith.mulf %104, %112 : vector<8x32xf32>
    %121 = arith.addf %119, %120 : vector<8x32xf32>
    %122 = math.tanh %121 : vector<8x32xf32>
    %123 = arith.mulf %118, %122 : vector<8x32xf32>
    %124 = vector.broadcast %93 : vector<8x1xf32> to vector<8x32xf32>
    %125 = arith.mulf %124, %123 : vector<8x32xf32>
    %c0_46 = arith.constant 0 : index
    %126 = arith.index_cast %83 : i32 to index
    %c0_47 = arith.constant 0 : index
    %c0_48 = arith.constant 0 : index
    %127 = vector.load %arg7[%c0_46, %126, %c0_47, %c0_48] : memref<1x5x8x32xf32, #tpu.memory_space<vmem>>, vector<1x1x8x32xf32>
    %128 = vector.shape_cast %127 : vector<1x1x8x32xf32> to vector<8x32xf32>
    %129 = vector.shape_cast %125 : vector<8x32xf32> to vector<1x1x8x32xf32>
    tpu.vector_store %arg7[%c0_46, %126, %c0_47, %c0_48], %129 {strides = array<i32>} : memref<1x5x8x32xf32, #tpu.memory_space<vmem>>, vector<1x1x8x32xf32>,
    %130 = vector.broadcast %93 : vector<8x1xf32> to vector<8x32xf32>
    %131 = arith.mulf %130, %123 : vector<8x32xf32>
    %cst_49 = arith.constant 1.000000e+00 : f32
    %132 = vector.broadcast %cst_49 : f32 to vector<8x1xf32>
    %133 = arith.subf %132, %93 : vector<8x1xf32>
    %134 = vector.broadcast %133 : vector<8x1xf32> to vector<8x32xf32>
    %135 = arith.mulf %134, %74 : vector<8x32xf32>
    %136 = arith.addf %131, %135 : vector<8x32xf32>
    %137 = vector.broadcast %93 : vector<8x1xf32> to vector<8x32xf32>
    %138 = arith.mulf %137, %121 : vector<8x32xf32>
    %cst_50 = arith.constant 1.000000e+00 : f32
    %139 = vector.broadcast %cst_50 : f32 to vector<8x1xf32>
    %140 = arith.subf %139, %93 : vector<8x1xf32>
    %141 = vector.broadcast %140 : vector<8x1xf32> to vector<8x32xf32>
    %142 = arith.mulf %141, %81 : vector<8x32xf32>
    %143 = arith.addf %138, %142 : vector<8x32xf32>
    %c2_i32 = arith.constant 2 : i32
    %c4_i32_51 = arith.constant 4 : i32
    %144 = arith.subi %c4_i32_51, %c2_i32 : i32
    %145 = arith.select %0, %144, %c2_i32 : i32
    %c5_i32_52 = arith.constant 5 : i32
    %146 = arith.muli %arg1, %c5_i32_52 : i32
    %147 = arith.addi %146, %c2_i32 : i32
    %c9_i32_53 = arith.constant 9 : i32
    %148 = arith.subi %c9_i32_53, %147 : i32
    %c5_i32_54 = arith.constant 5 : i32
    %149 = arith.muli %arg1, %c5_i32_54 : i32
    %150 = arith.addi %149, %c2_i32 : i32
    %151 = arith.select %0, %148, %150 : i32
    %152 = vector.broadcast %151 : i32 to vector<8x1xi32>
    %153 = arith.cmpi slt, %152, %17 : vector<8x1xi32>
    %154 = arith.extui %153 : vector<8x1xi1> to vector<8x1xi32>
    %155 = arith.sitofp %154 : vector<8x1xi32> to vector<8x1xf32>
    %156 = arith.index_cast %145 : i32 to index
    %c0_55 = arith.constant 0 : index
    %c0_56 = arith.constant 0 : index
    %157 = vector.load %arg10[%156, %c0_55, %c0_56] : memref<5x8x128xf32, #tpu.memory_space<vmem>>, vector<1x8x128xf32>
    %158 = vector.shape_cast %157 : vector<1x8x128xf32> to vector<8x128xf32>
    %cst_57 = arith.constant dense<0.000000e+00> : vector<8x128xf32>
    %159 = tpu.matmul %136, %16, %cst_57 {dimension_numbers = #tpu.dot_dimension_numbers<[1], [0], [0], [1], [0, 0, 1, 1], [], []>} : vector<8x32xf32>, vector<32x128xf32>, vector<8x128xf32> -> vector<8x128xf32>
    %160 = arith.addf %158, %159 : vector<8x128xf32>
    %161 = vector.extract_strided_slice %160 {offsets = [0, 0], sizes = [8, 32], strides = [1, 1]} : vector<8x128xf32> to vector<8x32xf32>
    %162 = arith.negf %161 : vector<8x32xf32>
    %163 = math.exp %162 : vector<8x32xf32>
    %cst_58 = arith.constant 1.000000e+00 : f32
    %164 = vector.broadcast %cst_58 : f32 to vector<8x32xf32>
    %165 = arith.addf %164, %163 : vector<8x32xf32>
    %166 = arith.divf %164, %165 : vector<8x32xf32>
    %167 = vector.extract_strided_slice %160 {offsets = [0, 32], sizes = [8, 32], strides = [1, 1]} : vector<8x128xf32> to vector<8x32xf32>
    %168 = arith.negf %167 : vector<8x32xf32>
    %169 = math.exp %168 : vector<8x32xf32>
    %cst_59 = arith.constant 1.000000e+00 : f32
    %170 = vector.broadcast %cst_59 : f32 to vector<8x32xf32>
    %171 = arith.addf %170, %169 : vector<8x32xf32>
    %172 = arith.divf %170, %171 : vector<8x32xf32>
    %173 = vector.extract_strided_slice %160 {offsets = [0, 64], sizes = [8, 32], strides = [1, 1]} : vector<8x128xf32> to vector<8x32xf32>
    %174 = math.tanh %173 : vector<8x32xf32>
    %175 = vector.extract_strided_slice %160 {offsets = [0, 96], sizes = [8, 32], strides = [1, 1]} : vector<8x128xf32> to vector<8x32xf32>
    %176 = arith.negf %175 : vector<8x32xf32>
    %177 = math.exp %176 : vector<8x32xf32>
    %cst_60 = arith.constant 1.000000e+00 : f32
    %178 = vector.broadcast %cst_60 : f32 to vector<8x32xf32>
    %179 = arith.addf %178, %177 : vector<8x32xf32>
    %180 = arith.divf %178, %179 : vector<8x32xf32>
    %181 = arith.mulf %172, %143 : vector<8x32xf32>
    %182 = arith.mulf %166, %174 : vector<8x32xf32>
    %183 = arith.addf %181, %182 : vector<8x32xf32>
    %184 = math.tanh %183 : vector<8x32xf32>
    %185 = arith.mulf %180, %184 : vector<8x32xf32>
    %186 = vector.broadcast %155 : vector<8x1xf32> to vector<8x32xf32>
    %187 = arith.mulf %186, %185 : vector<8x32xf32>
    %c0_61 = arith.constant 0 : index
    %188 = arith.index_cast %145 : i32 to index
    %c0_62 = arith.constant 0 : index
    %c0_63 = arith.constant 0 : index
    %189 = vector.load %arg7[%c0_61, %188, %c0_62, %c0_63] : memref<1x5x8x32xf32, #tpu.memory_space<vmem>>, vector<1x1x8x32xf32>
    %190 = vector.shape_cast %189 : vector<1x1x8x32xf32> to vector<8x32xf32>
    %191 = vector.shape_cast %187 : vector<8x32xf32> to vector<1x1x8x32xf32>
    tpu.vector_store %arg7[%c0_61, %188, %c0_62, %c0_63], %191 {strides = array<i32>} : memref<1x5x8x32xf32, #tpu.memory_space<vmem>>, vector<1x1x8x32xf32>,
    %192 = vector.broadcast %155 : vector<8x1xf32> to vector<8x32xf32>
    %193 = arith.mulf %192, %185 : vector<8x32xf32>
    %cst_64 = arith.constant 1.000000e+00 : f32
    %194 = vector.broadcast %cst_64 : f32 to vector<8x1xf32>
    %195 = arith.subf %194, %155 : vector<8x1xf32>
    %196 = vector.broadcast %195 : vector<8x1xf32> to vector<8x32xf32>
    %197 = arith.mulf %196, %136 : vector<8x32xf32>
    %198 = arith.addf %193, %197 : vector<8x32xf32>
    %199 = vector.broadcast %155 : vector<8x1xf32> to vector<8x32xf32>
    %200 = arith.mulf %199, %183 : vector<8x32xf32>
    %cst_65 = arith.constant 1.000000e+00 : f32
    %201 = vector.broadcast %cst_65 : f32 to vector<8x1xf32>
    %202 = arith.subf %201, %155 : vector<8x1xf32>
    %203 = vector.broadcast %202 : vector<8x1xf32> to vector<8x32xf32>
    %204 = arith.mulf %203, %143 : vector<8x32xf32>
    %205 = arith.addf %200, %204 : vector<8x32xf32>
    %c3_i32 = arith.constant 3 : i32
    %c4_i32_66 = arith.constant 4 : i32
    %206 = arith.subi %c4_i32_66, %c3_i32 : i32
    %207 = arith.select %0, %206, %c3_i32 : i32
    %c5_i32_67 = arith.constant 5 : i32
    %208 = arith.muli %arg1, %c5_i32_67 : i32
    %209 = arith.addi %208, %c3_i32 : i32
    %c9_i32_68 = arith.constant 9 : i32
    %210 = arith.subi %c9_i32_68, %209 : i32
    %c5_i32_69 = arith.constant 5 : i32
    %211 = arith.muli %arg1, %c5_i32_69 : i32
    %212 = arith.addi %211, %c3_i32 : i32
    %213 = arith.select %0, %210, %212 : i32
    %214 = vector.broadcast %213 : i32 to vector<8x1xi32>
    %215 = arith.cmpi slt, %214, %17 : vector<8x1xi32>
    %216 = arith.extui %215 : vector<8x1xi1> to vector<8x1xi32>
    %217 = arith.sitofp %216 : vector<8x1xi32> to vector<8x1xf32>
    %218 = arith.index_cast %207 : i32 to index
    %c0_70 = arith.constant 0 : index
    %c0_71 = arith.constant 0 : index
    %219 = vector.load %arg10[%218, %c0_70, %c0_71] : memref<5x8x128xf32, #tpu.memory_space<vmem>>, vector<1x8x128xf32>
    %220 = vector.shape_cast %219 : vector<1x8x128xf32> to vector<8x128xf32>
    %cst_72 = arith.constant dense<0.000000e+00> : vector<8x128xf32>
    %221 = tpu.matmul %198, %16, %cst_72 {dimension_numbers = #tpu.dot_dimension_numbers<[1], [0], [0], [1], [0, 0, 1, 1], [], []>} : vector<8x32xf32>, vector<32x128xf32>, vector<8x128xf32> -> vector<8x128xf32>
    %222 = arith.addf %220, %221 : vector<8x128xf32>
    %223 = vector.extract_strided_slice %222 {offsets = [0, 0], sizes = [8, 32], strides = [1, 1]} : vector<8x128xf32> to vector<8x32xf32>
    %224 = arith.negf %223 : vector<8x32xf32>
    %225 = math.exp %224 : vector<8x32xf32>
    %cst_73 = arith.constant 1.000000e+00 : f32
    %226 = vector.broadcast %cst_73 : f32 to vector<8x32xf32>
    %227 = arith.addf %226, %225 : vector<8x32xf32>
    %228 = arith.divf %226, %227 : vector<8x32xf32>
    %229 = vector.extract_strided_slice %222 {offsets = [0, 32], sizes = [8, 32], strides = [1, 1]} : vector<8x128xf32> to vector<8x32xf32>
    %230 = arith.negf %229 : vector<8x32xf32>
    %231 = math.exp %230 : vector<8x32xf32>
    %cst_74 = arith.constant 1.000000e+00 : f32
    %232 = vector.broadcast %cst_74 : f32 to vector<8x32xf32>
    %233 = arith.addf %232, %231 : vector<8x32xf32>
    %234 = arith.divf %232, %233 : vector<8x32xf32>
    %235 = vector.extract_strided_slice %222 {offsets = [0, 64], sizes = [8, 32], strides = [1, 1]} : vector<8x128xf32> to vector<8x32xf32>
    %236 = math.tanh %235 : vector<8x32xf32>
    %237 = vector.extract_strided_slice %222 {offsets = [0, 96], sizes = [8, 32], strides = [1, 1]} : vector<8x128xf32> to vector<8x32xf32>
    %238 = arith.negf %237 : vector<8x32xf32>
    %239 = math.exp %238 : vector<8x32xf32>
    %cst_75 = arith.constant 1.000000e+00 : f32
    %240 = vector.broadcast %cst_75 : f32 to vector<8x32xf32>
    %241 = arith.addf %240, %239 : vector<8x32xf32>
    %242 = arith.divf %240, %241 : vector<8x32xf32>
    %243 = arith.mulf %234, %205 : vector<8x32xf32>
    %244 = arith.mulf %228, %236 : vector<8x32xf32>
    %245 = arith.addf %243, %244 : vector<8x32xf32>
    %246 = math.tanh %245 : vector<8x32xf32>
    %247 = arith.mulf %242, %246 : vector<8x32xf32>
    %248 = vector.broadcast %217 : vector<8x1xf32> to vector<8x32xf32>
    %249 = arith.mulf %248, %247 : vector<8x32xf32>
    %c0_76 = arith.constant 0 : index
    %250 = arith.index_cast %207 : i32 to index
    %c0_77 = arith.constant 0 : index
    %c0_78 = arith.constant 0 : index
    %251 = vector.load %arg7[%c0_76, %250, %c0_77, %c0_78] : memref<1x5x8x32xf32, #tpu.memory_space<vmem>>, vector<1x1x8x32xf32>
    %252 = vector.shape_cast %251 : vector<1x1x8x32xf32> to vector<8x32xf32>
    %253 = vector.shape_cast %249 : vector<8x32xf32> to vector<1x1x8x32xf32>
    tpu.vector_store %arg7[%c0_76, %250, %c0_77, %c0_78], %253 {strides = array<i32>} : memref<1x5x8x32xf32, #tpu.memory_space<vmem>>, vector<1x1x8x32xf32>,
    %254 = vector.broadcast %217 : vector<8x1xf32> to vector<8x32xf32>
    %255 = arith.mulf %254, %247 : vector<8x32xf32>
    %cst_79 = arith.constant 1.000000e+00 : f32
    %256 = vector.broadcast %cst_79 : f32 to vector<8x1xf32>
    %257 = arith.subf %256, %217 : vector<8x1xf32>
    %258 = vector.broadcast %257 : vector<8x1xf32> to vector<8x32xf32>
    %259 = arith.mulf %258, %198 : vector<8x32xf32>
    %260 = arith.addf %255, %259 : vector<8x32xf32>
    %261 = vector.broadcast %217 : vector<8x1xf32> to vector<8x32xf32>
    %262 = arith.mulf %261, %245 : vector<8x32xf32>
    %cst_80 = arith.constant 1.000000e+00 : f32
    %263 = vector.broadcast %cst_80 : f32 to vector<8x1xf32>
    %264 = arith.subf %263, %217 : vector<8x1xf32>
    %265 = vector.broadcast %264 : vector<8x1xf32> to vector<8x32xf32>
    %266 = arith.mulf %265, %205 : vector<8x32xf32>
    %267 = arith.addf %262, %266 : vector<8x32xf32>
    %c4_i32_81 = arith.constant 4 : i32
    %c4_i32_82 = arith.constant 4 : i32
    %268 = arith.subi %c4_i32_82, %c4_i32_81 : i32
    %269 = arith.select %0, %268, %c4_i32_81 : i32
    %c5_i32_83 = arith.constant 5 : i32
    %270 = arith.muli %arg1, %c5_i32_83 : i32
    %271 = arith.addi %270, %c4_i32_81 : i32
    %c9_i32_84 = arith.constant 9 : i32
    %272 = arith.subi %c9_i32_84, %271 : i32
    %c5_i32_85 = arith.constant 5 : i32
    %273 = arith.muli %arg1, %c5_i32_85 : i32
    %274 = arith.addi %273, %c4_i32_81 : i32
    %275 = arith.select %0, %272, %274 : i32
    %276 = vector.broadcast %275 : i32 to vector<8x1xi32>
    %277 = arith.cmpi slt, %276, %17 : vector<8x1xi32>
    %278 = arith.extui %277 : vector<8x1xi1> to vector<8x1xi32>
    %279 = arith.sitofp %278 : vector<8x1xi32> to vector<8x1xf32>
    %280 = arith.index_cast %269 : i32 to index
    %c0_86 = arith.constant 0 : index
    %c0_87 = arith.constant 0 : index
    %281 = vector.load %arg10[%280, %c0_86, %c0_87] : memref<5x8x128xf32, #tpu.memory_space<vmem>>, vector<1x8x128xf32>
    %282 = vector.shape_cast %281 : vector<1x8x128xf32> to vector<8x128xf32>
    %cst_88 = arith.constant dense<0.000000e+00> : vector<8x128xf32>
    %283 = tpu.matmul %260, %16, %cst_88 {dimension_numbers = #tpu.dot_dimension_numbers<[1], [0], [0], [1], [0, 0, 1, 1], [], []>} : vector<8x32xf32>, vector<32x128xf32>, vector<8x128xf32> -> vector<8x128xf32>
    %284 = arith.addf %282, %283 : vector<8x128xf32>
    %285 = vector.extract_strided_slice %284 {offsets = [0, 0], sizes = [8, 32], strides = [1, 1]} : vector<8x128xf32> to vector<8x32xf32>
    %286 = arith.negf %285 : vector<8x32xf32>
    %287 = math.exp %286 : vector<8x32xf32>
    %cst_89 = arith.constant 1.000000e+00 : f32
    %288 = vector.broadcast %cst_89 : f32 to vector<8x32xf32>
    %289 = arith.addf %288, %287 : vector<8x32xf32>
    %290 = arith.divf %288, %289 : vector<8x32xf32>
    %291 = vector.extract_strided_slice %284 {offsets = [0, 32], sizes = [8, 32], strides = [1, 1]} : vector<8x128xf32> to vector<8x32xf32>
    %292 = arith.negf %291 : vector<8x32xf32>
    %293 = math.exp %292 : vector<8x32xf32>
    %cst_90 = arith.constant 1.000000e+00 : f32
    %294 = vector.broadcast %cst_90 : f32 to vector<8x32xf32>
    %295 = arith.addf %294, %293 : vector<8x32xf32>
    %296 = arith.divf %294, %295 : vector<8x32xf32>
    %297 = vector.extract_strided_slice %284 {offsets = [0, 64], sizes = [8, 32], strides = [1, 1]} : vector<8x128xf32> to vector<8x32xf32>
    %298 = math.tanh %297 : vector<8x32xf32>
    %299 = vector.extract_strided_slice %284 {offsets = [0, 96], sizes = [8, 32], strides = [1, 1]} : vector<8x128xf32> to vector<8x32xf32>
    %300 = arith.negf %299 : vector<8x32xf32>
    %301 = math.exp %300 : vector<8x32xf32>
    %cst_91 = arith.constant 1.000000e+00 : f32
    %302 = vector.broadcast %cst_91 : f32 to vector<8x32xf32>
    %303 = arith.addf %302, %301 : vector<8x32xf32>
    %304 = arith.divf %302, %303 : vector<8x32xf32>
    %305 = arith.mulf %296, %267 : vector<8x32xf32>
    %306 = arith.mulf %290, %298 : vector<8x32xf32>
    %307 = arith.addf %305, %306 : vector<8x32xf32>
    %308 = math.tanh %307 : vector<8x32xf32>
    %309 = arith.mulf %304, %308 : vector<8x32xf32>
    %310 = vector.broadcast %279 : vector<8x1xf32> to vector<8x32xf32>
    %311 = arith.mulf %310, %309 : vector<8x32xf32>
    %c0_92 = arith.constant 0 : index
    %312 = arith.index_cast %269 : i32 to index
    %c0_93 = arith.constant 0 : index
    %c0_94 = arith.constant 0 : index
    %313 = vector.load %arg7[%c0_92, %312, %c0_93, %c0_94] : memref<1x5x8x32xf32, #tpu.memory_space<vmem>>, vector<1x1x8x32xf32>
    %314 = vector.shape_cast %313 : vector<1x1x8x32xf32> to vector<8x32xf32>
    %315 = vector.shape_cast %311 : vector<8x32xf32> to vector<1x1x8x32xf32>
    tpu.vector_store %arg7[%c0_92, %312, %c0_93, %c0_94], %315 {strides = array<i32>} : memref<1x5x8x32xf32, #tpu.memory_space<vmem>>, vector<1x1x8x32xf32>,
    %316 = vector.broadcast %279 : vector<8x1xf32> to vector<8x32xf32>
    %317 = arith.mulf %316, %309 : vector<8x32xf32>
    %cst_95 = arith.constant 1.000000e+00 : f32
    %318 = vector.broadcast %cst_95 : f32 to vector<8x1xf32>
    %319 = arith.subf %318, %279 : vector<8x1xf32>
    %320 = vector.broadcast %319 : vector<8x1xf32> to vector<8x32xf32>
    %321 = arith.mulf %320, %260 : vector<8x32xf32>
    %322 = arith.addf %317, %321 : vector<8x32xf32>
    %323 = vector.broadcast %279 : vector<8x1xf32> to vector<8x32xf32>
    %324 = arith.mulf %323, %307 : vector<8x32xf32>
    %cst_96 = arith.constant 1.000000e+00 : f32
    %325 = vector.broadcast %cst_96 : f32 to vector<8x1xf32>
    %326 = arith.subf %325, %279 : vector<8x1xf32>
    %327 = vector.broadcast %326 : vector<8x1xf32> to vector<8x32xf32>
    %328 = arith.mulf %327, %267 : vector<8x32xf32>
    %329 = arith.addf %324, %328 : vector<8x32xf32>
    %c5_i32_97 = arith.constant 5 : i32
    %c0_98 = arith.constant 0 : index
    %c0_99 = arith.constant 0 : index
    %330 = vector.load %arg8[%c0_98, %c0_99] : memref<8x32xf32, #tpu.memory_space<vmem>>, vector<8x32xf32>
    tpu.vector_store %arg8[%c0_98, %c0_99], %322 {strides = array<i32>} : memref<8x32xf32, #tpu.memory_space<vmem>>, vector<8x32xf32>,
    %c0_100 = arith.constant 0 : index
    %c0_101 = arith.constant 0 : index
    %331 = vector.load %arg9[%c0_100, %c0_101] : memref<8x32xf32, #tpu.memory_space<vmem>>, vector<8x32xf32>
    tpu.vector_store %arg9[%c0_100, %c0_101], %329 {strides = array<i32>} : memref<8x32xf32, #tpu.memory_space<vmem>>, vector<8x32xf32>,
    return
  }
  func.func @transform_0(%arg0: i32, %arg1: i32) -> (i32, i32) {
    %c0_i32 = arith.constant 0 : i32
    %c0_i32_0 = arith.constant 0 : i32
    %c0_i32_1 = arith.constant 0 : i32
    return %c0_i32, %c0_i32_0 : i32, i32
  }
  func.func @transform_1(%arg0: i32, %arg1: i32) -> (i32, i32, i32) {
    %c0_i32 = arith.constant 0 : i32
    %0 = arith.cmpi eq, %arg0, %c0_i32 : i32
    %c1_i32 = arith.constant 1 : i32
    %1 = arith.subi %c1_i32, %arg1 : i32
    %2 = arith.select %0, %arg1, %1 : i32
    %c0_i32_0 = arith.constant 0 : i32
    %c0_i32_1 = arith.constant 0 : i32
    %c0_i32_2 = arith.constant 0 : i32
    return %2, %c0_i32_0, %c0_i32_1 : i32, i32, i32
  }
  func.func @transform_2(%arg0: i32, %arg1: i32) -> (i32, i32, i32, i32) {
    %c0_i32 = arith.constant 0 : i32
    %c0_i32_0 = arith.constant 0 : i32
    %c0_i32_1 = arith.constant 0 : i32
    %c0_i32_2 = arith.constant 0 : i32
    return %arg0, %c0_i32, %c0_i32_0, %c0_i32_1 : i32, i32, i32, i32
  }
  func.func @transform_3(%arg0: i32, %arg1: i32) -> (i32, i32, i32) {
    %c0_i32 = arith.constant 0 : i32
    %c0_i32_0 = arith.constant 0 : i32
    %c0_i32_1 = arith.constant 0 : i32
    return %arg0, %c0_i32, %c0_i32_0 : i32, i32, i32
  }
  func.func @transform_4(%arg0: i32, %arg1: i32) -> (i32, i32, i32) {
    %c0_i32 = arith.constant 0 : i32
    %c0_i32_0 = arith.constant 0 : i32
    %c0_i32_1 = arith.constant 0 : i32
    return %arg0, %c0_i32, %c0_i32_0 : i32, i32, i32
  }
  func.func @transform_5(%arg0: i32, %arg1: i32) -> (i32, i32, i32, i32) {
    %c0_i32 = arith.constant 0 : i32
    %0 = arith.cmpi eq, %arg0, %c0_i32 : i32
    %c1_i32 = arith.constant 1 : i32
    %1 = arith.subi %c1_i32, %arg1 : i32
    %2 = arith.select %0, %arg1, %1 : i32
    %c0_i32_0 = arith.constant 0 : i32
    %c0_i32_1 = arith.constant 0 : i32
    %c0_i32_2 = arith.constant 0 : i32
    return %arg0, %2, %c0_i32_0, %c0_i32_1 : i32, i32, i32, i32
  }
}

</mosaic_0001>

<llo_original>
// kernel: lstmbilm_forward.5
$region0: #{lstmbilm_forward.5}
  #allocation0 [shape = 'u32[]', space=smem, size = 0x4, offset = 0x4, fixed_abs, tag = 'smem constant byte address 0x4 - core index']
  #allocation1 [shape = 'u32[144,128]{1,0:T(1,128)}', space=vmem, size = 0x12000, scoped, tag = 'internal scratch']
  %s0 = inlined_call_operand.vmem [shape: f32[160,32], index: 0, kind: input, shape index: {}]
  %s1 = inlined_call_operand.vmem [shape: f32[32,16], index: 1, kind: input, shape index: {}]
  %s2 = inlined_call_operand.vmem [shape: f32[1,16], index: 2, kind: input, shape index: {}]
  %s3 = inlined_call_operand.vmem [shape: f32[160,16], index: 3, kind: output, shape index: {}]
  %s4 = sld [smem:[#allocation0]]
  $region22: #{lstmbilm_forward.5} parent=0
    _
  %s6 = ssub.s32 1, %s4
  %s7 = scalar_select 0, %s6, %s4
  // Predicated region
  $region2: #{lstmbilm_forward.5} parent=0 // pred_check
    _
  $region3: #{lstmbilm_forward.5} parent=0 // pred_check_branch
    %9 = sbr.rel (0) target = $region5
  $region4: #{lstmbilm_forward.5} parent=0 // pred_region
    _
  $region5: #{lstmbilm_forward.5} parent=0 // pred_fallthru
    _
  // Predicated region
  $region6: #{lstmbilm_forward.5} parent=0 // pred_check
    _
  $region7: #{lstmbilm_forward.5} parent=0 // pred_check_branch
    %11 = sbr.rel (0) target = $region9
  $region8: #{lstmbilm_forward.5} parent=0 // pred_region
    _
  $region9: #{lstmbilm_forward.5} parent=0 // pred_fallthru
    _
  // Predicated region
  $region10: #{lstmbilm_forward.5} parent=0 // pred_check
    _
  $region11: #{lstmbilm_forward.5} parent=0 // pred_check_branch
    %13 = sbr.rel (0) target = $region13
  $region12: #{lstmbilm_forward.5} parent=0 // pred_region
    _
  $region13: #{lstmbilm_forward.5} parent=0 // pred_fallthru
    _
  %v14 = vld [vmem:[%s0] sm:$0xff]
  %v15 = vld [vmem:[%s0 + $0x8] sm:$0xff]
  %v16 = vld [vmem:[%s0 + $0x10] sm:$0xff]
  %v17 = vld [vmem:[%s0 + $0x18] sm:$0xff]
  %v18 = vld [vmem:[%s0 + $0x20] sm:$0xff]
  %v19 = vld [vmem:[%s0 + $0x28] sm:$0xff]
  %v20 = vld [vmem:[%s0 + $0x30] sm:$0xff]
  %v21 = vld [vmem:[%s0 + $0x38] sm:$0xff]
  %v22 = vld [vmem:[%s0 + $0x40] sm:$0xff]
  %v23 = vld [vmem:[%s0 + $0x48] sm:$0xff]
  %v24 = vld [vmem:[%s0 + $0x50] sm:$0xff]
  %v25 = vld [vmem:[%s0 + $0x58] sm:$0xff]
  %v26 = vld [vmem:[%s0 + $0x60] sm:$0xff]
  %v27 = vld [vmem:[%s0 + $0x68] sm:$0xff]
  %v28 = vld [vmem:[%s0 + $0x70] sm:$0xff]
  %v29 = vld [vmem:[%s0 + $0x78] sm:$0xff]
  %v30 = vld [vmem:[%s0 + $0x80] sm:$0xff]
  %v31 = vld [vmem:[%s0 + $0x88] sm:$0xff]
  %v32 = vld [vmem:[%s0 + $0x90] sm:$0xff]
  %v33 = vld [vmem:[%s0 + $0x98] sm:$0xff]
  %v34 = vld [vmem:[%s1] sm:$0xff]
  %v35 = vld [vmem:[%s1 + $0x8] sm:$0xff]
  %v36 = vld [vmem:[%s1 + $0x10] sm:$0xff]
  %v37 = vld [vmem:[%s1 + $0x18] sm:$0xff]
  %v38 = vld [vmem:[%s2] sm:$0x1]
  %v40 = vlaneseq
  %v41 = vshrl.u32 %v40, 7
  %v42 = vsub.s32 0, %v41
  %v43 = vrot.slane %v38, %v42
  %vm45 = vcmask 261120
  %v47 = vsel %vm45, %v14, 0
  %v50 = vsel %vm45, %v15, 0
  %v53 = vsel %vm45, %v16, 0
  %v56 = vsel %vm45, %v17, 0
  %v59 = vsel %vm45, %v18, 0
  %v62 = vsel %vm45, %v19, 0
  %v65 = vsel %vm45, %v20, 0
  %v68 = vsel %vm45, %v21, 0
  %v71 = vsel %vm45, %v22, 0
  %v74 = vsel %vm45, %v23, 0
  %v77 = vsel %vm45, %v24, 0
  %v80 = vsel %vm45, %v25, 0
  %v83 = vsel %vm45, %v26, 0
  %v86 = vsel %vm45, %v27, 0
  %v89 = vsel %vm45, %v28, 0
  %v92 = vsel %vm45, %v29, 0
  %v95 = vsel %vm45, %v30, 0
  %v98 = vsel %vm45, %v31, 0
  %v101 = vsel %vm45, %v32, 0
  %v104 = vsel %vm45, %v33, 0
  %106 = vmatprep.subr.mxu0 0.0
  %107 = vmatpush1.msra.mxu0 0.0
  %108 = vmatprep.subr.mxu0 0.0
  %109 = vmatpush1.msra.mxu0 0.0
  %110 = vmatprep.subr.mxu0 0.0
  %111 = vmatpush1.msra.mxu0 0.0
  %112 = vmatprep.subr.mxu0 0.0
  %113 = vmatpush1.msra.mxu0 0.0
  %114 = vmatprep.subr.mxu0 0.0
  %115 = vmatpush1.msra.mxu0 0.0
  %116 = vmatprep.subr.mxu0 0.0
  %117 = vmatpush1.msra.mxu0 0.0
  %118 = vmatprep.subr.mxu0 0.0
  %119 = vmatpush1.msra.mxu0 0.0
  %120 = vmatprep.subr.mxu0 0.0
  %121 = vmatpush1.msra.mxu0 0.0
  %122 = vmatprep.subr.mxu0 0.0
  %123 = vmatpush1.msra.mxu0 0.0
  %124 = vmatprep.subr.mxu0 0.0
  %125 = vmatpush1.msra.mxu0 0.0
  %126 = vmatprep.subr.mxu0 0.0
  %127 = vmatpush1.msra.mxu0 0.0
  %128 = vmatprep.subr.mxu0 0.0
  %129 = vmatpush1.msra.mxu0 0.0
  %130 = vmatprep.subr.mxu0 0.0
  %131 = vmatpush1.msra.mxu0 %v37
  %132 = vmatprep.subr.mxu0 0.0
  %133 = vmatpush1.msra.mxu0 %v36
  %134 = vmatprep.subr.mxu0 0.0
  %135 = vmatpush1.msra.mxu0 %v35
  %136 = vmatprep.subr.mxu0 0.0
  %137 = vmatpush1.msra.mxu0 %v34
  %138 = vmatprep.subr.mxu0 0.0
  %139 = vmatpush2.msra.mxu0 0.0
  %140 = vmatprep.subr.mxu0 0.0
  %141 = vmatpush2.msra.mxu0 0.0
  %142 = vmatprep.subr.mxu0 0.0
  %143 = vmatpush2.msra.mxu0 0.0
  %144 = vmatprep.subr.mxu0 0.0
  %145 = vmatpush2.msra.mxu0 0.0
  %146 = vmatprep.subr.mxu0 0.0
  %147 = vmatpush2.msra.mxu0 0.0
  %148 = vmatprep.subr.mxu0 0.0
  %149 = vmatpush2.msra.mxu0 0.0
  %150 = vmatprep.subr.mxu0 0.0
  %151 = vmatpush2.msra.mxu0 0.0
  %152 = vmatprep.subr.mxu0 0.0
  %153 = vmatpush2.msra.mxu0 0.0
  %154 = vmatprep.subr.mxu0 0.0
  %155 = vmatpush2.msra.mxu0 0.0
  %156 = vmatprep.subr.mxu0 0.0
  %157 = vmatpush2.msra.mxu0 0.0
  %158 = vmatprep.subr.mxu0 0.0
  %159 = vmatpush2.msra.mxu0 0.0
  %160 = vmatprep.subr.mxu0 0.0
  %161 = vmatpush2.msra.mxu0 0.0
  %162 = vmatprep.subr.mxu0 0.0
  %163 = vmatpush2.msra.mxu0 0.0
  %164 = vmatprep.subr.mxu0 0.0
  %165 = vmatpush2.msra.mxu0 0.0
  %166 = vmatprep.subr.mxu0 0.0
  %167 = vmatpush2.msra.mxu0 0.0
  %168 = vmatprep.subr.mxu0 0.0
  %169 = vmatpush2.msra.mxu0 0.0
  %170 = vmatprep.mubr.f32.mxu0 0.0
  %171 = vmatmul.mubr.f32.gmra.mxu0 %v47
  %v172 = vpop.f32.mrf.mxu0
  %v173 = vadd.f32 %v43, %v172
  %v174 = vpop.f32.mrf.mxu0
  %175 = vmatprep.mubr.f32.mxu0 0.0
  %176 = vmatmul.mubr.f32.gmra.mxu0 %v50
  %v177 = vpop.f32.mrf.mxu0
  %v178 = vadd.f32 %v43, %v177
  %v179 = vpop.f32.mrf.mxu0
  %180 = vmatprep.mubr.f32.mxu0 0.0
  %181 = vmatmul.mubr.f32.gmra.mxu0 %v53
  %v182 = vpop.f32.mrf.mxu0
  %v183 = vadd.f32 %v43, %v182
  %v184 = vpop.f32.mrf.mxu0
  %185 = vmatprep.mubr.f32.mxu0 0.0
  %186 = vmatmul.mubr.f32.gmra.mxu0 %v56
  %v187 = vpop.f32.mrf.mxu0
  %v188 = vadd.f32 %v43, %v187
  %v189 = vpop.f32.mrf.mxu0
  %190 = vmatprep.mubr.f32.mxu0 0.0
  %191 = vmatmul.mubr.f32.gmra.mxu0 %v59
  %v192 = vpop.f32.mrf.mxu0
  %v193 = vadd.f32 %v43, %v192
  %v194 = vpop.f32.mrf.mxu0
  %195 = vmatprep.mubr.f32.mxu0 0.0
  %196 = vmatmul.mubr.f32.gmra.mxu0 %v62
  %v197 = vpop.f32.mrf.mxu0
  %v198 = vadd.f32 %v43, %v197
  %v199 = vpop.f32.mrf.mxu0
  %200 = vmatprep.mubr.f32.mxu0 0.0
  %201 = vmatmul.mubr.f32.gmra.mxu0 %v65
  %v202 = vpop.f32.mrf.mxu0
  %v203 = vadd.f32 %v43, %v202
  %v204 = vpop.f32.mrf.mxu0
  %205 = vmatprep.mubr.f32.mxu0 0.0
  %206 = vmatmul.mubr.f32.gmra.mxu0 %v68
  %v207 = vpop.f32.mrf.mxu0
  %v208 = vadd.f32 %v43, %v207
  %v209 = vpop.f32.mrf.mxu0
  %210 = vmatprep.mubr.f32.mxu0 0.0
  %211 = vmatmul.mubr.f32.gmra.mxu0 %v71
  %v212 = vpop.f32.mrf.mxu0
  %v213 = vadd.f32 %v43, %v212
  %v214 = vpop.f32.mrf.mxu0
  %215 = vmatprep.mubr.f32.mxu0 0.0
  %216 = vmatmul.mubr.f32.gmra.mxu0 %v74
  %v217 = vpop.f32.mrf.mxu0
  %v218 = vadd.f32 %v43, %v217
  %v219 = vpop.f32.mrf.mxu0
  %220 = vmatprep.mubr.f32.mxu0 0.0
  %221 = vmatmul.mubr.f32.gmra.mxu0 %v77
  %v222 = vpop.f32.mrf.mxu0
  %v223 = vadd.f32 %v43, %v222
  %v224 = vpop.f32.mrf.mxu0
  %225 = vmatprep.mubr.f32.mxu0 0.0
  %226 = vmatmul.mubr.f32.gmra.mxu0 %v80
  %v227 = vpop.f32.mrf.mxu0
  %v228 = vadd.f32 %v43, %v227
  %v229 = vpop.f32.mrf.mxu0
  %230 = vmatprep.mubr.f32.mxu0 0.0
  %231 = vmatmul.mubr.f32.gmra.mxu0 %v83
  %v232 = vpop.f32.mrf.mxu0
  %v233 = vadd.f32 %v43, %v232
  %v234 = vpop.f32.mrf.mxu0
  %235 = vmatprep.mubr.f32.mxu0 0.0
  %236 = vmatmul.mubr.f32.gmra.mxu0 %v86
  %v237 = vpop.f32.mrf.mxu0
  %v238 = vadd.f32 %v43, %v237
  %v239 = vpop.f32.mrf.mxu0
  %240 = vmatprep.mubr.f32.mxu0 0.0
  %241 = vmatmul.mubr.f32.gmra.mxu0 %v89
  %v242 = vpop.f32.mrf.mxu0
  %v243 = vadd.f32 %v43, %v242
  %v244 = vpop.f32.mrf.mxu0
  %245 = vmatprep.mubr.f32.mxu0 0.0
  %246 = vmatmul.mubr.f32.gmra.mxu0 %v92
  %v247 = vpop.f32.mrf.mxu0
  %v248 = vadd.f32 %v43, %v247
  %v249 = vpop.f32.mrf.mxu0
  %250 = vmatprep.mubr.f32.mxu0 0.0
  %251 = vmatmul.mubr.f32.gmra.mxu0 %v95
  %v252 = vpop.f32.mrf.mxu0
  %v253 = vadd.f32 %v43, %v252
  %v254 = vpop.f32.mrf.mxu0
  %255 = vmatprep.mubr.f32.mxu0 0.0
  %256 = vmatmul.mubr.f32.gmra.mxu0 %v98
  %v257 = vpop.f32.mrf.mxu0
  %v258 = vadd.f32 %v43, %v257
  %v259 = vpop.f32.mrf.mxu0
  %260 = vmatprep.mubr.f32.mxu0 0.0
  %261 = vmatmul.mubr.f32.gmra.mxu0 %v101
  %v262 = vpop.f32.mrf.mxu0
  %v263 = vadd.f32 %v43, %v262
  %v264 = vpop.f32.mrf.mxu0
  %265 = vmatprep.mubr.f32.mxu0 0.0
  %266 = vmatmul.mubr.f32.gmra.mxu0 %v104
  %v267 = vpop.f32.mrf.mxu0
  %v268 = vadd.f32 %v43, %v267
  %v269 = vpop.f32.mrf.mxu0
  %270 = vdwg.mxu0
  %vm271 = vcmask 130048
  %272 = vst.msk [vmem:[%s3] sm:$0xff] %vm271, %v173
  %273 = vst.msk [vmem:[%s3 + $0x8] sm:$0xff] %vm271, %v178
  %274 = vst.msk [vmem:[%s3 + $0x10] sm:$0xff] %vm271, %v183
  %275 = vst.msk [vmem:[%s3 + $0x18] sm:$0xff] %vm271, %v188
  %276 = vst.msk [vmem:[%s3 + $0x20] sm:$0xff] %vm271, %v193
  %277 = vst.msk [vmem:[%s3 + $0x28] sm:$0xff] %vm271, %v198
  %278 = vst.msk [vmem:[%s3 + $0x30] sm:$0xff] %vm271, %v203
  %279 = vst.msk [vmem:[%s3 + $0x38] sm:$0xff] %vm271, %v208
  %280 = vst.msk [vmem:[%s3 + $0x40] sm:$0xff] %vm271, %v213
  %281 = vst.msk [vmem:[%s3 + $0x48] sm:$0xff] %vm271, %v218
  %282 = vst.msk [vmem:[%s3 + $0x50] sm:$0xff] %vm271, %v223
  %283 = vst.msk [vmem:[%s3 + $0x58] sm:$0xff] %vm271, %v228
  %284 = vst.msk [vmem:[%s3 + $0x60] sm:$0xff] %vm271, %v233
  %285 = vst.msk [vmem:[%s3 + $0x68] sm:$0xff] %vm271, %v238
  %286 = vst.msk [vmem:[%s3 + $0x70] sm:$0xff] %vm271, %v243
  %287 = vst.msk [vmem:[%s3 + $0x78] sm:$0xff] %vm271, %v248
  %288 = vst.msk [vmem:[%s3 + $0x80] sm:$0xff] %vm271, %v253
  %289 = vst.msk [vmem:[%s3 + $0x88] sm:$0xff] %vm271, %v258
  %290 = vst.msk [vmem:[%s3 + $0x90] sm:$0xff] %vm271, %v263
  %291 = vst.msk [vmem:[%s3 + $0x98] sm:$0xff] %vm271, %v268
  // Predicated region
  $region14: #{lstmbilm_forward.5} parent=0 // pred_check
    _
  $region15: #{lstmbilm_forward.5} parent=0 // pred_check_branch
    %293 = sbr.rel (0) target = $region17
  $region16: #{lstmbilm_forward.5} parent=0 // pred_region
    _
  $region17: #{lstmbilm_forward.5} parent=0 // pred_fallthru
    _
  // Predicated region
  $region18: #{lstmbilm_forward.5} parent=0 // pred_check
    _
  $region19: #{lstmbilm_forward.5} parent=0 // pred_check_branch
    %295 = sbr.rel (0) target = $region21
  $region20: #{lstmbilm_forward.5} parent=0 // pred_region
    _
  $region21: #{lstmbilm_forward.5} parent=0 // pred_fallthru
    _

// kernel: lstmbilm_forward.4
$region0: #{lstmbilm_forward.4}
  #allocation0 [shape = 'u32[]', space=smem, size = 0x4, offset = 0x4, fixed_abs, tag = 'smem constant byte address 0x4 - core index']
  #allocation1 [shape = 'u32[144,128]{1,0:T(1,128)}', space=vmem, size = 0x12000, scoped, tag = 'internal scratch']
  #allocation2 [shape = 'f32[8,32]{1,0:T(8,128)}', space=vmem, size = 0x1000, scoped, tag = 'scratch operand']
  #allocation3 [shape = 'f32[8,32]{1,0:T(8,128)}', space=vmem, size = 0x1000, scoped, tag = 'scratch operand']
  #allocation4 [shape = 'f32[5,8,128]{2,1,0:T(8,128)}', space=vmem, size = 0x5000, scoped, tag = 'scratch operand']
  %s0 = inlined_call_operand.vmem [shape: s32[8,1], index: 0, kind: input, shape index: {}]
  %s1 = inlined_call_operand.vmem [shape: f32[2,10,8,32], index: 1, kind: input, shape index: {}, may-alias: {1,2}]
  %s2 = inlined_call_operand.vmem [shape: f32[2,10,8,32], index: 2, kind: input, shape index: {}, may-alias: {1,2}]
  %s3 = inlined_call_operand.vmem [shape: f32[2,2,32,128], index: 3, kind: input, shape index: {}]
  %s4 = inlined_call_operand.vmem [shape: f32[2,32,128], index: 4, kind: input, shape index: {}]
  %s5 = inlined_call_operand.vmem [shape: f32[2,1,128], index: 5, kind: input, shape index: {}]
  %s6 = inlined_call_operand.vmem [shape: f32[2,10,8,32], index: 6, kind: output, shape index: {}]
  %s7 = sld [smem:[#allocation0]]
  $region61: #{lstmbilm_forward.4} parent=0
    _
  %s9 = ssub.s32 1, %s7
  %s10 = scalar_select 0, %s9, %s7
  loop: start=0, step=1, limit=6
  $region2: #{lstmbilm_forward.4} parent=0 // loop_pre_header
    _
  $region3: #{lstmbilm_forward.4} parent=0 // loop_header
    %s12 = sphi 0, %s16
    %p13 = scmp.ge.s32.totalorder %s12, 6
    %s19 = sphi 0, %s31
    %s20 = sphi 0, %s27
    %s21 = sphi 0, %s19
    %s22 = sphi 0, %s20
    %s23 = sphi 0, %s21
    %s24 = sphi 0, %s22
    %s32 = sphi 0, %s32
    %s34 = sphi 0, %s32
    %s35 = sphi 0, %s34
    %s49 = sphi 0, %s35
    %s61 = sphi 0, %s63
    %s64 = sphi 0, %s61
    %s65 = sphi 0, %s64
    %s81 = sphi 0, %s65
    %s93 = sphi 0, %s95
    %s96 = sphi 0, %s93
    %s97 = sphi 0, %s96
    %s113 = sphi 0, %s97
    %s119 = sphi 0, %s121
    %s122 = sphi 0, %s119
    %s123 = sphi 0, %s122
    %s139 = sphi 0, %s123
    %s145 = sphi 0, %s147
    %s148 = sphi 0, %s145
    %s149 = sphi 0, %s148
    %s165 = sphi 0, %s149
    %s171 = sphi 0, %s173
    %s174 = sphi 0, %s171
    %s175 = sphi 0, %s174
    %s191 = sphi 0, %s175
    %s205 = sphi 0, %s207
    %s208 = sphi 0, %s205
    %s209 = sphi 0, %s208
    %s225 = sphi 0, %s209
  $region4: #{lstmbilm_forward.4} parent=0 // loop_header_branch
    %15 = sbr.rel (%p13) target = $region8
  $region5: #{lstmbilm_forward.4} parent=0 // loop_body
    %s17 = ssub.s32 %s12, 1
    %s18 = ssub.s32 %s12, 2
    %s25 = sadd.s32 1, %s20
    %p26 = scmp.ge.s32.totalorder %s25, 2
    %s27 = scalar_select %p26, 0, %s25
    %s28 = sadd.s32 1, %s19
    %s29 = scalar_select %p26, %s28, %s19
    %p30 = scmp.ge.s32.totalorder %s29, 2
    %s31 = scalar_select %p30, 0, %s29
    %s33 = sadd.s32 %s32, 1
    %p36 = scmp.eq.s32.totalorder %s12, 3
    %p37 = scmp.ne.s32.totalorder %s32, %s34
    %p38 = scmp.eq.s32.totalorder %s12, 0
    %p39 = por %p37, %p38
    %p40 = scmp.ne.s32.totalorder %s32, %s34
    %p41 = scmp.eq.s32.totalorder %s17, 3
    %p42 = por %p40, %p41
    %p43 = scmp.ne.s32.totalorder %s34, %s35
    %p44 = scmp.eq.s32.totalorder %s17, 0
    %p45 = por %p43, %p44
    %p46 = scmp.ne.s32.totalorder %s34, %s35
    %p47 = scmp.eq.s32.totalorder %s18, 3
    %p48 = por %p46, %p47
    %p50 = scmp.ne.s32.totalorder %s35, %s49
    %p51 = scmp.eq.s32.totalorder %s18, 0
    %p52 = por %p50, %p51
    %p53 = scmp.eq.s32.totalorder %s19, 0
    %s54 = ssub.s32 1, %s20
    %s55 = scalar_select %p53, %s20, %s54
    %p56 = scmp.eq.s32.totalorder %s31, 0
    %s57 = ssub.s32 1, %s27
    %s58 = scalar_select %p56, %s27, %s57
    %s59 = ssub.s32 %s55, %s58
    %p60 = scmp.eq.s32.totalorder %s59, 0
    %s62 = sadd.s32 %s61, 1
    %s63 = scalar_select %p60, %s61, %s62
    %p66 = pneg %p60
    %p67 = scmp.eq.s32.totalorder %s12, 3
    %p68 = por %p66, %p67
    %p69 = scmp.ne.s32.totalorder %s61, %s64
    %p70 = scmp.eq.s32.totalorder %s12, 0
    %p71 = por %p69, %p70
    %p72 = scmp.ne.s32.totalorder %s61, %s64
    %p73 = scmp.eq.s32.totalorder %s17, 3
    %p74 = por %p72, %p73
    %p75 = scmp.ne.s32.totalorder %s64, %s65
    %p76 = scmp.eq.s32.totalorder %s17, 0
    %p77 = por %p75, %p76
    %p78 = scmp.ne.s32.totalorder %s64, %s65
    %p79 = scmp.eq.s32.totalorder %s18, 3
    %p80 = por %p78, %p79
    %p82 = scmp.ne.s32.totalorder %s65, %s81
    %p83 = scmp.eq.s32.totalorder %s18, 0
    %p84 = por %p82, %p83
    %p85 = scmp.eq.s32.totalorder %s19, 0
    %s86 = ssub.s32 1, %s20
    %s87 = scalar_select %p85, %s20, %s86
    %p88 = scmp.eq.s32.totalorder %s31, 0
    %s89 = ssub.s32 1, %s27
    %s90 = scalar_select %p88, %s27, %s89
    %s91 = ssub.s32 %s87, %s90
    %p92 = scmp.eq.s32.totalorder %s91, 0
    %s94 = sadd.s32 %s93, 1
    %s95 = scalar_select %p92, %s93, %s94
    %p98 = pneg %p92
    %p99 = scmp.eq.s32.totalorder %s12, 3
    %p100 = por %p98, %p99
    %p101 = scmp.ne.s32.totalorder %s93, %s96
    %p102 = scmp.eq.s32.totalorder %s12, 0
    %p103 = por %p101, %p102
    %p104 = scmp.ne.s32.totalorder %s93, %s96
    %p105 = scmp.eq.s32.totalorder %s17, 3
    %p106 = por %p104, %p105
    %p107 = scmp.ne.s32.totalorder %s96, %s97
    %p108 = scmp.eq.s32.totalorder %s17, 0
    %p109 = por %p107, %p108
    %p110 = scmp.ne.s32.totalorder %s96, %s97
    %p111 = scmp.eq.s32.totalorder %s18, 3
    %p112 = por %p110, %p111
    %p114 = scmp.ne.s32.totalorder %s97, %s113
    %p115 = scmp.eq.s32.totalorder %s18, 0
    %p116 = por %p114, %p115
    %s117 = ssub.s32 %s19, %s31
    %p118 = scmp.eq.s32.totalorder %s117, 0
    %s120 = sadd.s32 %s119, 1
    %s121 = scalar_select %p118, %s119, %s120
    %p124 = pneg %p118
    %p125 = scmp.eq.s32.totalorder %s12, 3
    %p126 = por %p124, %p125
    %p127 = scmp.ne.s32.totalorder %s119, %s122
    %p128 = scmp.eq.s32.totalorder %s12, 0
    %p129 = por %p127, %p128
    %p130 = scmp.ne.s32.totalorder %s119, %s122
    %p131 = scmp.eq.s32.totalorder %s17, 3
    %p132 = por %p130, %p131
    %p133 = scmp.ne.s32.totalorder %s122, %s123
    %p134 = scmp.eq.s32.totalorder %s17, 0
    %p135 = por %p133, %p134
    %p136 = scmp.ne.s32.totalorder %s122, %s123
    %p137 = scmp.eq.s32.totalorder %s18, 3
    %p138 = por %p136, %p137
    %p140 = scmp.ne.s32.totalorder %s123, %s139
    %p141 = scmp.eq.s32.totalorder %s18, 0
    %p142 = por %p140, %p141
    %s143 = ssub.s32 %s19, %s31
    %p144 = scmp.eq.s32.totalorder %s143, 0
    %s146 = sadd.s32 %s145, 1
    %s147 = scalar_select %p144, %s145, %s146
    %p150 = pneg %p144
    %p151 = scmp.eq.s32.totalorder %s12, 3
    %p152 = por %p150, %p151
    %p153 = scmp.ne.s32.totalorder %s145, %s148
    %p154 = scmp.eq.s32.totalorder %s12, 0
    %p155 = por %p153, %p154
    %p156 = scmp.ne.s32.totalorder %s145, %s148
    %p157 = scmp.eq.s32.totalorder %s17, 3
    %p158 = por %p156, %p157
    %p159 = scmp.ne.s32.totalorder %s148, %s149
    %p160 = scmp.eq.s32.totalorder %s17, 0
    %p161 = por %p159, %p160
    %p162 = scmp.ne.s32.totalorder %s148, %s149
    %p163 = scmp.eq.s32.totalorder %s18, 3
    %p164 = por %p162, %p163
    %p166 = scmp.ne.s32.totalorder %s149, %s165
    %p167 = scmp.eq.s32.totalorder %s18, 0
    %p168 = por %p166, %p167
    %s169 = ssub.s32 %s19, %s31
    %p170 = scmp.eq.s32.totalorder %s169, 0
    %s172 = sadd.s32 %s171, 1
    %s173 = scalar_select %p170, %s171, %s172
    %p176 = pneg %p170
    %p177 = scmp.eq.s32.totalorder %s12, 3
    %p178 = por %p176, %p177
    %p179 = scmp.ne.s32.totalorder %s171, %s174
    %p180 = scmp.eq.s32.totalorder %s12, 0
    %p181 = por %p179, %p180
    %p182 = scmp.ne.s32.totalorder %s171, %s174
    %p183 = scmp.eq.s32.totalorder %s17, 3
    %p184 = por %p182, %p183
    %p185 = scmp.ne.s32.totalorder %s174, %s175
    %p186 = scmp.eq.s32.totalorder %s17, 0
    %p187 = por %p185, %p186
    %p188 = scmp.ne.s32.totalorder %s174, %s175
    %p189 = scmp.eq.s32.totalorder %s18, 3
    %p190 = por %p188, %p189
    %p192 = scmp.ne.s32.totalorder %s175, %s191
    %p193 = scmp.eq.s32.totalorder %s18, 0
    %p194 = por %p192, %p193
    %p195 = scmp.eq.s32.totalorder %s19, 0
    %s196 = ssub.s32 1, %s20
    %s197 = scalar_select %p195, %s20, %s196
    %p198 = scmp.eq.s32.totalorder %s31, 0
    %s199 = ssub.s32 1, %s27
    %s200 = scalar_select %p198, %s27, %s199
    %s201 = ssub.s32 %s19, %s31
    %s202 = ssub.s32 %s197, %s200
    %s203 = sor.u32 %s201, %s202
    %p204 = scmp.eq.s32.totalorder %s203, 0
    %s206 = sadd.s32 %s205, 1
    %s207 = scalar_select %p204, %s205, %s206
    %p210 = pneg %p204
    %p211 = scmp.eq.s32.totalorder %s12, 3
    %p212 = por %p210, %p211
    %p213 = scmp.ne.s32.totalorder %s205, %s208
    %p214 = scmp.eq.s32.totalorder %s12, 0
    %p215 = por %p213, %p214
    %p216 = scmp.ne.s32.totalorder %s205, %s208
    %p217 = scmp.eq.s32.totalorder %s17, 3
    %p218 = por %p216, %p217
    %p219 = scmp.ne.s32.totalorder %s208, %s209
    %p220 = scmp.eq.s32.totalorder %s17, 0
    %p221 = por %p219, %p220
    %p222 = scmp.ne.s32.totalorder %s208, %s209
    %p223 = scmp.eq.s32.totalorder %s18, 3
    %p224 = por %p222, %p223
    %p226 = scmp.ne.s32.totalorder %s209, %s225
    %p227 = scmp.eq.s32.totalorder %s18, 0
    %p228 = por %p226, %p227
    %p229 = scmp.le.s32.totalorder 1, %s12
    %p230 = scmp.lt.s32.totalorder %s12, 5
    %p231 = pnand %p229, %p230
    %p232 = pneg %p231
    // Predicated region
    $region9: #{lstmbilm_forward.4} parent=5 // pred_check
      _
    $region10: #{lstmbilm_forward.4} parent=5 // pred_check_branch
      %234 = sbr.rel (%p231) target = $region12
    $region11: #{lstmbilm_forward.4} parent=5 // pred_region
      %s235 = ssub.s32 %s12, 1
      // Predicated region
      $region13: #{lstmbilm_forward.4} parent=11 // pred_check
        %p236 = pneg %p45
      $region14: #{lstmbilm_forward.4} parent=11 // pred_check_branch
        %238 = sbr.rel (%p236) target = $region16
      $region15: #{lstmbilm_forward.4} parent=11 // pred_region
        _
      $region16: #{lstmbilm_forward.4} parent=11 // pred_fallthru
        _
    $region12: #{lstmbilm_forward.4} parent=5 // pred_fallthru
      _
    %p239 = scmp.lt.s32.totalorder %s12, 4
    // Predicated region
    $region17: #{lstmbilm_forward.4} parent=5 // pred_check
      %p240 = pneg %p239
    $region18: #{lstmbilm_forward.4} parent=5 // pred_check_branch
      %242 = sbr.rel (%p240) target = $region20
    $region19: #{lstmbilm_forward.4} parent=5 // pred_region
      // Predicated region
      $region21: #{lstmbilm_forward.4} parent=19 // pred_check
        %p243 = pneg %p71
      $region22: #{lstmbilm_forward.4} parent=19 // pred_check_branch
        %245 = sbr.rel (%p243) target = $region24
      $region23: #{lstmbilm_forward.4} parent=19 // pred_region
        %p246 = scmp.eq.s32.totalorder %s19, 0
        %s247 = ssub.s32 1, %s20
        %s248 = scalar_select %p246, %s20, %s247
        %s249 = smul.u32 5, %s248
        %p250 = scmp.lt.s32.totalorder %s249, 9
        %s251 = scalar_select %p250, %s249, 9
        %s252 = smul.addr %s251, 8
        %s253 = scalar_lea.vmem %s1, %s252
        %p254 = scmp.eq.s32.totalorder %s19, 0
        %s255 = ssub.s32 1, %s20
        %s256 = scalar_select %p254, %s20, %s255
        %s257 = smul.u32 5, %s256
      $region24: #{lstmbilm_forward.4} parent=19 // pred_fallthru
        _
      // Predicated region
      $region25: #{lstmbilm_forward.4} parent=19 // pred_check
        %p258 = pneg %p103
      $region26: #{lstmbilm_forward.4} parent=19 // pred_check_branch
        %260 = sbr.rel (%p258) target = $region28
      $region27: #{lstmbilm_forward.4} parent=19 // pred_region
        %p261 = scmp.eq.s32.totalorder %s19, 0
        %s262 = ssub.s32 1, %s20
        %s263 = scalar_select %p261, %s20, %s262
        %s264 = smul.u32 5, %s263
        %p265 = scmp.lt.s32.totalorder %s264, 9
        %s266 = scalar_select %p265, %s264, 9
        %s267 = sadd.s32 %s266, 10
        %s268 = smul.addr %s267, 8
        %s269 = scalar_lea.vmem %s2, %s268
        %p270 = scmp.eq.s32.totalorder %s19, 0
        %s271 = ssub.s32 1, %s20
        %s272 = scalar_select %p270, %s20, %s271
        %s273 = smul.u32 5, %s272
      $region28: #{lstmbilm_forward.4} parent=19 // pred_fallthru
        _
      // Predicated region
      $region29: #{lstmbilm_forward.4} parent=19 // pred_check
        %p274 = pneg %p129
      $region30: #{lstmbilm_forward.4} parent=19 // pred_check_branch
        %276 = sbr.rel (%p274) target = $region32
      $region31: #{lstmbilm_forward.4} parent=19 // pred_region
        %p277 = scmp.lt.s32.totalorder %s19, 1
        %s278 = scalar_select %p277, %s19, 1
        %s279 = smul.addr %s278, 8
        %s280 = smul.addr %s279, 8
        %s281 = scalar_lea.vmem %s3, %s280
      $region32: #{lstmbilm_forward.4} parent=19 // pred_fallthru
        _
      // Predicated region
      $region33: #{lstmbilm_forward.4} parent=19 // pred_check
        %p282 = pneg %p155
      $region34: #{lstmbilm_forward.4} parent=19 // pred_check_branch
        %284 = sbr.rel (%p282) target = $region36
      $region35: #{lstmbilm_forward.4} parent=19 // pred_region
        %p285 = scmp.lt.s32.totalorder %s19, 1
        %s286 = scalar_select %p285, %s19, 1
        %s287 = smul.addr %s286, 4
        %s288 = smul.addr %s287, 8
        %s289 = scalar_lea.vmem %s4, %s288
      $region36: #{lstmbilm_forward.4} parent=19 // pred_fallthru
        _
      // Predicated region
      $region37: #{lstmbilm_forward.4} parent=19 // pred_check
        %p290 = pneg %p181
      $region38: #{lstmbilm_forward.4} parent=19 // pred_check_branch
        %292 = sbr.rel (%p290) target = $region40
      $region39: #{lstmbilm_forward.4} parent=19 // pred_region
        %p293 = scmp.lt.s32.totalorder %s19, 1
        %s294 = scalar_select %p293, %s19, 1
        %s295 = scalar_lea.vmem %s5, %s294
      $region40: #{lstmbilm_forward.4} parent=19 // pred_fallthru
        _
    $region20: #{lstmbilm_forward.4} parent=5 // pred_fallthru
      _
    %p296 = scmp.le.s32.totalorder 1, %s12
    %p297 = scmp.lt.s32.totalorder %s12, 5
    %p298 = pnand %p296, %p297
    %p299 = pneg %p298
    // Predicated region
    $region41: #{lstmbilm_forward.4} parent=5 // pred_check
      _
    $region42: #{lstmbilm_forward.4} parent=5 // pred_check_branch
      %301 = sbr.rel (%p298) target = $region44
    $region43: #{lstmbilm_forward.4} parent=5 // pred_region
      %s302 = ssub.s32 %s12, 1
      %p303 = pneg %p45
      %p304 = pneg %p42
      %p305 = scmp.eq.s32.totalorder %s21, 0
      %s306 = ssub.s32 1, %s22
      %s307 = scalar_select %p305, %s22, %s306
      %s308 = smul.u32 5, %s307
      %p309 = scmp.lt.s32.totalorder %s308, 9
      %s310 = scalar_select %p309, %s308, 9
      %s311 = smul.addr %s310, 8
      %s312 = scalar_lea.vmem %s1, %s311
      %p313 = pneg %p77
      %p314 = pneg %p74
      %p315 = scmp.eq.s32.totalorder %s21, 0
      %s316 = ssub.s32 1, %s22
      %s317 = scalar_select %p315, %s22, %s316
      %s318 = smul.u32 5, %s317
      %p319 = scmp.lt.s32.totalorder %s318, 9
      %s320 = scalar_select %p319, %s318, 9
      %s321 = sadd.s32 %s320, 10
      %s322 = smul.addr %s321, 8
      %s323 = scalar_lea.vmem %s2, %s322
      %p324 = pneg %p109
      %p325 = pneg %p106
      %p326 = scmp.lt.s32.totalorder %s21, 1
      %s327 = scalar_select %p326, %s21, 1
      %s328 = smul.addr %s327, 8
      %s329 = smul.addr %s328, 8
      %s330 = scalar_lea.vmem %s3, %s329
      %p331 = pneg %p135
      %p332 = pneg %p132
      %p333 = scmp.lt.s32.totalorder %s21, 1
      %s334 = scalar_select %p333, %s21, 1
      %s335 = smul.addr %s334, 4
      %s336 = smul.addr %s335, 8
      %s337 = scalar_lea.vmem %s4, %s336
      %p338 = pneg %p161
      %p339 = pneg %p158
      %p340 = scmp.lt.s32.totalorder %s21, 1
      %s341 = scalar_select %p340, %s21, 1
      %s342 = scalar_lea.vmem %s5, %s341
      %p343 = pneg %p187
      %p344 = pneg %p184
      %p345 = pneg %p221
      %p346 = pneg %p218
      %p347 = scmp.eq.s32.totalorder %s21, 0
      %s348 = ssub.s32 1, %s22
      %s349 = scalar_select %p347, %s22, %s348
      %s350 = smul.u32 5, %s349
      %p351 = scmp.lt.s32.totalorder %s21, 1
      %s352 = scalar_select %p351, %s21, 1
      %p353 = scmp.lt.s32.totalorder %s350, 9
      %s354 = scalar_select %p353, %s350, 9
      %s355 = smul.addr %s352, 10
      %s356 = sadd.s32 %s354, %s355
      %s357 = smul.addr %s356, 8
      %s358 = scalar_lea.vmem %s6, %s357
      %p359 = scmp.eq.s32.totalorder %s21, 0
      %s360 = ssub.s32 1, %s22
      %s361 = scalar_select %p359, %s22, %s360
      %s362 = smul.u32 5, %s361
      %p363 = scmp.lt.s32.totalorder %s362, 9
      %s364 = scalar_select %p363, %s362, 9
      %s365 = smul.addr %s364, 8
      %s366 = scalar_lea.vmem %s1, %s365
      %p367 = scmp.eq.s32.totalorder %s21, 0
      %s368 = ssub.s32 1, %s22
      %s369 = scalar_select %p367, %s22, %s368
      %s370 = smul.u32 5, %s369
      %p371 = scmp.eq.s32.totalorder %s21, 0
      %s372 = ssub.s32 1, %s22
      %s373 = scalar_select %p371, %s22, %s372
      %s374 = smul.u32 5, %s373
      %p375 = scmp.lt.s32.totalorder %s374, 9
      %s376 = scalar_select %p375, %s374, 9
      %s377 = sadd.s32 %s376, 10
      %s378 = smul.addr %s377, 8
      %s379 = scalar_lea.vmem %s2, %s378
      %p380 = scmp.eq.s32.totalorder %s21, 0
      %s381 = ssub.s32 1, %s22
      %s382 = scalar_select %p380, %s22, %s381
      %s383 = smul.u32 5, %s382
      %p384 = scmp.lt.s32.totalorder %s21, 1
      %s385 = scalar_select %p384, %s21, 1
      %s386 = smul.addr %s385, 8
      %s387 = smul.addr %s386, 8
      %s388 = scalar_lea.vmem %s3, %s387
      %p389 = scmp.lt.s32.totalorder %s21, 1
      %s390 = scalar_select %p389, %s21, 1
      %s391 = smul.addr %s390, 4
      %s392 = smul.addr %s391, 8
      %s393 = scalar_lea.vmem %s4, %s392
      %p394 = scmp.lt.s32.totalorder %s21, 1
      %s395 = scalar_select %p394, %s21, 1
      %s396 = scalar_lea.vmem %s5, %s395
      %p397 = scmp.eq.s32.totalorder %s21, 0
      %s398 = ssub.s32 1, %s22
      %s399 = scalar_select %p397, %s22, %s398
      %s400 = smul.u32 5, %s399
      %p401 = scmp.lt.s32.totalorder %s21, 1
      %s402 = scalar_select %p401, %s21, 1
      %p403 = scmp.lt.s32.totalorder %s400, 9
      %s404 = scalar_select %p403, %s400, 9
      %s405 = smul.addr %s402, 10
      %s406 = sadd.s32 %s404, %s405
      %s407 = smul.addr %s406, 8
      %s408 = scalar_lea.vmem %s6, %s407
      %p409 = scmp.eq.s32.totalorder %s21, 0
      %s410 = ssub.s32 1, %s22
      %s411 = scalar_select %p409, %s22, %s410
      %s412 = smul.u32 5, %s411
      %p413 = scmp.eq.s32.totalorder %s21, 1
      %p414 = scmp.eq.s32.totalorder %s22, 0
      // Predicated region
      $region45: #{lstmbilm_forward.4} parent=43 // pred_check
        %p415 = pneg %p414
      $region46: #{lstmbilm_forward.4} parent=43 // pred_check_branch
        %417 = sbr.rel (%p415) target = $region48
      $region47: #{lstmbilm_forward.4} parent=43 // pred_region
        %vm418 = vcmask 261120
        %419 = vst.msk [vmem:[#allocation2] sm:$0xff] %vm418, 0.0
        %420 = vst.msk [vmem:[#allocation3] sm:$0xff] %vm418, 0.0
      $region48: #{lstmbilm_forward.4} parent=43 // pred_fallthru
        _
      %v421 = vld [vmem:[%s396] sm:$0x1]
      %v422 = vld [vmem:[%s366] sm:$0xff]
      %v423 = vld [vmem:[%s366 + $0x8] sm:$0xff]
      %v424 = vld [vmem:[%s366 + $0x10] sm:$0xff]
      %v425 = vld [vmem:[%s366 + $0x18] sm:$0xff]
      %v426 = vld [vmem:[%s366 + $0x20] sm:$0xff]
      %v427 = vld [vmem:[%s388] sm:$0xff]
      %v428 = vld [vmem:[%s388 + $0x8] sm:$0xff]
      %v429 = vld [vmem:[%s388 + $0x10] sm:$0xff]
      %v430 = vld [vmem:[%s388 + $0x18] sm:$0xff]
      %vm431 = vcmask 261120
      %v433 = vsel %vm431, %v422, 0
      %v436 = vsel %vm431, %v423, 0
      %v439 = vsel %vm431, %v424, 0
      %v442 = vsel %vm431, %v425, 0
      %v445 = vsel %vm431, %v426, 0
      %447 = vmatprep.subr.mxu0 0.0
      %448 = vmatpush1.msra.mxu0 0.0
      %449 = vmatprep.subr.mxu0 0.0
      %450 = vmatpush1.msra.mxu0 0.0
      %451 = vmatprep.subr.mxu0 0.0
      %452 = vmatpush1.msra.mxu0 0.0
      %453 = vmatprep.subr.mxu0 0.0
      %454 = vmatpush1.msra.mxu0 0.0
      %455 = vmatprep.subr.mxu0 0.0
      %456 = vmatpush1.msra.mxu0 0.0
      %457 = vmatprep.subr.mxu0 0.0
      %458 = vmatpush1.msra.mxu0 0.0
      %459 = vmatprep.subr.mxu0 0.0
      %460 = vmatpush1.msra.mxu0 0.0
      %461 = vmatprep.subr.mxu0 0.0
      %462 = vmatpush1.msra.mxu0 0.0
      %463 = vmatprep.subr.mxu0 0.0
      %464 = vmatpush1.msra.mxu0 0.0
      %465 = vmatprep.subr.mxu0 0.0
      %466 = vmatpush1.msra.mxu0 0.0
      %467 = vmatprep.subr.mxu0 0.0
      %468 = vmatpush1.msra.mxu0 0.0
      %469 = vmatprep.subr.mxu0 0.0
      %470 = vmatpush1.msra.mxu0 0.0
      %471 = vmatprep.subr.mxu0 0.0
      %472 = vmatpush1.msra.mxu0 %v430
      %473 = vmatprep.subr.mxu0 0.0
      %474 = vmatpush1.msra.mxu0 %v429
      %475 = vmatprep.subr.mxu0 0.0
      %476 = vmatpush1.msra.mxu0 %v428
      %477 = vmatprep.subr.mxu0 0.0
      %478 = vmatpush1.msra.mxu0 %v427
      %479 = vmatprep.subr.mxu0 0.0
      %480 = vmatpush2.msra.mxu0 0.0
      %481 = vmatprep.subr.mxu0 0.0
      %482 = vmatpush2.msra.mxu0 0.0
      %483 = vmatprep.subr.mxu0 0.0
      %484 = vmatpush2.msra.mxu0 0.0
      %485 = vmatprep.subr.mxu0 0.0
      %486 = vmatpush2.msra.mxu0 0.0
      %487 = vmatprep.subr.mxu0 0.0
      %488 = vmatpush2.msra.mxu0 0.0
      %489 = vmatprep.subr.mxu0 0.0
      %490 = vmatpush2.msra.mxu0 0.0
      %491 = vmatprep.subr.mxu0 0.0
      %492 = vmatpush2.msra.mxu0 0.0
      %493 = vmatprep.subr.mxu0 0.0
      %494 = vmatpush2.msra.mxu0 0.0
      %495 = vmatprep.subr.mxu0 0.0
      %496 = vmatpush2.msra.mxu0 0.0
      %497 = vmatprep.subr.mxu0 0.0
      %498 = vmatpush2.msra.mxu0 0.0
      %499 = vmatprep.subr.mxu0 0.0
      %500 = vmatpush2.msra.mxu0 0.0
      %501 = vmatprep.subr.mxu0 0.0
      %502 = vmatpush2.msra.mxu0 0.0
      %503 = vmatprep.subr.mxu0 0.0
      %504 = vmatpush2.msra.mxu0 0.0
      %505 = vmatprep.subr.mxu0 0.0
      %506 = vmatpush2.msra.mxu0 0.0
      %507 = vmatprep.subr.mxu0 0.0
      %508 = vmatpush2.msra.mxu0 0.0
      %509 = vmatprep.subr.mxu0 0.0
      %510 = vmatpush2.msra.mxu0 0.0
      %511 = vmatprep.mubr.f32.mxu0 0.0
      %512 = vmatmul.mubr.f32.gmra.mxu0 %v433
      %v513 = vpop.f32.mrf.mxu0
      %v514 = vadd.f32 0.0, %v513
      %v515 = vpop.f32.mrf.mxu0
      %516 = vmatprep.mubr.f32.mxu0 0.0
      %517 = vmatmul.mubr.f32.gmra.mxu0 %v436
      %v518 = vpop.f32.mrf.mxu0
      %v519 = vadd.f32 0.0, %v518
      %v520 = vpop.f32.mrf.mxu0
      %521 = vmatprep.mubr.f32.mxu0 0.0
      %522 = vmatmul.mubr.f32.gmra.mxu0 %v439
      %v523 = vpop.f32.mrf.mxu0
      %v524 = vadd.f32 0.0, %v523
      %v525 = vpop.f32.mrf.mxu0
      %526 = vmatprep.mubr.f32.mxu0 0.0
      %527 = vmatmul.mubr.f32.gmra.mxu0 %v442
      %v528 = vpop.f32.mrf.mxu0
      %v529 = vadd.f32 0.0, %v528
      %v530 = vpop.f32.mrf.mxu0
      %531 = vmatprep.mubr.f32.mxu0 0.0
      %532 = vmatmul.mubr.f32.gmra.mxu0 %v445
      %v533 = vpop.f32.mrf.mxu0
      %v534 = vadd.f32 0.0, %v533
      %v535 = vpop.f32.mrf.mxu0
      %536 = vdwg.mxu0
      %v538 = vlaneseq
      %v539 = vshrl.u32 %v538, 7
      %v540 = vsub.s32 0, %v539
      %v541 = vrot.slane %v421, %v540
      %v543 = vadd.f32 %v541, %v514
      %v544 = vadd.f32 %v541, %v519
      %v545 = vadd.f32 %v541, %v524
      %v546 = vadd.f32 %v541, %v529
      %v547 = vadd.f32 %v541, %v534
      %v548 = vld [vmem:[%s379] sm:$0xff]
      %v549 = vld [vmem:[%s379 + $0x8] sm:$0xff]
      %v550 = vld [vmem:[%s379 + $0x10] sm:$0xff]
      %v551 = vld [vmem:[%s379 + $0x18] sm:$0xff]
      %v552 = vld [vmem:[%s379 + $0x20] sm:$0xff]
      %s553 = scalar_lea.vmem %s388, 32
      %v554 = vld [vmem:[%s553] sm:$0xff]
      %v555 = vld [vmem:[%s553 + $0x8] sm:$0xff]
      %v556 = vld [vmem:[%s553 + $0x10] sm:$0xff]
      %v557 = vld [vmem:[%s553 + $0x18] sm:$0xff]
      %v559 = vsel %vm431, %v548, 0
      %v562 = vsel %vm431, %v549, 0
      %v565 = vsel %vm431, %v550, 0
      %v568 = vsel %vm431, %v551, 0
      %v571 = vsel %vm431, %v552, 0
      %573 = vmatprep.subr.mxu0 0.0
      %574 = vmatpush1.msra.mxu0 0.0
      %575 = vmatprep.subr.mxu0 0.0
      %576 = vmatpush1.msra.mxu0 0.0
      %577 = vmatprep.subr.mxu0 0.0
      %578 = vmatpush1.msra.mxu0 0.0
      %579 = vmatprep.subr.mxu0 0.0
      %580 = vmatpush1.msra.mxu0 0.0
      %581 = vmatprep.subr.mxu0 0.0
      %582 = vmatpush1.msra.mxu0 0.0
      %583 = vmatprep.subr.mxu0 0.0
      %584 = vmatpush1.msra.mxu0 0.0
      %585 = vmatprep.subr.mxu0 0.0
      %586 = vmatpush1.msra.mxu0 0.0
      %587 = vmatprep.subr.mxu0 0.0
      %588 = vmatpush1.msra.mxu0 0.0
      %589 = vmatprep.subr.mxu0 0.0
      %590 = vmatpush1.msra.mxu0 0.0
      %591 = vmatprep.subr.mxu0 0.0
      %592 = vmatpush1.msra.mxu0 0.0
      %593 = vmatprep.subr.mxu0 0.0
      %594 = vmatpush1.msra.mxu0 0.0
      %595 = vmatprep.subr.mxu0 0.0
      %596 = vmatpush1.msra.mxu0 0.0
      %597 = vmatprep.subr.mxu0 0.0
      %598 = vmatpush1.msra.mxu0 %v557
      %599 = vmatprep.subr.mxu0 0.0
      %600 = vmatpush1.msra.mxu0 %v556
      %601 = vmatprep.subr.mxu0 0.0
      %602 = vmatpush1.msra.mxu0 %v555
      %603 = vmatprep.subr.mxu0 0.0
      %604 = vmatpush1.msra.mxu0 %v554
      %605 = vmatprep.subr.mxu0 0.0
      %606 = vmatpush2.msra.mxu0 0.0
      %607 = vmatprep.subr.mxu0 0.0
      %608 = vmatpush2.msra.mxu0 0.0
      %609 = vmatprep.subr.mxu0 0.0
      %610 = vmatpush2.msra.mxu0 0.0
      %611 = vmatprep.subr.mxu0 0.0
      %612 = vmatpush2.msra.mxu0 0.0
      %613 = vmatprep.subr.mxu0 0.0
      %614 = vmatpush2.msra.mxu0 0.0
      %615 = vmatprep.subr.mxu0 0.0
      %616 = vmatpush2.msra.mxu0 0.0
      %617 = vmatprep.subr.mxu0 0.0
      %618 = vmatpush2.msra.mxu0 0.0
      %619 = vmatprep.subr.mxu0 0.0
      %620 = vmatpush2.msra.mxu0 0.0
      %621 = vmatprep.subr.mxu0 0.0
      %622 = vmatpush2.msra.mxu0 0.0
      %623 = vmatprep.subr.mxu0 0.0
      %624 = vmatpush2.msra.mxu0 0.0
      %625 = vmatprep.subr.mxu0 0.0
      %626 = vmatpush2.msra.mxu0 0.0
      %627 = vmatprep.subr.mxu0 0.0
      %628 = vmatpush2.msra.mxu0 0.0
      %629 = vmatprep.subr.mxu0 0.0
      %630 = vmatpush2.msra.mxu0 0.0
      %631 = vmatprep.subr.mxu0 0.0
      %632 = vmatpush2.msra.mxu0 0.0
      %633 = vmatprep.subr.mxu0 0.0
      %634 = vmatpush2.msra.mxu0 0.0
      %635 = vmatprep.subr.mxu0 0.0
      %636 = vmatpush2.msra.mxu0 0.0
      %637 = vmatprep.mubr.f32.mxu0 0.0
      %638 = vmatmul.mubr.f32.gmra.mxu0 %v559
      %v639 = vpop.f32.mrf.mxu0
      %v640 = vadd.f32 0.0, %v639
      %v641 = vpop.f32.mrf.mxu0
      %642 = vmatprep.mubr.f32.mxu0 0.0
      %643 = vmatmul.mubr.f32.gmra.mxu0 %v562
      %v644 = vpop.f32.mrf.mxu0
      %v645 = vadd.f32 0.0, %v644
      %v646 = vpop.f32.mrf.mxu0
      %647 = vmatprep.mubr.f32.mxu0 0.0
      %648 = vmatmul.mubr.f32.gmra.mxu0 %v565
      %v649 = vpop.f32.mrf.mxu0
      %v650 = vadd.f32 0.0, %v649
      %v651 = vpop.f32.mrf.mxu0
      %652 = vmatprep.mubr.f32.mxu0 0.0
      %653 = vmatmul.mubr.f32.gmra.mxu0 %v568
      %v654 = vpop.f32.mrf.mxu0
      %v655 = vadd.f32 0.0, %v654
      %v656 = vpop.f32.mrf.mxu0
      %657 = vmatprep.mubr.f32.mxu0 0.0
      %658 = vmatmul.mubr.f32.gmra.mxu0 %v571
      %v659 = vpop.f32.mrf.mxu0
      %v660 = vadd.f32 0.0, %v659
      %v661 = vpop.f32.mrf.mxu0
      %662 = vdwg.mxu0
      %v663 = vadd.f32 %v543, %v640
      %v664 = vadd.f32 %v544, %v645
      %v665 = vadd.f32 %v545, %v650
      %v666 = vadd.f32 %v546, %v655
      %v667 = vadd.f32 %v547, %v660
      %668 = vst [vmem:[#allocation4] sm:$0xff] %v663
      %669 = vst [vmem:[#allocation4 + $0x8] sm:$0xff] %v664
      %670 = vst [vmem:[#allocation4 + $0x10] sm:$0xff] %v665
      %671 = vst [vmem:[#allocation4 + $0x18] sm:$0xff] %v666
      %672 = vst [vmem:[#allocation4 + $0x20] sm:$0xff] %v667
      %v673 = vld [vmem:[%s393] sm:$0xff]
      %v674 = vld [vmem:[%s393 + $0x8] sm:$0xff]
      %v675 = vld [vmem:[%s393 + $0x10] sm:$0xff]
      %v676 = vld [vmem:[%s393 + $0x18] sm:$0xff]
      %v677 = vld [vmem:[%s0] sm:$0xff]
      %v678 = vld [vmem:[#allocation2] sm:$0xff]
      %v679 = vld [vmem:[#allocation3] sm:$0xff]
      %s680 = scalar_select %p413, 4, 0
      %s681 = smul.u32 %s22, 5
      %s682 = ssub.s32 9, %s681
      %s683 = scalar_select %p413, %s682, %s681
      %v684 = vstv %s683
      %vm685 = vcmp.lt.s32.totalorder %v684, %v677
      %v686 = vsel %vm685, 1, 0
      %v687 = vcvt.s32.f32 %v686
      %s688 = smul.u32 %s680, 8
      %s689 = scalar_lea.vmem [#allocation4], %s688
      %v690 = vld [vmem:[%s689] sm:$0xff]
      %v692 = vsel %vm431, %v678, 0
      %694 = vmatprep.subr.mxu0 0.0
      %695 = vmatpush1.msra.mxu0 0.0
      %696 = vmatprep.subr.mxu0 0.0
      %697 = vmatpush1.msra.mxu0 0.0
      %698 = vmatprep.subr.mxu0 0.0
      %699 = vmatpush1.msra.mxu0 0.0
      %700 = vmatprep.subr.mxu0 0.0
      %701 = vmatpush1.msra.mxu0 0.0
      %702 = vmatprep.subr.mxu0 0.0
      %703 = vmatpush1.msra.mxu0 0.0
      %704 = vmatprep.subr.mxu0 0.0
      %705 = vmatpush1.msra.mxu0 0.0
      %706 = vmatprep.subr.mxu0 0.0
      %707 = vmatpush1.msra.mxu0 0.0
      %708 = vmatprep.subr.mxu0 0.0
      %709 = vmatpush1.msra.mxu0 0.0
      %710 = vmatprep.subr.mxu0 0.0
      %711 = vmatpush1.msra.mxu0 0.0
      %712 = vmatprep.subr.mxu0 0.0
      %713 = vmatpush1.msra.mxu0 0.0
      %714 = vmatprep.subr.mxu0 0.0
      %715 = vmatpush1.msra.mxu0 0.0
      %716 = vmatprep.subr.mxu0 0.0
      %717 = vmatpush1.msra.mxu0 0.0
      %718 = vmatprep.subr.mxu0 0.0
      %719 = vmatpush1.msra.mxu0 %v676
      %720 = vmatprep.subr.mxu0 0.0
      %721 = vmatpush1.msra.mxu0 %v675
      %722 = vmatprep.subr.mxu0 0.0
      %723 = vmatpush1.msra.mxu0 %v674
      %724 = vmatprep.subr.mxu0 0.0
      %725 = vmatpush1.msra.mxu0 %v673
      %726 = vmatprep.subr.mxu0 0.0
      %727 = vmatpush2.msra.mxu0 0.0
      %728 = vmatprep.subr.mxu0 0.0
      %729 = vmatpush2.msra.mxu0 0.0
      %730 = vmatprep.subr.mxu0 0.0
      %731 = vmatpush2.msra.mxu0 0.0
      %732 = vmatprep.subr.mxu0 0.0
      %733 = vmatpush2.msra.mxu0 0.0
      %734 = vmatprep.subr.mxu0 0.0
      %735 = vmatpush2.msra.mxu0 0.0
      %736 = vmatprep.subr.mxu0 0.0
      %737 = vmatpush2.msra.mxu0 0.0
      %738 = vmatprep.subr.mxu0 0.0
      %739 = vmatpush2.msra.mxu0 0.0
      %740 = vmatprep.subr.mxu0 0.0
      %741 = vmatpush2.msra.mxu0 0.0
      %742 = vmatprep.subr.mxu0 0.0
      %743 = vmatpush2.msra.mxu0 0.0
      %744 = vmatprep.subr.mxu0 0.0
      %745 = vmatpush2.msra.mxu0 0.0
      %746 = vmatprep.subr.mxu0 0.0
      %747 = vmatpush2.msra.mxu0 0.0
      %748 = vmatprep.subr.mxu0 0.0
      %749 = vmatpush2.msra.mxu0 0.0
      %750 = vmatprep.subr.mxu0 0.0
      %751 = vmatpush2.msra.mxu0 0.0
      %752 = vmatprep.subr.mxu0 0.0
      %753 = vmatpush2.msra.mxu0 0.0
      %754 = vmatprep.subr.mxu0 0.0
      %755 = vmatpush2.msra.mxu0 0.0
      %756 = vmatprep.subr.mxu0 0.0
      %757 = vmatpush2.msra.mxu0 0.0
      %758 = vmatprep.mubr.f32.mxu0 0.0
      %759 = vmatmul.mubr.f32.gmra.mxu0 %v692
      %v760 = vpop.f32.mrf.mxu0
      %v761 = vadd.f32 0.0, %v760
      %v762 = vpop.f32.mrf.mxu0
      %763 = vdwg.mxu0
      %v764 = vadd.f32 %v690, %v761
      %v765 = vxor.u32 %v764, 2147483648
      %v766 = vmul.f32 %v765, 1.442695
      %v767 = vpow.pop %v766
      %v768 = vadd.f32 %v767, 1.0
      %v769 = vrcp.pop %v768
      %v770 = vmul.f32 1.0, %v769
      %v771 = vtanh.pop %v764
      %773 = vrot.lane.b32.xlu0 %v679, 32
      %v774 = vpop.permute.xlu0 %773
      %v776 = vmul.f32 %v770, %v774
      %778 = vrot.lane.b32.xlu0 %v771, 64
      %v779 = vpop.permute.xlu0 %778
      %v781 = vmul.f32 %v770, %v779
      %783 = vrot.lane.b32.xlu0 %v781, 32
      %v784 = vpop.permute.xlu0 %783
      %v786 = vadd.f32 %v776, %v784
      %v787 = vtanh.pop %v786
      %789 = vrot.lane.b32.xlu0 %v787, 64
      %v790 = vpop.permute.xlu0 %789
      %v792 = vmul.f32 %v770, %v790
      %794 = vset.pattern.permute.xlu0 0
      %795 = vperm.xlu0 %794, %v687
      %v796 = vpop.permute.xlu0 %795
      %v798 = vmul.f32 %v796, %v792
      %800 = vrot.lane.b32.xlu0 %v798, 32
      %v801 = vpop.permute.xlu0 %800
      %s803 = scalar_lea.vmem %s408, %s688
      %804 = vst.msk [vmem:[%s803] sm:$0xff] %vm431, %v801
      %v805 = vsub.f32 1.0, %v687
      %807 = vset.pattern.permute.xlu0 0
      %808 = vperm.xlu0 %807, %v805
      %v809 = vpop.permute.xlu0 %808
      %v811 = vmul.f32 %v809, %v678
      %813 = vrot.lane.b32.xlu0 %v811, 96
      %v814 = vpop.permute.xlu0 %813
      %v816 = vadd.f32 %v798, %v814
      %v817 = vmul.f32 %v796, %v786
      %v818 = vmul.f32 %v809, %v679
      %820 = vrot.lane.b32.xlu0 %v818, 32
      %v821 = vpop.permute.xlu0 %820
      %v823 = vadd.f32 %v817, %v821
      %s824 = scalar_select %p413, 3, 1
      %s825 = ssub.s32 8, %s681
      %s826 = sadd.s32 %s681, 1
      %s827 = scalar_select %p413, %s825, %s826
      %v828 = vstv %s827
      %vm829 = vcmp.lt.s32.totalorder %v828, %v677
      %v830 = vsel %vm829, 1, 0
      %v831 = vcvt.s32.f32 %v830
      %s832 = smul.u32 %s824, 8
      %s833 = scalar_lea.vmem [#allocation4], %s832
      %v834 = vld [vmem:[%s833] sm:$0xff]
      %836 = vrot.lane.b32.xlu0 %v816, 32
      %v837 = vpop.permute.xlu0 %836
      %v838 = vsel %vm431, %v837, 0
      %840 = vmatprep.subr.mxu0 0.0
      %841 = vmatpush1.msra.mxu0 0.0
      %842 = vmatprep.subr.mxu0 0.0
      %843 = vmatpush1.msra.mxu0 0.0
      %844 = vmatprep.subr.mxu0 0.0
      %845 = vmatpush1.msra.mxu0 0.0
      %846 = vmatprep.subr.mxu0 0.0
      %847 = vmatpush1.msra.mxu0 0.0
      %848 = vmatprep.subr.mxu0 0.0
      %849 = vmatpush1.msra.mxu0 0.0
      %850 = vmatprep.subr.mxu0 0.0
      %851 = vmatpush1.msra.mxu0 0.0
      %852 = vmatprep.subr.mxu0 0.0
      %853 = vmatpush1.msra.mxu0 0.0
      %854 = vmatprep.subr.mxu0 0.0
      %855 = vmatpush1.msra.mxu0 0.0
      %856 = vmatprep.subr.mxu0 0.0
      %857 = vmatpush1.msra.mxu0 0.0
      %858 = vmatprep.subr.mxu0 0.0
      %859 = vmatpush1.msra.mxu0 0.0
      %860 = vmatprep.subr.mxu0 0.0
      %861 = vmatpush1.msra.mxu0 0.0
      %862 = vmatprep.subr.mxu0 0.0
      %863 = vmatpush1.msra.mxu0 0.0
      %864 = vmatprep.subr.mxu0 0.0
      %865 = vmatpush1.msra.mxu0 %v676
      %866 = vmatprep.subr.mxu0 0.0
      %867 = vmatpush1.msra.mxu0 %v675
      %868 = vmatprep.subr.mxu0 0.0
      %869 = vmatpush1.msra.mxu0 %v674
      %870 = vmatprep.subr.mxu0 0.0
      %871 = vmatpush1.msra.mxu0 %v673
      %872 = vmatprep.subr.mxu0 0.0
      %873 = vmatpush2.msra.mxu0 0.0
      %874 = vmatprep.subr.mxu0 0.0
      %875 = vmatpush2.msra.mxu0 0.0
      %876 = vmatprep.subr.mxu0 0.0
      %877 = vmatpush2.msra.mxu0 0.0
      %878 = vmatprep.subr.mxu0 0.0
      %879 = vmatpush2.msra.mxu0 0.0
      %880 = vmatprep.subr.mxu0 0.0
      %881 = vmatpush2.msra.mxu0 0.0
      %882 = vmatprep.subr.mxu0 0.0
      %883 = vmatpush2.msra.mxu0 0.0
      %884 = vmatprep.subr.mxu0 0.0
      %885 = vmatpush2.msra.mxu0 0.0
      %886 = vmatprep.subr.mxu0 0.0
      %887 = vmatpush2.msra.mxu0 0.0
      %888 = vmatprep.subr.mxu0 0.0
      %889 = vmatpush2.msra.mxu0 0.0
      %890 = vmatprep.subr.mxu0 0.0
      %891 = vmatpush2.msra.mxu0 0.0
      %892 = vmatprep.subr.mxu0 0.0
      %893 = vmatpush2.msra.mxu0 0.0
      %894 = vmatprep.subr.mxu0 0.0
      %895 = vmatpush2.msra.mxu0 0.0
      %896 = vmatprep.subr.mxu0 0.0
      %897 = vmatpush2.msra.mxu0 0.0
      %898 = vmatprep.subr.mxu0 0.0
      %899 = vmatpush2.msra.mxu0 0.0
      %900 = vmatprep.subr.mxu0 0.0
      %901 = vmatpush2.msra.mxu0 0.0
      %902 = vmatprep.subr.mxu0 0.0
      %903 = vmatpush2.msra.mxu0 0.0
      %904 = vmatprep.mubr.f32.mxu0 0.0
      %905 = vmatmul.mubr.f32.gmra.mxu0 %v838
      %v906 = vpop.f32.mrf.mxu0
      %v907 = vadd.f32 0.0, %v906
      %v908 = vpop.f32.mrf.mxu0
      %909 = vdwg.mxu0
      %v910 = vadd.f32 %v834, %v907
      %v911 = vxor.u32 %v910, 2147483648
      %v912 = vmul.f32 %v911, 1.442695
      %v913 = vpow.pop %v912
      %v914 = vadd.f32 %v913, 1.0
      %v915 = vrcp.pop %v914
      %v916 = vmul.f32 1.0, %v915
      %v917 = vtanh.pop %v910
      %v918 = vmul.f32 %v916, %v823
      %920 = vrot.lane.b32.xlu0 %v917, 64
      %v921 = vpop.permute.xlu0 %920
      %v923 = vmul.f32 %v916, %v921
      %925 = vrot.lane.b32.xlu0 %v923, 32
      %v926 = vpop.permute.xlu0 %925
      %v928 = vadd.f32 %v918, %v926
      %v929 = vtanh.pop %v928
      %931 = vrot.lane.b32.xlu0 %v929, 64
      %v932 = vpop.permute.xlu0 %931
      %v934 = vmul.f32 %v916, %v932
      %936 = vset.pattern.permute.xlu0 0
      %937 = vperm.xlu0 %936, %v831
      %v938 = vpop.permute.xlu0 %937
      %v940 = vmul.f32 %v938, %v934
      %942 = vrot.lane.b32.xlu0 %v940, 32
      %v943 = vpop.permute.xlu0 %942
      %s945 = scalar_lea.vmem %s408, %s832
      %946 = vst.msk [vmem:[%s945] sm:$0xff] %vm431, %v943
      %v947 = vsub.f32 1.0, %v831
      %949 = vset.pattern.permute.xlu0 0
      %950 = vperm.xlu0 %949, %v947
      %v951 = vpop.permute.xlu0 %950
      %v953 = vmul.f32 %v951, %v816
      %v954 = vadd.f32 %v940, %v953
      %v955 = vmul.f32 %v938, %v928
      %v956 = vmul.f32 %v951, %v823
      %v957 = vadd.f32 %v955, %v956
      %s958 = ssub.s32 7, %s681
      %s959 = sadd.s32 %s681, 2
      %s960 = scalar_select %p413, %s958, %s959
      %v961 = vstv %s960
      %vm962 = vcmp.lt.s32.totalorder %v961, %v677
      %v963 = vsel %vm962, 1, 0
      %v964 = vcvt.s32.f32 %v963
      %s965 = scalar_lea.vmem [#allocation4], 16
      %v966 = vld [vmem:[%s965] sm:$0xff]
      %968 = vrot.lane.b32.xlu0 %v954, 32
      %v969 = vpop.permute.xlu0 %968
      %v970 = vsel %vm431, %v969, 0
      %972 = vmatprep.subr.mxu0 0.0
      %973 = vmatpush1.msra.mxu0 0.0
      %974 = vmatprep.subr.mxu0 0.0
      %975 = vmatpush1.msra.mxu0 0.0
      %976 = vmatprep.subr.mxu0 0.0
      %977 = vmatpush1.msra.mxu0 0.0
      %978 = vmatprep.subr.mxu0 0.0
      %979 = vmatpush1.msra.mxu0 0.0
      %980 = vmatprep.subr.mxu0 0.0
      %981 = vmatpush1.msra.mxu0 0.0
      %982 = vmatprep.subr.mxu0 0.0
      %983 = vmatpush1.msra.mxu0 0.0
      %984 = vmatprep.subr.mxu0 0.0
      %985 = vmatpush1.msra.mxu0 0.0
      %986 = vmatprep.subr.mxu0 0.0
      %987 = vmatpush1.msra.mxu0 0.0
      %988 = vmatprep.subr.mxu0 0.0
      %989 = vmatpush1.msra.mxu0 0.0
      %990 = vmatprep.subr.mxu0 0.0
      %991 = vmatpush1.msra.mxu0 0.0
      %992 = vmatprep.subr.mxu0 0.0
      %993 = vmatpush1.msra.mxu0 0.0
      %994 = vmatprep.subr.mxu0 0.0
      %995 = vmatpush1.msra.mxu0 0.0
      %996 = vmatprep.subr.mxu0 0.0
      %997 = vmatpush1.msra.mxu0 %v676
      %998 = vmatprep.subr.mxu0 0.0
      %999 = vmatpush1.msra.mxu0 %v675
      %1000 = vmatprep.subr.mxu0 0.0
      %1001 = vmatpush1.msra.mxu0 %v674
      %1002 = vmatprep.subr.mxu0 0.0
      %1003 = vmatpush1.msra.mxu0 %v673
      %1004 = vmatprep.subr.mxu0 0.0
      %1005 = vmatpush2.msra.mxu0 0.0
      %1006 = vmatprep.subr.mxu0 0.0
      %1007 = vmatpush2.msra.mxu0 0.0
      %1008 = vmatprep.subr.mxu0 0.0
      %1009 = vmatpush2.msra.mxu0 0.0
      %1010 = vmatprep.subr.mxu0 0.0
      %1011 = vmatpush2.msra.mxu0 0.0
      %1012 = vmatprep.subr.mxu0 0.0
      %1013 = vmatpush2.msra.mxu0 0.0
      %1014 = vmatprep.subr.mxu0 0.0
      %1015 = vmatpush2.msra.mxu0 0.0
      %1016 = vmatprep.subr.mxu0 0.0
      %1017 = vmatpush2.msra.mxu0 0.0
      %1018 = vmatprep.subr.mxu0 0.0
      %1019 = vmatpush2.msra.mxu0 0.0
      %1020 = vmatprep.subr.mxu0 0.0
      %1021 = vmatpush2.msra.mxu0 0.0
      %1022 = vmatprep.subr.mxu0 0.0
      %1023 = vmatpush2.msra.mxu0 0.0
      %1024 = vmatprep.subr.mxu0 0.0
      %1025 = vmatpush2.msra.mxu0 0.0
      %1026 = vmatprep.subr.mxu0 0.0
      %1027 = vmatpush2.msra.mxu0 0.0
      %1028 = vmatprep.subr.mxu0 0.0
      %1029 = vmatpush2.msra.mxu0 0.0
      %1030 = vmatprep.subr.mxu0 0.0
      %1031 = vmatpush2.msra.mxu0 0.0
      %1032 = vmatprep.subr.mxu0 0.0
      %1033 = vmatpush2.msra.mxu0 0.0
      %1034 = vmatprep.subr.mxu0 0.0
      %1035 = vmatpush2.msra.mxu0 0.0
      %1036 = vmatprep.mubr.f32.mxu0 0.0
      %1037 = vmatmul.mubr.f32.gmra.mxu0 %v970
      %v1038 = vpop.f32.mrf.mxu0
      %v1039 = vadd.f32 0.0, %v1038
      %v1040 = vpop.f32.mrf.mxu0
      %1041 = vdwg.mxu0
      %v1042 = vadd.f32 %v966, %v1039
      %v1043 = vxor.u32 %v1042, 2147483648
      %v1044 = vmul.f32 %v1043, 1.442695
      %v1045 = vpow.pop %v1044
      %v1046 = vadd.f32 %v1045, 1.0
      %v1047 = vrcp.pop %v1046
      %v1048 = vmul.f32 1.0, %v1047
      %v1049 = vtanh.pop %v1042
      %v1050 = vmul.f32 %v1048, %v957
      %1052 = vrot.lane.b32.xlu0 %v1049, 64
      %v1053 = vpop.permute.xlu0 %1052
      %v1055 = vmul.f32 %v1048, %v1053
      %1057 = vrot.lane.b32.xlu0 %v1055, 32
      %v1058 = vpop.permute.xlu0 %1057
      %v1060 = vadd.f32 %v1050, %v1058
      %v1061 = vtanh.pop %v1060
      %1063 = vrot.lane.b32.xlu0 %v1061, 64
      %v1064 = vpop.permute.xlu0 %1063
      %v1066 = vmul.f32 %v1048, %v1064
      %1068 = vset.pattern.permute.xlu0 0
      %1069 = vperm.xlu0 %1068, %v964
      %v1070 = vpop.permute.xlu0 %1069
      %v1072 = vmul.f32 %v1070, %v1066
      %1074 = vrot.lane.b32.xlu0 %v1072, 32
      %v1075 = vpop.permute.xlu0 %1074
      %s1077 = scalar_lea.vmem %s408, 16
      %1078 = vst.msk [vmem:[%s1077] sm:$0xff] %vm431, %v1075
      %v1079 = vsub.f32 1.0, %v964
      %1081 = vset.pattern.permute.xlu0 0
      %1082 = vperm.xlu0 %1081, %v1079
      %v1083 = vpop.permute.xlu0 %1082
      %v1085 = vmul.f32 %v1083, %v954
      %v1086 = vadd.f32 %v1072, %v1085
      %v1087 = vmul.f32 %v1070, %v1060
      %v1088 = vmul.f32 %v1083, %v957
      %v1089 = vadd.f32 %v1087, %v1088
      %s1090 = scalar_select %p413, 1, 3
      %s1091 = ssub.s32 6, %s681
      %s1092 = sadd.s32 %s681, 3
      %s1093 = scalar_select %p413, %s1091, %s1092
      %v1094 = vstv %s1093
      %vm1095 = vcmp.lt.s32.totalorder %v1094, %v677
      %v1096 = vsel %vm1095, 1, 0
      %v1097 = vcvt.s32.f32 %v1096
      %s1098 = smul.u32 %s1090, 8
      %s1099 = scalar_lea.vmem [#allocation4], %s1098
      %v1100 = vld [vmem:[%s1099] sm:$0xff]
      %1102 = vrot.lane.b32.xlu0 %v1086, 32
      %v1103 = vpop.permute.xlu0 %1102
      %v1104 = vsel %vm431, %v1103, 0
      %1106 = vmatprep.subr.mxu0 0.0
      %1107 = vmatpush1.msra.mxu0 0.0
      %1108 = vmatprep.subr.mxu0 0.0
      %1109 = vmatpush1.msra.mxu0 0.0
      %1110 = vmatprep.subr.mxu0 0.0
      %1111 = vmatpush1.msra.mxu0 0.0
      %1112 = vmatprep.subr.mxu0 0.0
      %1113 = vmatpush1.msra.mxu0 0.0
      %1114 = vmatprep.subr.mxu0 0.0
      %1115 = vmatpush1.msra.mxu0 0.0
      %1116 = vmatprep.subr.mxu0 0.0
      %1117 = vmatpush1.msra.mxu0 0.0
      %1118 = vmatprep.subr.mxu0 0.0
      %1119 = vmatpush1.msra.mxu0 0.0
      %1120 = vmatprep.subr.mxu0 0.0
      %1121 = vmatpush1.msra.mxu0 0.0
      %1122 = vmatprep.subr.mxu0 0.0
      %1123 = vmatpush1.msra.mxu0 0.0
      %1124 = vmatprep.subr.mxu0 0.0
      %1125 = vmatpush1.msra.mxu0 0.0
      %1126 = vmatprep.subr.mxu0 0.0
      %1127 = vmatpush1.msra.mxu0 0.0
      %1128 = vmatprep.subr.mxu0 0.0
      %1129 = vmatpush1.msra.mxu0 0.0
      %1130 = vmatprep.subr.mxu0 0.0
      %1131 = vmatpush1.msra.mxu0 %v676
      %1132 = vmatprep.subr.mxu0 0.0
      %1133 = vmatpush1.msra.mxu0 %v675
      %1134 = vmatprep.subr.mxu0 0.0
      %1135 = vmatpush1.msra.mxu0 %v674
      %1136 = vmatprep.subr.mxu0 0.0
      %1137 = vmatpush1.msra.mxu0 %v673
      %1138 = vmatprep.subr.mxu0 0.0
      %1139 = vmatpush2.msra.mxu0 0.0
      %1140 = vmatprep.subr.mxu0 0.0
      %1141 = vmatpush2.msra.mxu0 0.0
      %1142 = vmatprep.subr.mxu0 0.0
      %1143 = vmatpush2.msra.mxu0 0.0
      %1144 = vmatprep.subr.mxu0 0.0
      %1145 = vmatpush2.msra.mxu0 0.0
      %1146 = vmatprep.subr.mxu0 0.0
      %1147 = vmatpush2.msra.mxu0 0.0
      %1148 = vmatprep.subr.mxu0 0.0
      %1149 = vmatpush2.msra.mxu0 0.0
      %1150 = vmatprep.subr.mxu0 0.0
      %1151 = vmatpush2.msra.mxu0 0.0
      %1152 = vmatprep.subr.mxu0 0.0
      %1153 = vmatpush2.msra.mxu0 0.0
      %1154 = vmatprep.subr.mxu0 0.0
      %1155 = vmatpush2.msra.mxu0 0.0
      %1156 = vmatprep.subr.mxu0 0.0
      %1157 = vmatpush2.msra.mxu0 0.0
      %1158 = vmatprep.subr.mxu0 0.0
      %1159 = vmatpush2.msra.mxu0 0.0
      %1160 = vmatprep.subr.mxu0 0.0
      %1161 = vmatpush2.msra.mxu0 0.0
      %1162 = vmatprep.subr.mxu0 0.0
      %1163 = vmatpush2.msra.mxu0 0.0
      %1164 = vmatprep.subr.mxu0 0.0
      %1165 = vmatpush2.msra.mxu0 0.0
      %1166 = vmatprep.subr.mxu0 0.0
      %1167 = vmatpush2.msra.mxu0 0.0
      %1168 = vmatprep.subr.mxu0 0.0
      %1169 = vmatpush2.msra.mxu0 0.0
      %1170 = vmatprep.mubr.f32.mxu0 0.0
      %1171 = vmatmul.mubr.f32.gmra.mxu0 %v1104
      %v1172 = vpop.f32.mrf.mxu0
      %v1173 = vadd.f32 0.0, %v1172
      %v1174 = vpop.f32.mrf.mxu0
      %1175 = vdwg.mxu0
      %v1176 = vadd.f32 %v1100, %v1173
      %v1177 = vxor.u32 %v1176, 2147483648
      %v1178 = vmul.f32 %v1177, 1.442695
      %v1179 = vpow.pop %v1178
      %v1180 = vadd.f32 %v1179, 1.0
      %v1181 = vrcp.pop %v1180
      %v1182 = vmul.f32 1.0, %v1181
      %v1183 = vtanh.pop %v1176
      %v1184 = vmul.f32 %v1182, %v1089
      %1186 = vrot.lane.b32.xlu0 %v1183, 64
      %v1187 = vpop.permute.xlu0 %1186
      %v1189 = vmul.f32 %v1182, %v1187
      %1191 = vrot.lane.b32.xlu0 %v1189, 32
      %v1192 = vpop.permute.xlu0 %1191
      %v1194 = vadd.f32 %v1184, %v1192
      %v1195 = vtanh.pop %v1194
      %1197 = vrot.lane.b32.xlu0 %v1195, 64
      %v1198 = vpop.permute.xlu0 %1197
      %v1200 = vmul.f32 %v1182, %v1198
      %1202 = vset.pattern.permute.xlu0 0
      %1203 = vperm.xlu0 %1202, %v1097
      %v1204 = vpop.permute.xlu0 %1203
      %v1206 = vmul.f32 %v1204, %v1200
      %1208 = vrot.lane.b32.xlu0 %v1206, 32
      %v1209 = vpop.permute.xlu0 %1208
      %s1211 = scalar_lea.vmem %s408, %s1098
      %1212 = vst.msk [vmem:[%s1211] sm:$0xff] %vm431, %v1209
      %v1213 = vsub.f32 1.0, %v1097
      %1215 = vset.pattern.permute.xlu0 0
      %1216 = vperm.xlu0 %1215, %v1213
      %v1217 = vpop.permute.xlu0 %1216
      %v1219 = vmul.f32 %v1217, %v1086
      %v1220 = vadd.f32 %v1206, %v1219
      %v1221 = vmul.f32 %v1204, %v1194
      %v1222 = vmul.f32 %v1217, %v1089
      %v1223 = vadd.f32 %v1221, %v1222
      %s1224 = scalar_select %p413, 0, 4
      %s1225 = ssub.s32 5, %s681
      %s1226 = sadd.s32 %s681, 4
      %s1227 = scalar_select %p413, %s1225, %s1226
      %v1228 = vstv %s1227
      %vm1229 = vcmp.lt.s32.totalorder %v1228, %v677
      %v1230 = vsel %vm1229, 1, 0
      %v1231 = vcvt.s32.f32 %v1230
      %s1232 = smul.u32 %s1224, 8
      %s1233 = scalar_lea.vmem [#allocation4], %s1232
      %v1234 = vld [vmem:[%s1233] sm:$0xff]
      %1236 = vrot.lane.b32.xlu0 %v1220, 32
      %v1237 = vpop.permute.xlu0 %1236
      %v1238 = vsel %vm431, %v1237, 0
      %1240 = vmatprep.subr.mxu0 0.0
      %1241 = vmatpush1.msra.mxu0 0.0
      %1242 = vmatprep.subr.mxu0 0.0
      %1243 = vmatpush1.msra.mxu0 0.0
      %1244 = vmatprep.subr.mxu0 0.0
      %1245 = vmatpush1.msra.mxu0 0.0
      %1246 = vmatprep.subr.mxu0 0.0
      %1247 = vmatpush1.msra.mxu0 0.0
      %1248 = vmatprep.subr.mxu0 0.0
      %1249 = vmatpush1.msra.mxu0 0.0
      %1250 = vmatprep.subr.mxu0 0.0
      %1251 = vmatpush1.msra.mxu0 0.0
      %1252 = vmatprep.subr.mxu0 0.0
      %1253 = vmatpush1.msra.mxu0 0.0
      %1254 = vmatprep.subr.mxu0 0.0
      %1255 = vmatpush1.msra.mxu0 0.0
      %1256 = vmatprep.subr.mxu0 0.0
      %1257 = vmatpush1.msra.mxu0 0.0
      %1258 = vmatprep.subr.mxu0 0.0
      %1259 = vmatpush1.msra.mxu0 0.0
      %1260 = vmatprep.subr.mxu0 0.0
      %1261 = vmatpush1.msra.mxu0 0.0
      %1262 = vmatprep.subr.mxu0 0.0
      %1263 = vmatpush1.msra.mxu0 0.0
      %1264 = vmatprep.subr.mxu0 0.0
      %1265 = vmatpush1.msra.mxu0 %v676
      %1266 = vmatprep.subr.mxu0 0.0
      %1267 = vmatpush1.msra.mxu0 %v675
      %1268 = vmatprep.subr.mxu0 0.0
      %1269 = vmatpush1.msra.mxu0 %v674
      %1270 = vmatprep.subr.mxu0 0.0
      %1271 = vmatpush1.msra.mxu0 %v673
      %1272 = vmatprep.subr.mxu0 0.0
      %1273 = vmatpush2.msra.mxu0 0.0
      %1274 = vmatprep.subr.mxu0 0.0
      %1275 = vmatpush2.msra.mxu0 0.0
      %1276 = vmatprep.subr.mxu0 0.0
      %1277 = vmatpush2.msra.mxu0 0.0
      %1278 = vmatprep.subr.mxu0 0.0
      %1279 = vmatpush2.msra.mxu0 0.0
      %1280 = vmatprep.subr.mxu0 0.0
      %1281 = vmatpush2.msra.mxu0 0.0
      %1282 = vmatprep.subr.mxu0 0.0
      %1283 = vmatpush2.msra.mxu0 0.0
      %1284 = vmatprep.subr.mxu0 0.0
      %1285 = vmatpush2.msra.mxu0 0.0
      %1286 = vmatprep.subr.mxu0 0.0
      %1287 = vmatpush2.msra.mxu0 0.0
      %1288 = vmatprep.subr.mxu0 0.0
      %1289 = vmatpush2.msra.mxu0 0.0
      %1290 = vmatprep.subr.mxu0 0.0
      %1291 = vmatpush2.msra.mxu0 0.0
      %1292 = vmatprep.subr.mxu0 0.0
      %1293 = vmatpush2.msra.mxu0 0.0
      %1294 = vmatprep.subr.mxu0 0.0
      %1295 = vmatpush2.msra.mxu0 0.0
      %1296 = vmatprep.subr.mxu0 0.0
      %1297 = vmatpush2.msra.mxu0 0.0
      %1298 = vmatprep.subr.mxu0 0.0
      %1299 = vmatpush2.msra.mxu0 0.0
      %1300 = vmatprep.subr.mxu0 0.0
      %1301 = vmatpush2.msra.mxu0 0.0
      %1302 = vmatprep.subr.mxu0 0.0
      %1303 = vmatpush2.msra.mxu0 0.0
      %1304 = vmatprep.mubr.f32.mxu0 0.0
      %1305 = vmatmul.mubr.f32.gmra.mxu0 %v1238
      %v1306 = vpop.f32.mrf.mxu0
      %v1307 = vadd.f32 0.0, %v1306
      %v1308 = vpop.f32.mrf.mxu0
      %1309 = vdwg.mxu0
      %v1310 = vadd.f32 %v1234, %v1307
      %v1311 = vxor.u32 %v1310, 2147483648
      %v1312 = vmul.f32 %v1311, 1.442695
      %v1313 = vpow.pop %v1312
      %v1314 = vadd.f32 %v1313, 1.0
      %v1315 = vrcp.pop %v1314
      %v1316 = vmul.f32 1.0, %v1315
      %v1317 = vtanh.pop %v1310
      %v1318 = vmul.f32 %v1316, %v1223
      %1320 = vrot.lane.b32.xlu0 %v1317, 64
      %v1321 = vpop.permute.xlu0 %1320
      %v1323 = vmul.f32 %v1316, %v1321
      %1325 = vrot.lane.b32.xlu0 %v1323, 32
      %v1326 = vpop.permute.xlu0 %1325
      %v1328 = vadd.f32 %v1318, %v1326
      %v1329 = vtanh.pop %v1328
      %1331 = vrot.lane.b32.xlu0 %v1329, 64
      %v1332 = vpop.permute.xlu0 %1331
      %v1334 = vmul.f32 %v1316, %v1332
      %1336 = vset.pattern.permute.xlu0 0
      %1337 = vperm.xlu0 %1336, %v1231
      %v1338 = vpop.permute.xlu0 %1337
      %v1340 = vmul.f32 %v1338, %v1334
      %1342 = vrot.lane.b32.xlu0 %v1340, 32
      %v1343 = vpop.permute.xlu0 %1342
      %s1345 = scalar_lea.vmem %s408, %s1232
      %1346 = vst.msk [vmem:[%s1345] sm:$0xff] %vm431, %v1343
      %v1347 = vsub.f32 1.0, %v1231
      %1349 = vset.pattern.permute.xlu0 0
      %1350 = vperm.xlu0 %1349, %v1347
      %v1351 = vpop.permute.xlu0 %1350
      %v1353 = vmul.f32 %v1351, %v1220
      %v1354 = vadd.f32 %v1340, %v1353
      %v1355 = vmul.f32 %v1338, %v1328
      %v1356 = vmul.f32 %v1351, %v1223
      %v1357 = vadd.f32 %v1355, %v1356
      %1359 = vrot.lane.b32.xlu0 %v1354, 32
      %v1360 = vpop.permute.xlu0 %1359
      %1362 = vst.msk [vmem:[#allocation2] sm:$0xff] %vm431, %v1360
      %1364 = vrot.lane.b32.xlu0 %v1357, 96
      %v1365 = vpop.permute.xlu0 %1364
      %1367 = vst.msk [vmem:[#allocation3] sm:$0xff] %vm431, %v1365
      %p1368 = scmp.eq.s32.totalorder %s21, 0
      %s1369 = ssub.s32 1, %s22
      %s1370 = scalar_select %p1368, %s22, %s1369
      %s1371 = smul.u32 5, %s1370
      %p1372 = scmp.lt.s32.totalorder %s21, 1
      %s1373 = scalar_select %p1372, %s21, 1
      %p1374 = scmp.lt.s32.totalorder %s1371, 9
      %s1375 = scalar_select %p1374, %s1371, 9
      %s1376 = smul.addr %s1373, 10
      %s1377 = sadd.s32 %s1375, %s1376
      %s1378 = smul.addr %s1377, 8
      %s1379 = scalar_lea.vmem %s6, %s1378
      // Predicated region
      $region49: #{lstmbilm_forward.4} parent=43 // pred_check
        %p1380 = pneg %p218
      $region50: #{lstmbilm_forward.4} parent=43 // pred_check_branch
        %1382 = sbr.rel (%p1380) target = $region52
      $region51: #{lstmbilm_forward.4} parent=43 // pred_region
        %p1383 = scmp.eq.s32.totalorder %s21, 0
        %s1384 = ssub.s32 1, %s22
        %s1385 = scalar_select %p1383, %s22, %s1384
        %s1386 = smul.u32 5, %s1385
      $region52: #{lstmbilm_forward.4} parent=43 // pred_fallthru
        _
    $region44: #{lstmbilm_forward.4} parent=5 // pred_fallthru
      _
    %p1387 = scmp.le.s32.totalorder 2, %s12
    // Predicated region
    $region53: #{lstmbilm_forward.4} parent=5 // pred_check
      %p1388 = pneg %p1387
    $region54: #{lstmbilm_forward.4} parent=5 // pred_check_branch
      %1390 = sbr.rel (%p1388) target = $region56
    $region55: #{lstmbilm_forward.4} parent=5 // pred_region
      %s1391 = ssub.s32 %s12, 2
      // Predicated region
      $region57: #{lstmbilm_forward.4} parent=55 // pred_check
        %p1392 = pneg %p224
      $region58: #{lstmbilm_forward.4} parent=55 // pred_check_branch
        %1394 = sbr.rel (%p1392) target = $region60
      $region59: #{lstmbilm_forward.4} parent=55 // pred_region
        %p1395 = scmp.eq.s32.totalorder %s23, 0
        %s1396 = ssub.s32 1, %s24
        %s1397 = scalar_select %p1395, %s24, %s1396
        %s1398 = smul.u32 5, %s1397
        %p1399 = scmp.lt.s32.totalorder %s23, 1
        %s1400 = scalar_select %p1399, %s23, 1
        %p1401 = scmp.lt.s32.totalorder %s1398, 9
        %s1402 = scalar_select %p1401, %s1398, 9
        %s1403 = smul.addr %s1400, 10
        %s1404 = sadd.s32 %s1402, %s1403
        %s1405 = smul.addr %s1404, 8
        %s1406 = scalar_lea.vmem %s6, %s1405
      $region60: #{lstmbilm_forward.4} parent=55 // pred_fallthru
        _
    $region56: #{lstmbilm_forward.4} parent=5 // pred_fallthru
      _
  $region6: #{lstmbilm_forward.4} parent=0 // loop_footer
    %s16 = sadd.s32 1, %s12
  $region7: #{lstmbilm_forward.4} parent=0 // loop_footer_branch
    %11 = sbr.rel target = $region3
  $region8: #{lstmbilm_forward.4} parent=0 // loop_exit
    _

// kernel: lstmbilm_forward.3
$region0: #{lstmbilm_forward.3}
  #allocation0 [shape = 'u32[]', space=smem, size = 0x4, offset = 0x4, fixed_abs, tag = 'smem constant byte address 0x4 - core index']
  #allocation1 [shape = 'u32[144,128]{1,0:T(1,128)}', space=vmem, size = 0x12000, scoped, tag = 'internal scratch']
  #allocation2 [shape = 'f32[8,32]{1,0:T(8,128)}', space=vmem, size = 0x1000, scoped, tag = 'scratch operand']
  #allocation3 [shape = 'f32[8,32]{1,0:T(8,128)}', space=vmem, size = 0x1000, scoped, tag = 'scratch operand']
  #allocation4 [shape = 'f32[5,8,128]{2,1,0:T(8,128)}', space=vmem, size = 0x5000, scoped, tag = 'scratch operand']
  %s0 = inlined_call_operand.vmem [shape: s32[8,1], index: 0, kind: input, shape index: {}]
  %s1 = inlined_call_operand.vmem [shape: f32[10,8,16], index: 1, kind: input, shape index: {}]
  %s2 = inlined_call_operand.vmem [shape: f32[2,1,16,128], index: 2, kind: input, shape index: {}]
  %s3 = inlined_call_operand.vmem [shape: f32[2,32,128], index: 3, kind: input, shape index: {}]
  %s4 = inlined_call_operand.vmem [shape: f32[2,1,128], index: 4, kind: input, shape index: {}]
  %s5 = inlined_call_operand.vmem [shape: f32[2,10,8,32], index: 5, kind: output, shape index: {}]
  %s6 = sld [smem:[#allocation0]]
  $region57: #{lstmbilm_forward.3} parent=0
    _
  %s8 = ssub.s32 1, %s6
  %s9 = scalar_select 0, %s8, %s6
  loop: start=0, step=1, limit=6
  $region2: #{lstmbilm_forward.3} parent=0 // loop_pre_header
    _
  $region3: #{lstmbilm_forward.3} parent=0 // loop_header
    %s11 = sphi 0, %s15
    %p12 = scmp.ge.s32.totalorder %s11, 6
    %s18 = sphi 0, %s30
    %s19 = sphi 0, %s26
    %s20 = sphi 0, %s18
    %s21 = sphi 0, %s19
    %s22 = sphi 0, %s20
    %s23 = sphi 0, %s21
    %s31 = sphi 0, %s31
    %s33 = sphi 0, %s31
    %s34 = sphi 0, %s33
    %s48 = sphi 0, %s34
    %s60 = sphi 0, %s62
    %s63 = sphi 0, %s60
    %s64 = sphi 0, %s63
    %s80 = sphi 0, %s64
    %s86 = sphi 0, %s88
    %s89 = sphi 0, %s86
    %s90 = sphi 0, %s89
    %s106 = sphi 0, %s90
    %s112 = sphi 0, %s114
    %s115 = sphi 0, %s112
    %s116 = sphi 0, %s115
    %s132 = sphi 0, %s116
    %s138 = sphi 0, %s140
    %s141 = sphi 0, %s138
    %s142 = sphi 0, %s141
    %s158 = sphi 0, %s142
    %s172 = sphi 0, %s174
    %s175 = sphi 0, %s172
    %s176 = sphi 0, %s175
    %s192 = sphi 0, %s176
  $region4: #{lstmbilm_forward.3} parent=0 // loop_header_branch
    %14 = sbr.rel (%p12) target = $region8
  $region5: #{lstmbilm_forward.3} parent=0 // loop_body
    %s16 = ssub.s32 %s11, 1
    %s17 = ssub.s32 %s11, 2
    %s24 = sadd.s32 1, %s19
    %p25 = scmp.ge.s32.totalorder %s24, 2
    %s26 = scalar_select %p25, 0, %s24
    %s27 = sadd.s32 1, %s18
    %s28 = scalar_select %p25, %s27, %s18
    %p29 = scmp.ge.s32.totalorder %s28, 2
    %s30 = scalar_select %p29, 0, %s28
    %s32 = sadd.s32 %s31, 1
    %p35 = scmp.eq.s32.totalorder %s11, 3
    %p36 = scmp.ne.s32.totalorder %s31, %s33
    %p37 = scmp.eq.s32.totalorder %s11, 0
    %p38 = por %p36, %p37
    %p39 = scmp.ne.s32.totalorder %s31, %s33
    %p40 = scmp.eq.s32.totalorder %s16, 3
    %p41 = por %p39, %p40
    %p42 = scmp.ne.s32.totalorder %s33, %s34
    %p43 = scmp.eq.s32.totalorder %s16, 0
    %p44 = por %p42, %p43
    %p45 = scmp.ne.s32.totalorder %s33, %s34
    %p46 = scmp.eq.s32.totalorder %s17, 3
    %p47 = por %p45, %p46
    %p49 = scmp.ne.s32.totalorder %s34, %s48
    %p50 = scmp.eq.s32.totalorder %s17, 0
    %p51 = por %p49, %p50
    %p52 = scmp.eq.s32.totalorder %s18, 0
    %s53 = ssub.s32 1, %s19
    %s54 = scalar_select %p52, %s19, %s53
    %p55 = scmp.eq.s32.totalorder %s30, 0
    %s56 = ssub.s32 1, %s26
    %s57 = scalar_select %p55, %s26, %s56
    %s58 = ssub.s32 %s54, %s57
    %p59 = scmp.eq.s32.totalorder %s58, 0
    %s61 = sadd.s32 %s60, 1
    %s62 = scalar_select %p59, %s60, %s61
    %p65 = pneg %p59
    %p66 = scmp.eq.s32.totalorder %s11, 3
    %p67 = por %p65, %p66
    %p68 = scmp.ne.s32.totalorder %s60, %s63
    %p69 = scmp.eq.s32.totalorder %s11, 0
    %p70 = por %p68, %p69
    %p71 = scmp.ne.s32.totalorder %s60, %s63
    %p72 = scmp.eq.s32.totalorder %s16, 3
    %p73 = por %p71, %p72
    %p74 = scmp.ne.s32.totalorder %s63, %s64
    %p75 = scmp.eq.s32.totalorder %s16, 0
    %p76 = por %p74, %p75
    %p77 = scmp.ne.s32.totalorder %s63, %s64
    %p78 = scmp.eq.s32.totalorder %s17, 3
    %p79 = por %p77, %p78
    %p81 = scmp.ne.s32.totalorder %s64, %s80
    %p82 = scmp.eq.s32.totalorder %s17, 0
    %p83 = por %p81, %p82
    %s84 = ssub.s32 %s18, %s30
    %p85 = scmp.eq.s32.totalorder %s84, 0
    %s87 = sadd.s32 %s86, 1
    %s88 = scalar_select %p85, %s86, %s87
    %p91 = pneg %p85
    %p92 = scmp.eq.s32.totalorder %s11, 3
    %p93 = por %p91, %p92
    %p94 = scmp.ne.s32.totalorder %s86, %s89
    %p95 = scmp.eq.s32.totalorder %s11, 0
    %p96 = por %p94, %p95
    %p97 = scmp.ne.s32.totalorder %s86, %s89
    %p98 = scmp.eq.s32.totalorder %s16, 3
    %p99 = por %p97, %p98
    %p100 = scmp.ne.s32.totalorder %s89, %s90
    %p101 = scmp.eq.s32.totalorder %s16, 0
    %p102 = por %p100, %p101
    %p103 = scmp.ne.s32.totalorder %s89, %s90
    %p104 = scmp.eq.s32.totalorder %s17, 3
    %p105 = por %p103, %p104
    %p107 = scmp.ne.s32.totalorder %s90, %s106
    %p108 = scmp.eq.s32.totalorder %s17, 0
    %p109 = por %p107, %p108
    %s110 = ssub.s32 %s18, %s30
    %p111 = scmp.eq.s32.totalorder %s110, 0
    %s113 = sadd.s32 %s112, 1
    %s114 = scalar_select %p111, %s112, %s113
    %p117 = pneg %p111
    %p118 = scmp.eq.s32.totalorder %s11, 3
    %p119 = por %p117, %p118
    %p120 = scmp.ne.s32.totalorder %s112, %s115
    %p121 = scmp.eq.s32.totalorder %s11, 0
    %p122 = por %p120, %p121
    %p123 = scmp.ne.s32.totalorder %s112, %s115
    %p124 = scmp.eq.s32.totalorder %s16, 3
    %p125 = por %p123, %p124
    %p126 = scmp.ne.s32.totalorder %s115, %s116
    %p127 = scmp.eq.s32.totalorder %s16, 0
    %p128 = por %p126, %p127
    %p129 = scmp.ne.s32.totalorder %s115, %s116
    %p130 = scmp.eq.s32.totalorder %s17, 3
    %p131 = por %p129, %p130
    %p133 = scmp.ne.s32.totalorder %s116, %s132
    %p134 = scmp.eq.s32.totalorder %s17, 0
    %p135 = por %p133, %p134
    %s136 = ssub.s32 %s18, %s30
    %p137 = scmp.eq.s32.totalorder %s136, 0
    %s139 = sadd.s32 %s138, 1
    %s140 = scalar_select %p137, %s138, %s139
    %p143 = pneg %p137
    %p144 = scmp.eq.s32.totalorder %s11, 3
    %p145 = por %p143, %p144
    %p146 = scmp.ne.s32.totalorder %s138, %s141
    %p147 = scmp.eq.s32.totalorder %s11, 0
    %p148 = por %p146, %p147
    %p149 = scmp.ne.s32.totalorder %s138, %s141
    %p150 = scmp.eq.s32.totalorder %s16, 3
    %p151 = por %p149, %p150
    %p152 = scmp.ne.s32.totalorder %s141, %s142
    %p153 = scmp.eq.s32.totalorder %s16, 0
    %p154 = por %p152, %p153
    %p155 = scmp.ne.s32.totalorder %s141, %s142
    %p156 = scmp.eq.s32.totalorder %s17, 3
    %p157 = por %p155, %p156
    %p159 = scmp.ne.s32.totalorder %s142, %s158
    %p160 = scmp.eq.s32.totalorder %s17, 0
    %p161 = por %p159, %p160
    %p162 = scmp.eq.s32.totalorder %s18, 0
    %s163 = ssub.s32 1, %s19
    %s164 = scalar_select %p162, %s19, %s163
    %p165 = scmp.eq.s32.totalorder %s30, 0
    %s166 = ssub.s32 1, %s26
    %s167 = scalar_select %p165, %s26, %s166
    %s168 = ssub.s32 %s18, %s30
    %s169 = ssub.s32 %s164, %s167
    %s170 = sor.u32 %s168, %s169
    %p171 = scmp.eq.s32.totalorder %s170, 0
    %s173 = sadd.s32 %s172, 1
    %s174 = scalar_select %p171, %s172, %s173
    %p177 = pneg %p171
    %p178 = scmp.eq.s32.totalorder %s11, 3
    %p179 = por %p177, %p178
    %p180 = scmp.ne.s32.totalorder %s172, %s175
    %p181 = scmp.eq.s32.totalorder %s11, 0
    %p182 = por %p180, %p181
    %p183 = scmp.ne.s32.totalorder %s172, %s175
    %p184 = scmp.eq.s32.totalorder %s16, 3
    %p185 = por %p183, %p184
    %p186 = scmp.ne.s32.totalorder %s175, %s176
    %p187 = scmp.eq.s32.totalorder %s16, 0
    %p188 = por %p186, %p187
    %p189 = scmp.ne.s32.totalorder %s175, %s176
    %p190 = scmp.eq.s32.totalorder %s17, 3
    %p191 = por %p189, %p190
    %p193 = scmp.ne.s32.totalorder %s176, %s192
    %p194 = scmp.eq.s32.totalorder %s17, 0
    %p195 = por %p193, %p194
    %p196 = scmp.le.s32.totalorder 1, %s11
    %p197 = scmp.lt.s32.totalorder %s11, 5
    %p198 = pnand %p196, %p197
    %p199 = pneg %p198
    // Predicated region
    $region9: #{lstmbilm_forward.3} parent=5 // pred_check
      _
    $region10: #{lstmbilm_forward.3} parent=5 // pred_check_branch
      %201 = sbr.rel (%p198) target = $region12
    $region11: #{lstmbilm_forward.3} parent=5 // pred_region
      %s202 = ssub.s32 %s11, 1
      // Predicated region
      $region13: #{lstmbilm_forward.3} parent=11 // pred_check
        %p203 = pneg %p44
      $region14: #{lstmbilm_forward.3} parent=11 // pred_check_branch
        %205 = sbr.rel (%p203) target = $region16
      $region15: #{lstmbilm_forward.3} parent=11 // pred_region
        _
      $region16: #{lstmbilm_forward.3} parent=11 // pred_fallthru
        _
    $region12: #{lstmbilm_forward.3} parent=5 // pred_fallthru
      _
    %p206 = scmp.lt.s32.totalorder %s11, 4
    // Predicated region
    $region17: #{lstmbilm_forward.3} parent=5 // pred_check
      %p207 = pneg %p206
    $region18: #{lstmbilm_forward.3} parent=5 // pred_check_branch
      %209 = sbr.rel (%p207) target = $region20
    $region19: #{lstmbilm_forward.3} parent=5 // pred_region
      // Predicated region
      $region21: #{lstmbilm_forward.3} parent=19 // pred_check
        %p210 = pneg %p70
      $region22: #{lstmbilm_forward.3} parent=19 // pred_check_branch
        %212 = sbr.rel (%p210) target = $region24
      $region23: #{lstmbilm_forward.3} parent=19 // pred_region
        %p213 = scmp.eq.s32.totalorder %s18, 0
        %s214 = ssub.s32 1, %s19
        %s215 = scalar_select %p213, %s19, %s214
        %s216 = smul.u32 5, %s215
        %p217 = scmp.lt.s32.totalorder %s216, 9
        %s218 = scalar_select %p217, %s216, 9
        %s219 = smul.addr %s218, 8
        %s220 = scalar_lea.vmem %s1, %s219
        %p221 = scmp.eq.s32.totalorder %s18, 0
        %s222 = ssub.s32 1, %s19
        %s223 = scalar_select %p221, %s19, %s222
        %s224 = smul.u32 5, %s223
      $region24: #{lstmbilm_forward.3} parent=19 // pred_fallthru
        _
      // Predicated region
      $region25: #{lstmbilm_forward.3} parent=19 // pred_check
        %p225 = pneg %p96
      $region26: #{lstmbilm_forward.3} parent=19 // pred_check_branch
        %227 = sbr.rel (%p225) target = $region28
      $region27: #{lstmbilm_forward.3} parent=19 // pred_region
        %p228 = scmp.lt.s32.totalorder %s18, 1
        %s229 = scalar_select %p228, %s18, 1
        %s230 = smul.addr %s229, 2
        %s231 = smul.addr %s230, 8
        %s232 = scalar_lea.vmem %s2, %s231
      $region28: #{lstmbilm_forward.3} parent=19 // pred_fallthru
        _
      // Predicated region
      $region29: #{lstmbilm_forward.3} parent=19 // pred_check
        %p233 = pneg %p122
      $region30: #{lstmbilm_forward.3} parent=19 // pred_check_branch
        %235 = sbr.rel (%p233) target = $region32
      $region31: #{lstmbilm_forward.3} parent=19 // pred_region
        %p236 = scmp.lt.s32.totalorder %s18, 1
        %s237 = scalar_select %p236, %s18, 1
        %s238 = smul.addr %s237, 4
        %s239 = smul.addr %s238, 8
        %s240 = scalar_lea.vmem %s3, %s239
      $region32: #{lstmbilm_forward.3} parent=19 // pred_fallthru
        _
      // Predicated region
      $region33: #{lstmbilm_forward.3} parent=19 // pred_check
        %p241 = pneg %p148
      $region34: #{lstmbilm_forward.3} parent=19 // pred_check_branch
        %243 = sbr.rel (%p241) target = $region36
      $region35: #{lstmbilm_forward.3} parent=19 // pred_region
        %p244 = scmp.lt.s32.totalorder %s18, 1
        %s245 = scalar_select %p244, %s18, 1
        %s246 = scalar_lea.vmem %s4, %s245
      $region36: #{lstmbilm_forward.3} parent=19 // pred_fallthru
        _
    $region20: #{lstmbilm_forward.3} parent=5 // pred_fallthru
      _
    %p247 = scmp.le.s32.totalorder 1, %s11
    %p248 = scmp.lt.s32.totalorder %s11, 5
    %p249 = pnand %p247, %p248
    %p250 = pneg %p249
    // Predicated region
    $region37: #{lstmbilm_forward.3} parent=5 // pred_check
      _
    $region38: #{lstmbilm_forward.3} parent=5 // pred_check_branch
      %252 = sbr.rel (%p249) target = $region40
    $region39: #{lstmbilm_forward.3} parent=5 // pred_region
      %s253 = ssub.s32 %s11, 1
      %p254 = pneg %p44
      %p255 = pneg %p41
      %p256 = scmp.eq.s32.totalorder %s20, 0
      %s257 = ssub.s32 1, %s21
      %s258 = scalar_select %p256, %s21, %s257
      %s259 = smul.u32 5, %s258
      %p260 = scmp.lt.s32.totalorder %s259, 9
      %s261 = scalar_select %p260, %s259, 9
      %s262 = smul.addr %s261, 8
      %s263 = scalar_lea.vmem %s1, %s262
      %p264 = pneg %p76
      %p265 = pneg %p73
      %p266 = scmp.lt.s32.totalorder %s20, 1
      %s267 = scalar_select %p266, %s20, 1
      %s268 = smul.addr %s267, 2
      %s269 = smul.addr %s268, 8
      %s270 = scalar_lea.vmem %s2, %s269
      %p271 = pneg %p102
      %p272 = pneg %p99
      %p273 = scmp.lt.s32.totalorder %s20, 1
      %s274 = scalar_select %p273, %s20, 1
      %s275 = smul.addr %s274, 4
      %s276 = smul.addr %s275, 8
      %s277 = scalar_lea.vmem %s3, %s276
      %p278 = pneg %p128
      %p279 = pneg %p125
      %p280 = scmp.lt.s32.totalorder %s20, 1
      %s281 = scalar_select %p280, %s20, 1
      %s282 = scalar_lea.vmem %s4, %s281
      %p283 = pneg %p154
      %p284 = pneg %p151
      %p285 = pneg %p188
      %p286 = pneg %p185
      %p287 = scmp.eq.s32.totalorder %s20, 0
      %s288 = ssub.s32 1, %s21
      %s289 = scalar_select %p287, %s21, %s288
      %s290 = smul.u32 5, %s289
      %p291 = scmp.lt.s32.totalorder %s20, 1
      %s292 = scalar_select %p291, %s20, 1
      %p293 = scmp.lt.s32.totalorder %s290, 9
      %s294 = scalar_select %p293, %s290, 9
      %s295 = smul.addr %s292, 10
      %s296 = sadd.s32 %s294, %s295
      %s297 = smul.addr %s296, 8
      %s298 = scalar_lea.vmem %s5, %s297
      %p299 = scmp.eq.s32.totalorder %s20, 0
      %s300 = ssub.s32 1, %s21
      %s301 = scalar_select %p299, %s21, %s300
      %s302 = smul.u32 5, %s301
      %p303 = scmp.lt.s32.totalorder %s302, 9
      %s304 = scalar_select %p303, %s302, 9
      %s305 = smul.addr %s304, 8
      %s306 = scalar_lea.vmem %s1, %s305
      %p307 = scmp.eq.s32.totalorder %s20, 0
      %s308 = ssub.s32 1, %s21
      %s309 = scalar_select %p307, %s21, %s308
      %s310 = smul.u32 5, %s309
      %p311 = scmp.lt.s32.totalorder %s20, 1
      %s312 = scalar_select %p311, %s20, 1
      %s313 = smul.addr %s312, 2
      %s314 = smul.addr %s313, 8
      %s315 = scalar_lea.vmem %s2, %s314
      %p316 = scmp.lt.s32.totalorder %s20, 1
      %s317 = scalar_select %p316, %s20, 1
      %s318 = smul.addr %s317, 4
      %s319 = smul.addr %s318, 8
      %s320 = scalar_lea.vmem %s3, %s319
      %p321 = scmp.lt.s32.totalorder %s20, 1
      %s322 = scalar_select %p321, %s20, 1
      %s323 = scalar_lea.vmem %s4, %s322
      %p324 = scmp.eq.s32.totalorder %s20, 0
      %s325 = ssub.s32 1, %s21
      %s326 = scalar_select %p324, %s21, %s325
      %s327 = smul.u32 5, %s326
      %p328 = scmp.lt.s32.totalorder %s20, 1
      %s329 = scalar_select %p328, %s20, 1
      %p330 = scmp.lt.s32.totalorder %s327, 9
      %s331 = scalar_select %p330, %s327, 9
      %s332 = smul.addr %s329, 10
      %s333 = sadd.s32 %s331, %s332
      %s334 = smul.addr %s333, 8
      %s335 = scalar_lea.vmem %s5, %s334
      %p336 = scmp.eq.s32.totalorder %s20, 0
      %s337 = ssub.s32 1, %s21
      %s338 = scalar_select %p336, %s21, %s337
      %s339 = smul.u32 5, %s338
      %p340 = scmp.eq.s32.totalorder %s20, 1
      %p341 = scmp.eq.s32.totalorder %s21, 0
      // Predicated region
      $region41: #{lstmbilm_forward.3} parent=39 // pred_check
        %p342 = pneg %p341
      $region42: #{lstmbilm_forward.3} parent=39 // pred_check_branch
        %344 = sbr.rel (%p342) target = $region44
      $region43: #{lstmbilm_forward.3} parent=39 // pred_region
        %vm345 = vcmask 261120
        %346 = vst.msk [vmem:[#allocation2] sm:$0xff] %vm345, 0.0
        %347 = vst.msk [vmem:[#allocation3] sm:$0xff] %vm345, 0.0
      $region44: #{lstmbilm_forward.3} parent=39 // pred_fallthru
        _
      %v348 = vld [vmem:[%s323] sm:$0x1]
      %v349 = vld [vmem:[%s306] sm:$0xff]
      %v350 = vld [vmem:[%s306 + $0x8] sm:$0xff]
      %v351 = vld [vmem:[%s306 + $0x10] sm:$0xff]
      %v352 = vld [vmem:[%s306 + $0x18] sm:$0xff]
      %v353 = vld [vmem:[%s306 + $0x20] sm:$0xff]
      %v354 = vld [vmem:[%s315] sm:$0xff]
      %v355 = vld [vmem:[%s315 + $0x8] sm:$0xff]
      %vm356 = vcmask 130048
      %v358 = vsel %vm356, %v349, 0
      %v361 = vsel %vm356, %v350, 0
      %v364 = vsel %vm356, %v351, 0
      %v367 = vsel %vm356, %v352, 0
      %v370 = vsel %vm356, %v353, 0
      %372 = vmatprep.subr.mxu0 0.0
      %373 = vmatpush1.msra.mxu0 0.0
      %374 = vmatprep.subr.mxu0 0.0
      %375 = vmatpush1.msra.mxu0 0.0
      %376 = vmatprep.subr.mxu0 0.0
      %377 = vmatpush1.msra.mxu0 0.0
      %378 = vmatprep.subr.mxu0 0.0
      %379 = vmatpush1.msra.mxu0 0.0
      %380 = vmatprep.subr.mxu0 0.0
      %381 = vmatpush1.msra.mxu0 0.0
      %382 = vmatprep.subr.mxu0 0.0
      %383 = vmatpush1.msra.mxu0 0.0
      %384 = vmatprep.subr.mxu0 0.0
      %385 = vmatpush1.msra.mxu0 0.0
      %386 = vmatprep.subr.mxu0 0.0
      %387 = vmatpush1.msra.mxu0 0.0
      %388 = vmatprep.subr.mxu0 0.0
      %389 = vmatpush1.msra.mxu0 0.0
      %390 = vmatprep.subr.mxu0 0.0
      %391 = vmatpush1.msra.mxu0 0.0
      %392 = vmatprep.subr.mxu0 0.0
      %393 = vmatpush1.msra.mxu0 0.0
      %394 = vmatprep.subr.mxu0 0.0
      %395 = vmatpush1.msra.mxu0 0.0
      %396 = vmatprep.subr.mxu0 0.0
      %397 = vmatpush1.msra.mxu0 0.0
      %398 = vmatprep.subr.mxu0 0.0
      %399 = vmatpush1.msra.mxu0 0.0
      %400 = vmatprep.subr.mxu0 0.0
      %401 = vmatpush1.msra.mxu0 %v355
      %402 = vmatprep.subr.mxu0 0.0
      %403 = vmatpush1.msra.mxu0 %v354
      %404 = vmatprep.subr.mxu0 0.0
      %405 = vmatpush2.msra.mxu0 0.0
      %406 = vmatprep.subr.mxu0 0.0
      %407 = vmatpush2.msra.mxu0 0.0
      %408 = vmatprep.subr.mxu0 0.0
      %409 = vmatpush2.msra.mxu0 0.0
      %410 = vmatprep.subr.mxu0 0.0
      %411 = vmatpush2.msra.mxu0 0.0
      %412 = vmatprep.subr.mxu0 0.0
      %413 = vmatpush2.msra.mxu0 0.0
      %414 = vmatprep.subr.mxu0 0.0
      %415 = vmatpush2.msra.mxu0 0.0
      %416 = vmatprep.subr.mxu0 0.0
      %417 = vmatpush2.msra.mxu0 0.0
      %418 = vmatprep.subr.mxu0 0.0
      %419 = vmatpush2.msra.mxu0 0.0
      %420 = vmatprep.subr.mxu0 0.0
      %421 = vmatpush2.msra.mxu0 0.0
      %422 = vmatprep.subr.mxu0 0.0
      %423 = vmatpush2.msra.mxu0 0.0
      %424 = vmatprep.subr.mxu0 0.0
      %425 = vmatpush2.msra.mxu0 0.0
      %426 = vmatprep.subr.mxu0 0.0
      %427 = vmatpush2.msra.mxu0 0.0
      %428 = vmatprep.subr.mxu0 0.0
      %429 = vmatpush2.msra.mxu0 0.0
      %430 = vmatprep.subr.mxu0 0.0
      %431 = vmatpush2.msra.mxu0 0.0
      %432 = vmatprep.subr.mxu0 0.0
      %433 = vmatpush2.msra.mxu0 0.0
      %434 = vmatprep.subr.mxu0 0.0
      %435 = vmatpush2.msra.mxu0 0.0
      %436 = vmatprep.mubr.f32.mxu0 0.0
      %437 = vmatmul.mubr.f32.gmra.mxu0 %v358
      %v438 = vpop.f32.mrf.mxu0
      %v439 = vadd.f32 0.0, %v438
      %v440 = vpop.f32.mrf.mxu0
      %441 = vmatprep.mubr.f32.mxu0 0.0
      %442 = vmatmul.mubr.f32.gmra.mxu0 %v361
      %v443 = vpop.f32.mrf.mxu0
      %v444 = vadd.f32 0.0, %v443
      %v445 = vpop.f32.mrf.mxu0
      %446 = vmatprep.mubr.f32.mxu0 0.0
      %447 = vmatmul.mubr.f32.gmra.mxu0 %v364
      %v448 = vpop.f32.mrf.mxu0
      %v449 = vadd.f32 0.0, %v448
      %v450 = vpop.f32.mrf.mxu0
      %451 = vmatprep.mubr.f32.mxu0 0.0
      %452 = vmatmul.mubr.f32.gmra.mxu0 %v367
      %v453 = vpop.f32.mrf.mxu0
      %v454 = vadd.f32 0.0, %v453
      %v455 = vpop.f32.mrf.mxu0
      %456 = vmatprep.mubr.f32.mxu0 0.0
      %457 = vmatmul.mubr.f32.gmra.mxu0 %v370
      %v458 = vpop.f32.mrf.mxu0
      %v459 = vadd.f32 0.0, %v458
      %v460 = vpop.f32.mrf.mxu0
      %461 = vdwg.mxu0
      %v463 = vlaneseq
      %v464 = vshrl.u32 %v463, 7
      %v465 = vsub.s32 0, %v464
      %v466 = vrot.slane %v348, %v465
      %v468 = vadd.f32 %v466, %v439
      %v469 = vadd.f32 %v466, %v444
      %v470 = vadd.f32 %v466, %v449
      %v471 = vadd.f32 %v466, %v454
      %v472 = vadd.f32 %v466, %v459
      %473 = vst [vmem:[#allocation4] sm:$0xff] %v468
      %474 = vst [vmem:[#allocation4 + $0x8] sm:$0xff] %v469
      %475 = vst [vmem:[#allocation4 + $0x10] sm:$0xff] %v470
      %476 = vst [vmem:[#allocation4 + $0x18] sm:$0xff] %v471
      %477 = vst [vmem:[#allocation4 + $0x20] sm:$0xff] %v472
      %v478 = vld [vmem:[%s320] sm:$0xff]
      %v479 = vld [vmem:[%s320 + $0x8] sm:$0xff]
      %v480 = vld [vmem:[%s320 + $0x10] sm:$0xff]
      %v481 = vld [vmem:[%s320 + $0x18] sm:$0xff]
      %v482 = vld [vmem:[%s0] sm:$0xff]
      %v483 = vld [vmem:[#allocation2] sm:$0xff]
      %v484 = vld [vmem:[#allocation3] sm:$0xff]
      %s485 = scalar_select %p340, 4, 0
      %s486 = smul.u32 %s21, 5
      %s487 = ssub.s32 9, %s486
      %s488 = scalar_select %p340, %s487, %s486
      %v489 = vstv %s488
      %vm490 = vcmp.lt.s32.totalorder %v489, %v482
      %v491 = vsel %vm490, 1, 0
      %v492 = vcvt.s32.f32 %v491
      %s493 = smul.u32 %s485, 8
      %s494 = scalar_lea.vmem [#allocation4], %s493
      %v495 = vld [vmem:[%s494] sm:$0xff]
      %vm496 = vcmask 261120
      %v498 = vsel %vm496, %v483, 0
      %500 = vmatprep.subr.mxu0 0.0
      %501 = vmatpush1.msra.mxu0 0.0
      %502 = vmatprep.subr.mxu0 0.0
      %503 = vmatpush1.msra.mxu0 0.0
      %504 = vmatprep.subr.mxu0 0.0
      %505 = vmatpush1.msra.mxu0 0.0
      %506 = vmatprep.subr.mxu0 0.0
      %507 = vmatpush1.msra.mxu0 0.0
      %508 = vmatprep.subr.mxu0 0.0
      %509 = vmatpush1.msra.mxu0 0.0
      %510 = vmatprep.subr.mxu0 0.0
      %511 = vmatpush1.msra.mxu0 0.0
      %512 = vmatprep.subr.mxu0 0.0
      %513 = vmatpush1.msra.mxu0 0.0
      %514 = vmatprep.subr.mxu0 0.0
      %515 = vmatpush1.msra.mxu0 0.0
      %516 = vmatprep.subr.mxu0 0.0
      %517 = vmatpush1.msra.mxu0 0.0
      %518 = vmatprep.subr.mxu0 0.0
      %519 = vmatpush1.msra.mxu0 0.0
      %520 = vmatprep.subr.mxu0 0.0
      %521 = vmatpush1.msra.mxu0 0.0
      %522 = vmatprep.subr.mxu0 0.0
      %523 = vmatpush1.msra.mxu0 0.0
      %524 = vmatprep.subr.mxu0 0.0
      %525 = vmatpush1.msra.mxu0 %v481
      %526 = vmatprep.subr.mxu0 0.0
      %527 = vmatpush1.msra.mxu0 %v480
      %528 = vmatprep.subr.mxu0 0.0
      %529 = vmatpush1.msra.mxu0 %v479
      %530 = vmatprep.subr.mxu0 0.0
      %531 = vmatpush1.msra.mxu0 %v478
      %532 = vmatprep.subr.mxu0 0.0
      %533 = vmatpush2.msra.mxu0 0.0
      %534 = vmatprep.subr.mxu0 0.0
      %535 = vmatpush2.msra.mxu0 0.0
      %536 = vmatprep.subr.mxu0 0.0
      %537 = vmatpush2.msra.mxu0 0.0
      %538 = vmatprep.subr.mxu0 0.0
      %539 = vmatpush2.msra.mxu0 0.0
      %540 = vmatprep.subr.mxu0 0.0
      %541 = vmatpush2.msra.mxu0 0.0
      %542 = vmatprep.subr.mxu0 0.0
      %543 = vmatpush2.msra.mxu0 0.0
      %544 = vmatprep.subr.mxu0 0.0
      %545 = vmatpush2.msra.mxu0 0.0
      %546 = vmatprep.subr.mxu0 0.0
      %547 = vmatpush2.msra.mxu0 0.0
      %548 = vmatprep.subr.mxu0 0.0
      %549 = vmatpush2.msra.mxu0 0.0
      %550 = vmatprep.subr.mxu0 0.0
      %551 = vmatpush2.msra.mxu0 0.0
      %552 = vmatprep.subr.mxu0 0.0
      %553 = vmatpush2.msra.mxu0 0.0
      %554 = vmatprep.subr.mxu0 0.0
      %555 = vmatpush2.msra.mxu0 0.0
      %556 = vmatprep.subr.mxu0 0.0
      %557 = vmatpush2.msra.mxu0 0.0
      %558 = vmatprep.subr.mxu0 0.0
      %559 = vmatpush2.msra.mxu0 0.0
      %560 = vmatprep.subr.mxu0 0.0
      %561 = vmatpush2.msra.mxu0 0.0
      %562 = vmatprep.subr.mxu0 0.0
      %563 = vmatpush2.msra.mxu0 0.0
      %564 = vmatprep.mubr.f32.mxu0 0.0
      %565 = vmatmul.mubr.f32.gmra.mxu0 %v498
      %v566 = vpop.f32.mrf.mxu0
      %v567 = vadd.f32 0.0, %v566
      %v568 = vpop.f32.mrf.mxu0
      %569 = vdwg.mxu0
      %v570 = vadd.f32 %v495, %v567
      %v571 = vxor.u32 %v570, 2147483648
      %v572 = vmul.f32 %v571, 1.442695
      %v573 = vpow.pop %v572
      %v574 = vadd.f32 %v573, 1.0
      %v575 = vrcp.pop %v574
      %v576 = vmul.f32 1.0, %v575
      %v577 = vtanh.pop %v570
      %579 = vrot.lane.b32.xlu0 %v484, 32
      %v580 = vpop.permute.xlu0 %579
      %v582 = vmul.f32 %v576, %v580
      %584 = vrot.lane.b32.xlu0 %v577, 64
      %v585 = vpop.permute.xlu0 %584
      %v587 = vmul.f32 %v576, %v585
      %589 = vrot.lane.b32.xlu0 %v587, 32
      %v590 = vpop.permute.xlu0 %589
      %v592 = vadd.f32 %v582, %v590
      %v593 = vtanh.pop %v592
      %595 = vrot.lane.b32.xlu0 %v593, 64
      %v596 = vpop.permute.xlu0 %595
      %v598 = vmul.f32 %v576, %v596
      %600 = vset.pattern.permute.xlu0 0
      %601 = vperm.xlu0 %600, %v492
      %v602 = vpop.permute.xlu0 %601
      %v604 = vmul.f32 %v602, %v598
      %606 = vrot.lane.b32.xlu0 %v604, 32
      %v607 = vpop.permute.xlu0 %606
      %s609 = scalar_lea.vmem %s335, %s493
      %610 = vst.msk [vmem:[%s609] sm:$0xff] %vm496, %v607
      %v611 = vsub.f32 1.0, %v492
      %613 = vset.pattern.permute.xlu0 0
      %614 = vperm.xlu0 %613, %v611
      %v615 = vpop.permute.xlu0 %614
      %v617 = vmul.f32 %v615, %v483
      %619 = vrot.lane.b32.xlu0 %v617, 96
      %v620 = vpop.permute.xlu0 %619
      %v622 = vadd.f32 %v604, %v620
      %v623 = vmul.f32 %v602, %v592
      %v624 = vmul.f32 %v615, %v484
      %626 = vrot.lane.b32.xlu0 %v624, 32
      %v627 = vpop.permute.xlu0 %626
      %v629 = vadd.f32 %v623, %v627
      %s630 = scalar_select %p340, 3, 1
      %s631 = ssub.s32 8, %s486
      %s632 = sadd.s32 %s486, 1
      %s633 = scalar_select %p340, %s631, %s632
      %v634 = vstv %s633
      %vm635 = vcmp.lt.s32.totalorder %v634, %v482
      %v636 = vsel %vm635, 1, 0
      %v637 = vcvt.s32.f32 %v636
      %s638 = smul.u32 %s630, 8
      %s639 = scalar_lea.vmem [#allocation4], %s638
      %v640 = vld [vmem:[%s639] sm:$0xff]
      %642 = vrot.lane.b32.xlu0 %v622, 32
      %v643 = vpop.permute.xlu0 %642
      %v644 = vsel %vm496, %v643, 0
      %646 = vmatprep.subr.mxu0 0.0
      %647 = vmatpush1.msra.mxu0 0.0
      %648 = vmatprep.subr.mxu0 0.0
      %649 = vmatpush1.msra.mxu0 0.0
      %650 = vmatprep.subr.mxu0 0.0
      %651 = vmatpush1.msra.mxu0 0.0
      %652 = vmatprep.subr.mxu0 0.0
      %653 = vmatpush1.msra.mxu0 0.0
      %654 = vmatprep.subr.mxu0 0.0
      %655 = vmatpush1.msra.mxu0 0.0
      %656 = vmatprep.subr.mxu0 0.0
      %657 = vmatpush1.msra.mxu0 0.0
      %658 = vmatprep.subr.mxu0 0.0
      %659 = vmatpush1.msra.mxu0 0.0
      %660 = vmatprep.subr.mxu0 0.0
      %661 = vmatpush1.msra.mxu0 0.0
      %662 = vmatprep.subr.mxu0 0.0
      %663 = vmatpush1.msra.mxu0 0.0
      %664 = vmatprep.subr.mxu0 0.0
      %665 = vmatpush1.msra.mxu0 0.0
      %666 = vmatprep.subr.mxu0 0.0
      %667 = vmatpush1.msra.mxu0 0.0
      %668 = vmatprep.subr.mxu0 0.0
      %669 = vmatpush1.msra.mxu0 0.0
      %670 = vmatprep.subr.mxu0 0.0
      %671 = vmatpush1.msra.mxu0 %v481
      %672 = vmatprep.subr.mxu0 0.0
      %673 = vmatpush1.msra.mxu0 %v480
      %674 = vmatprep.subr.mxu0 0.0
      %675 = vmatpush1.msra.mxu0 %v479
      %676 = vmatprep.subr.mxu0 0.0
      %677 = vmatpush1.msra.mxu0 %v478
      %678 = vmatprep.subr.mxu0 0.0
      %679 = vmatpush2.msra.mxu0 0.0
      %680 = vmatprep.subr.mxu0 0.0
      %681 = vmatpush2.msra.mxu0 0.0
      %682 = vmatprep.subr.mxu0 0.0
      %683 = vmatpush2.msra.mxu0 0.0
      %684 = vmatprep.subr.mxu0 0.0
      %685 = vmatpush2.msra.mxu0 0.0
      %686 = vmatprep.subr.mxu0 0.0
      %687 = vmatpush2.msra.mxu0 0.0
      %688 = vmatprep.subr.mxu0 0.0
      %689 = vmatpush2.msra.mxu0 0.0
      %690 = vmatprep.subr.mxu0 0.0
      %691 = vmatpush2.msra.mxu0 0.0
      %692 = vmatprep.subr.mxu0 0.0
      %693 = vmatpush2.msra.mxu0 0.0
      %694 = vmatprep.subr.mxu0 0.0
      %695 = vmatpush2.msra.mxu0 0.0
      %696 = vmatprep.subr.mxu0 0.0
      %697 = vmatpush2.msra.mxu0 0.0
      %698 = vmatprep.subr.mxu0 0.0
      %699 = vmatpush2.msra.mxu0 0.0
      %700 = vmatprep.subr.mxu0 0.0
      %701 = vmatpush2.msra.mxu0 0.0
      %702 = vmatprep.subr.mxu0 0.0
      %703 = vmatpush2.msra.mxu0 0.0
      %704 = vmatprep.subr.mxu0 0.0
      %705 = vmatpush2.msra.mxu0 0.0
      %706 = vmatprep.subr.mxu0 0.0
      %707 = vmatpush2.msra.mxu0 0.0
      %708 = vmatprep.subr.mxu0 0.0
      %709 = vmatpush2.msra.mxu0 0.0
      %710 = vmatprep.mubr.f32.mxu0 0.0
      %711 = vmatmul.mubr.f32.gmra.mxu0 %v644
      %v712 = vpop.f32.mrf.mxu0
      %v713 = vadd.f32 0.0, %v712
      %v714 = vpop.f32.mrf.mxu0
      %715 = vdwg.mxu0
      %v716 = vadd.f32 %v640, %v713
      %v717 = vxor.u32 %v716, 2147483648
      %v718 = vmul.f32 %v717, 1.442695
      %v719 = vpow.pop %v718
      %v720 = vadd.f32 %v719, 1.0
      %v721 = vrcp.pop %v720
      %v722 = vmul.f32 1.0, %v721
      %v723 = vtanh.pop %v716
      %v724 = vmul.f32 %v722, %v629
      %726 = vrot.lane.b32.xlu0 %v723, 64
      %v727 = vpop.permute.xlu0 %726
      %v729 = vmul.f32 %v722, %v727
      %731 = vrot.lane.b32.xlu0 %v729, 32
      %v732 = vpop.permute.xlu0 %731
      %v734 = vadd.f32 %v724, %v732
      %v735 = vtanh.pop %v734
      %737 = vrot.lane.b32.xlu0 %v735, 64
      %v738 = vpop.permute.xlu0 %737
      %v740 = vmul.f32 %v722, %v738
      %742 = vset.pattern.permute.xlu0 0
      %743 = vperm.xlu0 %742, %v637
      %v744 = vpop.permute.xlu0 %743
      %v746 = vmul.f32 %v744, %v740
      %748 = vrot.lane.b32.xlu0 %v746, 32
      %v749 = vpop.permute.xlu0 %748
      %s751 = scalar_lea.vmem %s335, %s638
      %752 = vst.msk [vmem:[%s751] sm:$0xff] %vm496, %v749
      %v753 = vsub.f32 1.0, %v637
      %755 = vset.pattern.permute.xlu0 0
      %756 = vperm.xlu0 %755, %v753
      %v757 = vpop.permute.xlu0 %756
      %v759 = vmul.f32 %v757, %v622
      %v760 = vadd.f32 %v746, %v759
      %v761 = vmul.f32 %v744, %v734
      %v762 = vmul.f32 %v757, %v629
      %v763 = vadd.f32 %v761, %v762
      %s764 = ssub.s32 7, %s486
      %s765 = sadd.s32 %s486, 2
      %s766 = scalar_select %p340, %s764, %s765
      %v767 = vstv %s766
      %vm768 = vcmp.lt.s32.totalorder %v767, %v482
      %v769 = vsel %vm768, 1, 0
      %v770 = vcvt.s32.f32 %v769
      %s771 = scalar_lea.vmem [#allocation4], 16
      %v772 = vld [vmem:[%s771] sm:$0xff]
      %774 = vrot.lane.b32.xlu0 %v760, 32
      %v775 = vpop.permute.xlu0 %774
      %v776 = vsel %vm496, %v775, 0
      %778 = vmatprep.subr.mxu0 0.0
      %779 = vmatpush1.msra.mxu0 0.0
      %780 = vmatprep.subr.mxu0 0.0
      %781 = vmatpush1.msra.mxu0 0.0
      %782 = vmatprep.subr.mxu0 0.0
      %783 = vmatpush1.msra.mxu0 0.0
      %784 = vmatprep.subr.mxu0 0.0
      %785 = vmatpush1.msra.mxu0 0.0
      %786 = vmatprep.subr.mxu0 0.0
      %787 = vmatpush1.msra.mxu0 0.0
      %788 = vmatprep.subr.mxu0 0.0
      %789 = vmatpush1.msra.mxu0 0.0
      %790 = vmatprep.subr.mxu0 0.0
      %791 = vmatpush1.msra.mxu0 0.0
      %792 = vmatprep.subr.mxu0 0.0
      %793 = vmatpush1.msra.mxu0 0.0
      %794 = vmatprep.subr.mxu0 0.0
      %795 = vmatpush1.msra.mxu0 0.0
      %796 = vmatprep.subr.mxu0 0.0
      %797 = vmatpush1.msra.mxu0 0.0
      %798 = vmatprep.subr.mxu0 0.0
      %799 = vmatpush1.msra.mxu0 0.0
      %800 = vmatprep.subr.mxu0 0.0
      %801 = vmatpush1.msra.mxu0 0.0
      %802 = vmatprep.subr.mxu0 0.0
      %803 = vmatpush1.msra.mxu0 %v481
      %804 = vmatprep.subr.mxu0 0.0
      %805 = vmatpush1.msra.mxu0 %v480
      %806 = vmatprep.subr.mxu0 0.0
      %807 = vmatpush1.msra.mxu0 %v479
      %808 = vmatprep.subr.mxu0 0.0
      %809 = vmatpush1.msra.mxu0 %v478
      %810 = vmatprep.subr.mxu0 0.0
      %811 = vmatpush2.msra.mxu0 0.0
      %812 = vmatprep.subr.mxu0 0.0
      %813 = vmatpush2.msra.mxu0 0.0
      %814 = vmatprep.subr.mxu0 0.0
      %815 = vmatpush2.msra.mxu0 0.0
      %816 = vmatprep.subr.mxu0 0.0
      %817 = vmatpush2.msra.mxu0 0.0
      %818 = vmatprep.subr.mxu0 0.0
      %819 = vmatpush2.msra.mxu0 0.0
      %820 = vmatprep.subr.mxu0 0.0
      %821 = vmatpush2.msra.mxu0 0.0
      %822 = vmatprep.subr.mxu0 0.0
      %823 = vmatpush2.msra.mxu0 0.0
      %824 = vmatprep.subr.mxu0 0.0
      %825 = vmatpush2.msra.mxu0 0.0
      %826 = vmatprep.subr.mxu0 0.0
      %827 = vmatpush2.msra.mxu0 0.0
      %828 = vmatprep.subr.mxu0 0.0
      %829 = vmatpush2.msra.mxu0 0.0
      %830 = vmatprep.subr.mxu0 0.0
      %831 = vmatpush2.msra.mxu0 0.0
      %832 = vmatprep.subr.mxu0 0.0
      %833 = vmatpush2.msra.mxu0 0.0
      %834 = vmatprep.subr.mxu0 0.0
      %835 = vmatpush2.msra.mxu0 0.0
      %836 = vmatprep.subr.mxu0 0.0
      %837 = vmatpush2.msra.mxu0 0.0
      %838 = vmatprep.subr.mxu0 0.0
      %839 = vmatpush2.msra.mxu0 0.0
      %840 = vmatprep.subr.mxu0 0.0
      %841 = vmatpush2.msra.mxu0 0.0
      %842 = vmatprep.mubr.f32.mxu0 0.0
      %843 = vmatmul.mubr.f32.gmra.mxu0 %v776
      %v844 = vpop.f32.mrf.mxu0
      %v845 = vadd.f32 0.0, %v844
      %v846 = vpop.f32.mrf.mxu0
      %847 = vdwg.mxu0
      %v848 = vadd.f32 %v772, %v845
      %v849 = vxor.u32 %v848, 2147483648
      %v850 = vmul.f32 %v849, 1.442695
      %v851 = vpow.pop %v850
      %v852 = vadd.f32 %v851, 1.0
      %v853 = vrcp.pop %v852
      %v854 = vmul.f32 1.0, %v853
      %v855 = vtanh.pop %v848
      %v856 = vmul.f32 %v854, %v763
      %858 = vrot.lane.b32.xlu0 %v855, 64
      %v859 = vpop.permute.xlu0 %858
      %v861 = vmul.f32 %v854, %v859
      %863 = vrot.lane.b32.xlu0 %v861, 32
      %v864 = vpop.permute.xlu0 %863
      %v866 = vadd.f32 %v856, %v864
      %v867 = vtanh.pop %v866
      %869 = vrot.lane.b32.xlu0 %v867, 64
      %v870 = vpop.permute.xlu0 %869
      %v872 = vmul.f32 %v854, %v870
      %874 = vset.pattern.permute.xlu0 0
      %875 = vperm.xlu0 %874, %v770
      %v876 = vpop.permute.xlu0 %875
      %v878 = vmul.f32 %v876, %v872
      %880 = vrot.lane.b32.xlu0 %v878, 32
      %v881 = vpop.permute.xlu0 %880
      %s883 = scalar_lea.vmem %s335, 16
      %884 = vst.msk [vmem:[%s883] sm:$0xff] %vm496, %v881
      %v885 = vsub.f32 1.0, %v770
      %887 = vset.pattern.permute.xlu0 0
      %888 = vperm.xlu0 %887, %v885
      %v889 = vpop.permute.xlu0 %888
      %v891 = vmul.f32 %v889, %v760
      %v892 = vadd.f32 %v878, %v891
      %v893 = vmul.f32 %v876, %v866
      %v894 = vmul.f32 %v889, %v763
      %v895 = vadd.f32 %v893, %v894
      %s896 = scalar_select %p340, 1, 3
      %s897 = ssub.s32 6, %s486
      %s898 = sadd.s32 %s486, 3
      %s899 = scalar_select %p340, %s897, %s898
      %v900 = vstv %s899
      %vm901 = vcmp.lt.s32.totalorder %v900, %v482
      %v902 = vsel %vm901, 1, 0
      %v903 = vcvt.s32.f32 %v902
      %s904 = smul.u32 %s896, 8
      %s905 = scalar_lea.vmem [#allocation4], %s904
      %v906 = vld [vmem:[%s905] sm:$0xff]
      %908 = vrot.lane.b32.xlu0 %v892, 32
      %v909 = vpop.permute.xlu0 %908
      %v910 = vsel %vm496, %v909, 0
      %912 = vmatprep.subr.mxu0 0.0
      %913 = vmatpush1.msra.mxu0 0.0
      %914 = vmatprep.subr.mxu0 0.0
      %915 = vmatpush1.msra.mxu0 0.0
      %916 = vmatprep.subr.mxu0 0.0
      %917 = vmatpush1.msra.mxu0 0.0
      %918 = vmatprep.subr.mxu0 0.0
      %919 = vmatpush1.msra.mxu0 0.0
      %920 = vmatprep.subr.mxu0 0.0
      %921 = vmatpush1.msra.mxu0 0.0
      %922 = vmatprep.subr.mxu0 0.0
      %923 = vmatpush1.msra.mxu0 0.0
      %924 = vmatprep.subr.mxu0 0.0
      %925 = vmatpush1.msra.mxu0 0.0
      %926 = vmatprep.subr.mxu0 0.0
      %927 = vmatpush1.msra.mxu0 0.0
      %928 = vmatprep.subr.mxu0 0.0
      %929 = vmatpush1.msra.mxu0 0.0
      %930 = vmatprep.subr.mxu0 0.0
      %931 = vmatpush1.msra.mxu0 0.0
      %932 = vmatprep.subr.mxu0 0.0
      %933 = vmatpush1.msra.mxu0 0.0
      %934 = vmatprep.subr.mxu0 0.0
      %935 = vmatpush1.msra.mxu0 0.0
      %936 = vmatprep.subr.mxu0 0.0
      %937 = vmatpush1.msra.mxu0 %v481
      %938 = vmatprep.subr.mxu0 0.0
      %939 = vmatpush1.msra.mxu0 %v480
      %940 = vmatprep.subr.mxu0 0.0
      %941 = vmatpush1.msra.mxu0 %v479
      %942 = vmatprep.subr.mxu0 0.0
      %943 = vmatpush1.msra.mxu0 %v478
      %944 = vmatprep.subr.mxu0 0.0
      %945 = vmatpush2.msra.mxu0 0.0
      %946 = vmatprep.subr.mxu0 0.0
      %947 = vmatpush2.msra.mxu0 0.0
      %948 = vmatprep.subr.mxu0 0.0
      %949 = vmatpush2.msra.mxu0 0.0
      %950 = vmatprep.subr.mxu0 0.0
      %951 = vmatpush2.msra.mxu0 0.0
      %952 = vmatprep.subr.mxu0 0.0
      %953 = vmatpush2.msra.mxu0 0.0
      %954 = vmatprep.subr.mxu0 0.0
      %955 = vmatpush2.msra.mxu0 0.0
      %956 = vmatprep.subr.mxu0 0.0
      %957 = vmatpush2.msra.mxu0 0.0
      %958 = vmatprep.subr.mxu0 0.0
      %959 = vmatpush2.msra.mxu0 0.0
      %960 = vmatprep.subr.mxu0 0.0
      %961 = vmatpush2.msra.mxu0 0.0
      %962 = vmatprep.subr.mxu0 0.0
      %963 = vmatpush2.msra.mxu0 0.0
      %964 = vmatprep.subr.mxu0 0.0
      %965 = vmatpush2.msra.mxu0 0.0
      %966 = vmatprep.subr.mxu0 0.0
      %967 = vmatpush2.msra.mxu0 0.0
      %968 = vmatprep.subr.mxu0 0.0
      %969 = vmatpush2.msra.mxu0 0.0
      %970 = vmatprep.subr.mxu0 0.0
      %971 = vmatpush2.msra.mxu0 0.0
      %972 = vmatprep.subr.mxu0 0.0
      %973 = vmatpush2.msra.mxu0 0.0
      %974 = vmatprep.subr.mxu0 0.0
      %975 = vmatpush2.msra.mxu0 0.0
      %976 = vmatprep.mubr.f32.mxu0 0.0
      %977 = vmatmul.mubr.f32.gmra.mxu0 %v910
      %v978 = vpop.f32.mrf.mxu0
      %v979 = vadd.f32 0.0, %v978
      %v980 = vpop.f32.mrf.mxu0
      %981 = vdwg.mxu0
      %v982 = vadd.f32 %v906, %v979
      %v983 = vxor.u32 %v982, 2147483648
      %v984 = vmul.f32 %v983, 1.442695
      %v985 = vpow.pop %v984
      %v986 = vadd.f32 %v985, 1.0
      %v987 = vrcp.pop %v986
      %v988 = vmul.f32 1.0, %v987
      %v989 = vtanh.pop %v982
      %v990 = vmul.f32 %v988, %v895
      %992 = vrot.lane.b32.xlu0 %v989, 64
      %v993 = vpop.permute.xlu0 %992
      %v995 = vmul.f32 %v988, %v993
      %997 = vrot.lane.b32.xlu0 %v995, 32
      %v998 = vpop.permute.xlu0 %997
      %v1000 = vadd.f32 %v990, %v998
      %v1001 = vtanh.pop %v1000
      %1003 = vrot.lane.b32.xlu0 %v1001, 64
      %v1004 = vpop.permute.xlu0 %1003
      %v1006 = vmul.f32 %v988, %v1004
      %1008 = vset.pattern.permute.xlu0 0
      %1009 = vperm.xlu0 %1008, %v903
      %v1010 = vpop.permute.xlu0 %1009
      %v1012 = vmul.f32 %v1010, %v1006
      %1014 = vrot.lane.b32.xlu0 %v1012, 32
      %v1015 = vpop.permute.xlu0 %1014
      %s1017 = scalar_lea.vmem %s335, %s904
      %1018 = vst.msk [vmem:[%s1017] sm:$0xff] %vm496, %v1015
      %v1019 = vsub.f32 1.0, %v903
      %1021 = vset.pattern.permute.xlu0 0
      %1022 = vperm.xlu0 %1021, %v1019
      %v1023 = vpop.permute.xlu0 %1022
      %v1025 = vmul.f32 %v1023, %v892
      %v1026 = vadd.f32 %v1012, %v1025
      %v1027 = vmul.f32 %v1010, %v1000
      %v1028 = vmul.f32 %v1023, %v895
      %v1029 = vadd.f32 %v1027, %v1028
      %s1030 = scalar_select %p340, 0, 4
      %s1031 = ssub.s32 5, %s486
      %s1032 = sadd.s32 %s486, 4
      %s1033 = scalar_select %p340, %s1031, %s1032
      %v1034 = vstv %s1033
      %vm1035 = vcmp.lt.s32.totalorder %v1034, %v482
      %v1036 = vsel %vm1035, 1, 0
      %v1037 = vcvt.s32.f32 %v1036
      %s1038 = smul.u32 %s1030, 8
      %s1039 = scalar_lea.vmem [#allocation4], %s1038
      %v1040 = vld [vmem:[%s1039] sm:$0xff]
      %1042 = vrot.lane.b32.xlu0 %v1026, 32
      %v1043 = vpop.permute.xlu0 %1042
      %v1044 = vsel %vm496, %v1043, 0
      %1046 = vmatprep.subr.mxu0 0.0
      %1047 = vmatpush1.msra.mxu0 0.0
      %1048 = vmatprep.subr.mxu0 0.0
      %1049 = vmatpush1.msra.mxu0 0.0
      %1050 = vmatprep.subr.mxu0 0.0
      %1051 = vmatpush1.msra.mxu0 0.0
      %1052 = vmatprep.subr.mxu0 0.0
      %1053 = vmatpush1.msra.mxu0 0.0
      %1054 = vmatprep.subr.mxu0 0.0
      %1055 = vmatpush1.msra.mxu0 0.0
      %1056 = vmatprep.subr.mxu0 0.0
      %1057 = vmatpush1.msra.mxu0 0.0
      %1058 = vmatprep.subr.mxu0 0.0
      %1059 = vmatpush1.msra.mxu0 0.0
      %1060 = vmatprep.subr.mxu0 0.0
      %1061 = vmatpush1.msra.mxu0 0.0
      %1062 = vmatprep.subr.mxu0 0.0
      %1063 = vmatpush1.msra.mxu0 0.0
      %1064 = vmatprep.subr.mxu0 0.0
      %1065 = vmatpush1.msra.mxu0 0.0
      %1066 = vmatprep.subr.mxu0 0.0
      %1067 = vmatpush1.msra.mxu0 0.0
      %1068 = vmatprep.subr.mxu0 0.0
      %1069 = vmatpush1.msra.mxu0 0.0
      %1070 = vmatprep.subr.mxu0 0.0
      %1071 = vmatpush1.msra.mxu0 %v481
      %1072 = vmatprep.subr.mxu0 0.0
      %1073 = vmatpush1.msra.mxu0 %v480
      %1074 = vmatprep.subr.mxu0 0.0
      %1075 = vmatpush1.msra.mxu0 %v479
      %1076 = vmatprep.subr.mxu0 0.0
      %1077 = vmatpush1.msra.mxu0 %v478
      %1078 = vmatprep.subr.mxu0 0.0
      %1079 = vmatpush2.msra.mxu0 0.0
      %1080 = vmatprep.subr.mxu0 0.0
      %1081 = vmatpush2.msra.mxu0 0.0
      %1082 = vmatprep.subr.mxu0 0.0
      %1083 = vmatpush2.msra.mxu0 0.0
      %1084 = vmatprep.subr.mxu0 0.0
      %1085 = vmatpush2.msra.mxu0 0.0
      %1086 = vmatprep.subr.mxu0 0.0
      %1087 = vmatpush2.msra.mxu0 0.0
      %1088 = vmatprep.subr.mxu0 0.0
      %1089 = vmatpush2.msra.mxu0 0.0
      %1090 = vmatprep.subr.mxu0 0.0
      %1091 = vmatpush2.msra.mxu0 0.0
      %1092 = vmatprep.subr.mxu0 0.0
      %1093 = vmatpush2.msra.mxu0 0.0
      %1094 = vmatprep.subr.mxu0 0.0
      %1095 = vmatpush2.msra.mxu0 0.0
      %1096 = vmatprep.subr.mxu0 0.0
      %1097 = vmatpush2.msra.mxu0 0.0
      %1098 = vmatprep.subr.mxu0 0.0
      %1099 = vmatpush2.msra.mxu0 0.0
      %1100 = vmatprep.subr.mxu0 0.0
      %1101 = vmatpush2.msra.mxu0 0.0
      %1102 = vmatprep.subr.mxu0 0.0
      %1103 = vmatpush2.msra.mxu0 0.0
      %1104 = vmatprep.subr.mxu0 0.0
      %1105 = vmatpush2.msra.mxu0 0.0
      %1106 = vmatprep.subr.mxu0 0.0
      %1107 = vmatpush2.msra.mxu0 0.0
      %1108 = vmatprep.subr.mxu0 0.0
      %1109 = vmatpush2.msra.mxu0 0.0
      %1110 = vmatprep.mubr.f32.mxu0 0.0
      %1111 = vmatmul.mubr.f32.gmra.mxu0 %v1044
      %v1112 = vpop.f32.mrf.mxu0
      %v1113 = vadd.f32 0.0, %v1112
      %v1114 = vpop.f32.mrf.mxu0
      %1115 = vdwg.mxu0
      %v1116 = vadd.f32 %v1040, %v1113
      %v1117 = vxor.u32 %v1116, 2147483648
      %v1118 = vmul.f32 %v1117, 1.442695
      %v1119 = vpow.pop %v1118
      %v1120 = vadd.f32 %v1119, 1.0
      %v1121 = vrcp.pop %v1120
      %v1122 = vmul.f32 1.0, %v1121
      %v1123 = vtanh.pop %v1116
      %v1124 = vmul.f32 %v1122, %v1029
      %1126 = vrot.lane.b32.xlu0 %v1123, 64
      %v1127 = vpop.permute.xlu0 %1126
      %v1129 = vmul.f32 %v1122, %v1127
      %1131 = vrot.lane.b32.xlu0 %v1129, 32
      %v1132 = vpop.permute.xlu0 %1131
      %v1134 = vadd.f32 %v1124, %v1132
      %v1135 = vtanh.pop %v1134
      %1137 = vrot.lane.b32.xlu0 %v1135, 64
      %v1138 = vpop.permute.xlu0 %1137
      %v1140 = vmul.f32 %v1122, %v1138
      %1142 = vset.pattern.permute.xlu0 0
      %1143 = vperm.xlu0 %1142, %v1037
      %v1144 = vpop.permute.xlu0 %1143
      %v1146 = vmul.f32 %v1144, %v1140
      %1148 = vrot.lane.b32.xlu0 %v1146, 32
      %v1149 = vpop.permute.xlu0 %1148
      %s1151 = scalar_lea.vmem %s335, %s1038
      %1152 = vst.msk [vmem:[%s1151] sm:$0xff] %vm496, %v1149
      %v1153 = vsub.f32 1.0, %v1037
      %1155 = vset.pattern.permute.xlu0 0
      %1156 = vperm.xlu0 %1155, %v1153
      %v1157 = vpop.permute.xlu0 %1156
      %v1159 = vmul.f32 %v1157, %v1026
      %v1160 = vadd.f32 %v1146, %v1159
      %v1161 = vmul.f32 %v1144, %v1134
      %v1162 = vmul.f32 %v1157, %v1029
      %v1163 = vadd.f32 %v1161, %v1162
      %1165 = vrot.lane.b32.xlu0 %v1160, 32
      %v1166 = vpop.permute.xlu0 %1165
      %1168 = vst.msk [vmem:[#allocation2] sm:$0xff] %vm496, %v1166
      %1170 = vrot.lane.b32.xlu0 %v1163, 96
      %v1171 = vpop.permute.xlu0 %1170
      %1173 = vst.msk [vmem:[#allocation3] sm:$0xff] %vm496, %v1171
      %p1174 = scmp.eq.s32.totalorder %s20, 0
      %s1175 = ssub.s32 1, %s21
      %s1176 = scalar_select %p1174, %s21, %s1175
      %s1177 = smul.u32 5, %s1176
      %p1178 = scmp.lt.s32.totalorder %s20, 1
      %s1179 = scalar_select %p1178, %s20, 1
      %p1180 = scmp.lt.s32.totalorder %s1177, 9
      %s1181 = scalar_select %p1180, %s1177, 9
      %s1182 = smul.addr %s1179, 10
      %s1183 = sadd.s32 %s1181, %s1182
      %s1184 = smul.addr %s1183, 8
      %s1185 = scalar_lea.vmem %s5, %s1184
      // Predicated region
      $region45: #{lstmbilm_forward.3} parent=39 // pred_check
        %p1186 = pneg %p185
      $region46: #{lstmbilm_forward.3} parent=39 // pred_check_branch
        %1188 = sbr.rel (%p1186) target = $region48
      $region47: #{lstmbilm_forward.3} parent=39 // pred_region
        %p1189 = scmp.eq.s32.totalorder %s20, 0
        %s1190 = ssub.s32 1, %s21
        %s1191 = scalar_select %p1189, %s21, %s1190
        %s1192 = smul.u32 5, %s1191
      $region48: #{lstmbilm_forward.3} parent=39 // pred_fallthru
        _
    $region40: #{lstmbilm_forward.3} parent=5 // pred_fallthru
      _
    %p1193 = scmp.le.s32.totalorder 2, %s11
    // Predicated region
    $region49: #{lstmbilm_forward.3} parent=5 // pred_check
      %p1194 = pneg %p1193
    $region50: #{lstmbilm_forward.3} parent=5 // pred_check_branch
      %1196 = sbr.rel (%p1194) target = $region52
    $region51: #{lstmbilm_forward.3} parent=5 // pred_region
      %s1197 = ssub.s32 %s11, 2
      // Predicated region
      $region53: #{lstmbilm_forward.3} parent=51 // pred_check
        %p1198 = pneg %p191
      $region54: #{lstmbilm_forward.3} parent=51 // pred_check_branch
        %1200 = sbr.rel (%p1198) target = $region56
      $region55: #{lstmbilm_forward.3} parent=51 // pred_region
        %p1201 = scmp.eq.s32.totalorder %s22, 0
        %s1202 = ssub.s32 1, %s23
        %s1203 = scalar_select %p1201, %s23, %s1202
        %s1204 = smul.u32 5, %s1203
        %p1205 = scmp.lt.s32.totalorder %s22, 1
        %s1206 = scalar_select %p1205, %s22, 1
        %p1207 = scmp.lt.s32.totalorder %s1204, 9
        %s1208 = scalar_select %p1207, %s1204, 9
        %s1209 = smul.addr %s1206, 10
        %s1210 = sadd.s32 %s1208, %s1209
        %s1211 = smul.addr %s1210, 8
        %s1212 = scalar_lea.vmem %s5, %s1211
      $region56: #{lstmbilm_forward.3} parent=51 // pred_fallthru
        _
    $region52: #{lstmbilm_forward.3} parent=5 // pred_fallthru
      _
  $region6: #{lstmbilm_forward.3} parent=0 // loop_footer
    %s15 = sadd.s32 1, %s11
  $region7: #{lstmbilm_forward.3} parent=0 // loop_footer_branch
    %10 = sbr.rel target = $region3
  $region8: #{lstmbilm_forward.3} parent=0 // loop_exit
    _

</llo_original>
